<compile_context>
chip_gen: v6e
topology: v6e:2x2x1
jax: 0.10.0
libtpu: 0.0.40
codegen_flags: <defaults>
</compile_context>

<pallas_src>
import functools

import jax
import jax.numpy as jnp
from jax import lax
from jax.experimental import pallas as pl
from jax.experimental.pallas import tpu as pltpu


# ------------------------------- Fused kernel -------------------------------- #

def _linear_attention_kernel(x_ref, wqkv_ref, wout_ref, bout_ref, o_ref,
                             q_ref, kv_ref, ctx_ref,
                             *, heads, dim_head, scale, tile_q, kv_chunk, n):
    """One (batch, query-tile) pair per grid step; weights stay resident.

    x_ref    : (1, C, n)          channels-first input for batch b (full sequence)
    wqkv_ref : (3*hidden, C)      to_qkv conv weight, rows ordered '(qkv heads c)'
    wout_ref : (C, hidden)        to_out conv weight
    bout_ref : (C, 1)             to_out bias
    o_ref    : (1, C, tile_q)     lane-dense output tile
    q_ref    : (hidden, tile_q)   bf16 scratch: this tile's Q (pre-scaled)
    kv_ref   : (2*hidden, n)      bf16 scratch: K|V for the whole sequence
    ctx_ref  : (hidden, tile_q)   f32 scratch: per-head attention context
    """
    hidden = heads * dim_head
    num_kv = n // kv_chunk
    qt = pl.program_id(1)

    # ---- K|V projection for the whole sequence, once per batch item (qt==0). ----
    @pl.when(qt == 0)
    def _():
        w_kv = wqkv_ref[pl.ds(hidden, 2 * hidden), :]                  # (2H, C) f32

        def proj_body(j, carry):
            s0 = pl.multiple_of(j * kv_chunk, kv_chunk)
            x_c = x_ref[0, :, pl.ds(s0, kv_chunk)]                     # (C, kc)
            kv_ref[:, pl.ds(s0, kv_chunk)] = jnp.dot(
                w_kv, x_c, preferred_element_type=jnp.float32
            ).astype(kv_ref.dtype)
            return carry

        lax.fori_loop(0, num_kv, proj_body, 0)

    # ---- Q projection for this query tile (pre-scaled, bf16 MXU operand). ----
    q0 = pl.multiple_of(qt * tile_q, tile_q)
    x_q = x_ref[0, :, pl.ds(q0, tile_q)]                               # (C, tq)
    q_ref[...] = (jnp.dot(wqkv_ref[pl.ds(0, hidden), :], x_q,
                          preferred_element_type=jnp.float32) * scale
                  ).astype(q_ref.dtype)

    # ---- Per-head flash attention, transposed layout (sequence on lanes). ----
    for h in range(heads):
        q_h = q_ref[pl.ds(h * dim_head, dim_head), :]                  # (D, tq) bf16

        def kv_body(j, carry):
            m, l, acc = carry
            s0 = pl.multiple_of(j * kv_chunk, kv_chunk)
            k_h = kv_ref[pl.ds(h * dim_head, dim_head), pl.ds(s0, kv_chunk)]
            v_h = kv_ref[pl.ds(hidden + h * dim_head, dim_head),
                         pl.ds(s0, kv_chunk)]
            # S^T = K_h^T Q_h : (kc, tq); bf16 operands, f32 MXU accumulation.
            s_t = lax.dot_general(k_h, q_h, (((0,), (0,)), ((), ())),
                                  preferred_element_type=jnp.float32)
            m_new = jnp.maximum(m, jnp.max(s_t, axis=0, keepdims=True))  # (1, tq)
            alpha = jnp.exp(m - m_new)
            p = jnp.exp(s_t - m_new)                                     # (kc, tq)
            l_new = alpha * l + jnp.sum(p, axis=0, keepdims=True)
            acc_new = alpha * acc + jnp.dot(v_h, p.astype(kv_ref.dtype),
                                            preferred_element_type=jnp.float32)
            return m_new, l_new, acc_new

        m0 = jnp.full((1, tile_q), -jnp.inf, dtype=jnp.float32)
        l0 = jnp.zeros((1, tile_q), dtype=jnp.float32)
        acc0 = jnp.zeros((dim_head, tile_q), dtype=jnp.float32)
        m, l, acc = lax.fori_loop(0, num_kv, kv_body, (m0, l0, acc0))

        # EUP approximate reciprocal + one Newton step (f32-accurate, no VALU div).
        inv_l = pl.reciprocal(l, approx=True)
        inv_l = inv_l * (2.0 - l * inv_l)
        ctx_ref[pl.ds(h * dim_head, dim_head), :] = acc * inv_l       # full-lane store

    # ---- Output projection: one 128-deep MXU matmul -> lane-dense (C, tq). ----
    out = jnp.dot(wout_ref[...], ctx_ref[...],
                  preferred_element_type=jnp.float32) + bout_ref[...]
    o_ref[0] = out.astype(o_ref.dtype)


# ------------------------------- Module wrapper ------------------------------ #

def init_params(key, dim, heads, dim_head, dtype=jnp.float32):
    hidden = heads * dim_head
    k1, k2, k3 = jax.random.split(key, 3)
    # Natural (squeezed) PyTorch Conv2d weight layouts -> no transposes anywhere:
    #   to_qkv.weight (3*hidden, dim, 1, 1) -> (3*hidden, dim), rows '(qkv heads c)'
    #   to_out.weight (dim, hidden, 1, 1)   -> (dim, hidden)
    w_qkv = jax.random.normal(k1, (3 * hidden, dim), dtype) * (dim ** -0.5)
    w_out = jax.random.normal(k2, (dim, hidden), dtype) * (hidden ** -0.5)
    b_out = jax.random.normal(k3, (dim,), dtype) * 0.02
    return {"w_qkv": w_qkv, "w_out": w_out, "b_out": b_out}


def _pick_tile(n, candidates):
    for t in candidates:
        if n % t == 0:
            return t
    return n


def linear_attention_forward(x, params, heads, dim_head):
    """x: (B, C, H, W) NCHW, same I/O layout as the PyTorch module."""
    B, C, H, W = x.shape
    n = H * W
    hidden = heads * dim_head
    scale = dim_head ** -0.5                      # flash_attn default softmax_scale

    w_qkv = params["w_qkv"]                       # (3*hidden, C)
    w_out = params["w_out"]                       # (C, hidden)
    b_out = params["b_out"].reshape(C, 1)

    # 256-row query tiles / 256-key KV chunks keep the live score tile at
    # (kv_chunk, tile_q) f32 = 256 KiB regardless of image size.
    # TODO(synk): prefer kv_chunk=128 on v5e (4x128^2 MXU) via pltpu.get_tpu_info().
    tile_q = _pick_tile(n, (256, 512, 128, 64))
    kv_chunk = _pick_tile(n, (256, 512, 128, 64))
    num_q = n // tile_q

    x_cf = x.reshape(B, C, n)                     # channels-first, no HBM transpose

    kern = functools.partial(_linear_attention_kernel, heads=heads,
                             dim_head=dim_head, scale=scale,
                             tile_q=tile_q, kv_chunk=kv_chunk, n=n)

    out = pl.pallas_call(
        kern,
        out_shape=jax.ShapeDtypeStruct((B, C, n), x.dtype),
        grid_spec=pltpu.PrefetchScalarGridSpec(
            num_scalar_prefetch=0,
            grid=(B, num_q),
            in_specs=[
                pl.BlockSpec((1, C, n), lambda b, q: (b, 0, 0)),       # per-batch x
                pl.BlockSpec((3 * hidden, C), lambda b, q: (0, 0)),    # resident W_qkv
                pl.BlockSpec((C, hidden), lambda b, q: (0, 0)),        # resident W_out
                pl.BlockSpec((C, 1), lambda b, q: (0, 0)),             # resident bias
            ],
            out_specs=pl.BlockSpec((1, C, tile_q), lambda b, q: (b, 0, q)),
            scratch_shapes=[
                pltpu.VMEM((hidden, tile_q), jnp.bfloat16),            # Q tile
                pltpu.VMEM((2 * hidden, n), jnp.bfloat16),             # K|V full seq
                pltpu.VMEM((hidden, tile_q), jnp.float32),             # attention ctx
            ],
        ),
        compiler_params=pltpu.CompilerParams(
            # Batch axis is megacore-parallel; the query-tile axis must stay
            # "arbitrary" because the K|V scratch is filled at qt==0 and reused.
            dimension_semantics=("parallel", "arbitrary"),
            vmem_limit_bytes=32 * 1024 * 1024),
    )(x_cf, w_qkv, w_out, b_out)

    return out.reshape(B, C, H, W)                # no transpose on the way out


# ------------------------------ Pure-JAX reference --------------------------- #

def reference_forward(x, params, heads, dim_head):
    B, C, H, W = x.shape
    n = H * W
    hidden = heads * dim_head
    scale = dim_head ** -0.5
    w_qkv = params["w_qkv"]                       # (3*hidden, C)
    w_out = params["w_out"]                       # (C, hidden)
    b_out = params["b_out"]                       # (C,)

    x_flat = x.reshape(B, C, n)
    qkv = jnp.einsum("kc,bcn->bkn", w_qkv, x_flat)                 # (B, 3*hidden, n)
    qkv = qkv.reshape(B, 3, heads, dim_head, n)
    q, k, v = qkv[:, 0], qkv[:, 1], qkv[:, 2]                      # (B, heads, D, n)
    s = jnp.einsum("bhdq,bhdk->bhqk", q, k) * scale
    p = jax.nn.softmax(s, axis=-1)
    ctx = jnp.einsum("bhqk,bhdk->bhdq", p, v)                      # (B, heads, D, n)
    ctx = ctx.reshape(B, hidden, n)
    out = jnp.einsum("ck,bkn->bcn", w_out, ctx) + b_out[None, :, None]
    return out.reshape(B, C, H, W)


# ------------------------------------ Main ----------------------------------- #

if __name__ == "__main__":
    # Small, module-consistent shapes; n = 32*32 = 1024 exercises the tiling:
    # grid = (2 batches, 4 query tiles), 4 KV chunks per tile, hidden = 128.
    B, dim, H, W = 2, 8, 32, 32
    heads, dim_head = 4, 32

    key = jax.random.PRNGKey(0)
    kx, kp = jax.random.split(key)
    x = jax.random.normal(kx, (B, dim, H, W), jnp.float32)
    params = init_params(kp, dim, heads, dim_head)

    out = linear_attention_forward(x, params, heads, dim_head)
    out = jax.block_until_ready(out)

    ref = reference_forward(x, params, heads, dim_head)
    assert out.shape == (B, dim, H, W)
    # bf16 MXU operands (f32 accumulation) -> compare at a bf16-appropriate tol.
    assert jnp.allclose(out, ref, rtol=2e-2, atol=2e-2), "mismatch vs reference"

    print("KERNEL_OK")
</pallas_src>

<mosaic_0001>
module attributes {stable_mosaic.version = 11 : i64} {
  func.func @_linear_attention_kernel(%arg0: i32, %arg1: i32, %arg2: memref<1x8x1024xf32, #tpu.memory_space<vmem>>, %arg3: memref<384x8xf32, #tpu.memory_space<vmem>>, %arg4: memref<8x128xf32, #tpu.memory_space<vmem>>, %arg5: memref<8x1xf32, #tpu.memory_space<vmem>>, %arg6: memref<1x8x256xf32, #tpu.memory_space<vmem>>, %arg7: memref<128x256xbf16, #tpu.memory_space<vmem>>, %arg8: memref<256x1024xbf16, #tpu.memory_space<vmem>>, %arg9: memref<128x256xf32, #tpu.memory_space<vmem>>) attributes {dimension_semantics = [#tpu.dimension_semantics<parallel>, #tpu.dimension_semantics<arbitrary>], iteration_bounds = array<i64: 2, 4>, scalar_prefetch = 0 : i64, scratch_operands = 3 : i64, tpu.core_type = #tpu.core_type<tc>, window_params = [{transform_indices = @transform_0, window_bounds = array<i64: 1, 8, 1024>}, {pipeline_mode = #tpu.pipeline_mode<synchronous>, transform_indices = @transform_1, window_bounds = array<i64: 384, 8>}, {pipeline_mode = #tpu.pipeline_mode<synchronous>, transform_indices = @transform_2, window_bounds = array<i64: 8, 128>}, {pipeline_mode = #tpu.pipeline_mode<synchronous>, transform_indices = @transform_3, window_bounds = array<i64: 8, 1>}, {transform_indices = @transform_4, window_bounds = array<i64: 1, 8, 256>}]} {
    %c0_i32 = arith.constant 0 : i32
    %0 = arith.cmpi eq, %arg1, %c0_i32 : i32
    %1 = arith.extui %0 : i1 to i32
    %c0_i32_0 = arith.constant 0 : i32
    %2 = arith.cmpi ne, %1, %c0_i32_0 : i32
    scf.if %2 {
      %c128 = arith.constant 128 : index
      %c0_60 = arith.constant 0 : index
      %79 = vector.load %arg3[%c128, %c0_60] : memref<384x8xf32, #tpu.memory_space<vmem>>, vector<256x8xf32>
      %c0_i32_61 = arith.constant 0 : i32
      %c4_i32_62 = arith.constant 4 : i32
      %80 = arith.addi %c0_i32_61, %c4_i32_62 : i32
      %c1_i32_63 = arith.constant 1 : i32
      scf.for %arg10 = %c0_i32_61 to %80 step %c1_i32_63  : i32 {
        %c256_i32_65 = arith.constant 256 : i32
        %81 = arith.muli %arg10, %c256_i32_65 : i32
        %82 = tpu.assume_multiple %81, 256 : i32
        %c0_66 = arith.constant 0 : index
        %c0_67 = arith.constant 0 : index
        %83 = arith.index_cast %82 : i32 to index
        %84 = vector.load %arg2[%c0_66, %c0_67, %83] : memref<1x8x1024xf32, #tpu.memory_space<vmem>>, vector<1x8x256xf32>
        %85 = vector.shape_cast %84 : vector<1x8x256xf32> to vector<8x256xf32>
        %cst_68 = arith.constant dense<0.000000e+00> : vector<256x256xf32>
        %86 = tpu.matmul %79, %85, %cst_68 {dimension_numbers = #tpu.dot_dimension_numbers<[1], [0], [0], [1], [0, 0, 1, 1], [], []>} : vector<256x8xf32>, vector<8x256xf32>, vector<256x256xf32> -> vector<256x256xf32>
        %87 = arith.truncf %86 : vector<256x256xf32> to vector<256x256xbf16>
        %c0_69 = arith.constant 0 : index
        %88 = arith.index_cast %82 : i32 to index
        %89 = vector.load %arg8[%c0_69, %88] : memref<256x1024xbf16, #tpu.memory_space<vmem>>, vector<256x256xbf16>
        tpu.vector_store %arg8[%c0_69, %88], %87 {strides = array<i32>} : memref<256x1024xbf16, #tpu.memory_space<vmem>>, vector<256x256xbf16>,
      }
      %c4_i32_64 = arith.constant 4 : i32
    } else {
    }
    %c256_i32 = arith.constant 256 : i32
    %3 = arith.muli %arg1, %c256_i32 : i32
    %4 = tpu.assume_multiple %3, 256 : i32
    %c0 = arith.constant 0 : index
    %c0_1 = arith.constant 0 : index
    %5 = arith.index_cast %4 : i32 to index
    %6 = vector.load %arg2[%c0, %c0_1, %5] : memref<1x8x1024xf32, #tpu.memory_space<vmem>>, vector<1x8x256xf32>
    %7 = vector.shape_cast %6 : vector<1x8x256xf32> to vector<8x256xf32>
    %c0_2 = arith.constant 0 : index
    %c0_3 = arith.constant 0 : index
    %8 = vector.load %arg3[%c0_2, %c0_3] : memref<384x8xf32, #tpu.memory_space<vmem>>, vector<128x8xf32>
    %cst = arith.constant dense<0.000000e+00> : vector<128x256xf32>
    %9 = tpu.matmul %8, %7, %cst {dimension_numbers = #tpu.dot_dimension_numbers<[1], [0], [0], [1], [0, 0, 1, 1], [], []>} : vector<128x8xf32>, vector<8x256xf32>, vector<128x256xf32> -> vector<128x256xf32>
    %cst_4 = arith.constant 0.176776692 : f32
    %10 = vector.broadcast %cst_4 : f32 to vector<128x256xf32>
    %11 = arith.mulf %9, %10 : vector<128x256xf32>
    %12 = arith.truncf %11 : vector<128x256xf32> to vector<128x256xbf16>
    %c0_5 = arith.constant 0 : index
    %c0_6 = arith.constant 0 : index
    %13 = vector.load %arg7[%c0_5, %c0_6] : memref<128x256xbf16, #tpu.memory_space<vmem>>, vector<128x256xbf16>
    tpu.vector_store %arg7[%c0_5, %c0_6], %12 {strides = array<i32>} : memref<128x256xbf16, #tpu.memory_space<vmem>>, vector<128x256xbf16>,
    %c0_7 = arith.constant 0 : index
    %c0_8 = arith.constant 0 : index
    %14 = vector.load %arg7[%c0_7, %c0_8] : memref<128x256xbf16, #tpu.memory_space<vmem>>, vector<32x256xbf16>
    %cst_9 = arith.constant 0xFF800000 : f32
    %15 = vector.broadcast %cst_9 : f32 to vector<1x256xf32>
    %cst_10 = arith.constant 0.000000e+00 : f32
    %16 = vector.broadcast %cst_10 : f32 to vector<1x256xf32>
    %cst_11 = arith.constant 0.000000e+00 : f32
    %17 = vector.broadcast %cst_11 : f32 to vector<32x256xf32>
    %c0_i32_12 = arith.constant 0 : i32
    %c4_i32 = arith.constant 4 : i32
    %18 = arith.addi %c0_i32_12, %c4_i32 : i32
    %c1_i32 = arith.constant 1 : i32
    %19:3 = scf.for %arg10 = %c0_i32_12 to %18 step %c1_i32 iter_args(%arg11 = %15, %arg12 = %16, %arg13 = %17) -> (vector<1x256xf32>, vector<1x256xf32>, vector<32x256xf32>)  : i32 {
      %c256_i32_60 = arith.constant 256 : i32
      %79 = arith.muli %arg10, %c256_i32_60 : i32
      %80 = tpu.assume_multiple %79, 256 : i32
      %c0_61 = arith.constant 0 : index
      %81 = arith.index_cast %80 : i32 to index
      %82 = vector.load %arg8[%c0_61, %81] : memref<256x1024xbf16, #tpu.memory_space<vmem>>, vector<32x256xbf16>
      %c128 = arith.constant 128 : index
      %83 = arith.index_cast %80 : i32 to index
      %84 = vector.load %arg8[%c128, %83] : memref<256x1024xbf16, #tpu.memory_space<vmem>>, vector<32x256xbf16>
      %cst_62 = arith.constant dense<0.000000e+00> : vector<256x256xf32>
      %85 = tpu.matmul %82, %14, %cst_62 {dimension_numbers = #tpu.dot_dimension_numbers<[0], [0], [1], [1], [0, 1, 1, 1], [], []>} : vector<32x256xbf16>, vector<32x256xbf16>, vector<256x256xf32> -> vector<256x256xf32>
      %cst_63 = arith.constant dense<0xFF800000> : vector<256xf32>
      %86 = vector.multi_reduction <maximumf>, %85, %cst_63 [0] : vector<256x256xf32> to vector<256xf32>
      %87 = vector.shape_cast %86 : vector<256xf32> to vector<1x256xf32>
      %88 = arith.maximumf %arg11, %87 : vector<1x256xf32>
      %89 = arith.subf %arg11, %88 : vector<1x256xf32>
      %90 = math.exp %89 : vector<1x256xf32>
      %91 = vector.broadcast %88 : vector<1x256xf32> to vector<256x256xf32>
      %92 = arith.subf %85, %91 : vector<256x256xf32>
      %93 = math.exp %92 : vector<256x256xf32>
      %94 = arith.mulf %90, %arg12 : vector<1x256xf32>
      %cst_64 = arith.constant dense<0.000000e+00> : vector<256xf32>
      %95 = vector.multi_reduction <add>, %93, %cst_64 [0] : vector<256x256xf32> to vector<256xf32>
      %96 = vector.shape_cast %95 : vector<256xf32> to vector<1x256xf32>
      %97 = arith.addf %94, %96 : vector<1x256xf32>
      %98 = vector.broadcast %90 : vector<1x256xf32> to vector<32x256xf32>
      %99 = arith.mulf %98, %arg13 : vector<32x256xf32>
      %100 = arith.truncf %93 : vector<256x256xf32> to vector<256x256xbf16>
      %cst_65 = arith.constant dense<0.000000e+00> : vector<32x256xf32>
      %101 = tpu.matmul %84, %100, %cst_65 {dimension_numbers = #tpu.dot_dimension_numbers<[1], [0], [0], [1], [0, 0, 1, 1], [], []>} : vector<32x256xbf16>, vector<256x256xbf16>, vector<32x256xf32> -> vector<32x256xf32>
      %102 = arith.addf %99, %101 : vector<32x256xf32>
      scf.yield %88, %97, %102 : vector<1x256xf32>, vector<1x256xf32>, vector<32x256xf32>
    }
    %c4_i32_13 = arith.constant 4 : i32
    %20 = tpu.reciprocal %19#1 {approx = true} : vector<1x256xf32> -> vector<1x256xf32>
    %21 = arith.mulf %19#1, %20 : vector<1x256xf32>
    %cst_14 = arith.constant 2.000000e+00 : f32
    %22 = vector.broadcast %cst_14 : f32 to vector<1x256xf32>
    %23 = arith.subf %22, %21 : vector<1x256xf32>
    %24 = arith.mulf %20, %23 : vector<1x256xf32>
    %25 = vector.broadcast %24 : vector<1x256xf32> to vector<32x256xf32>
    %26 = arith.mulf %19#2, %25 : vector<32x256xf32>
    %c0_15 = arith.constant 0 : index
    %c0_16 = arith.constant 0 : index
    %27 = vector.load %arg9[%c0_15, %c0_16] : memref<128x256xf32, #tpu.memory_space<vmem>>, vector<32x256xf32>
    tpu.vector_store %arg9[%c0_15, %c0_16], %26 {strides = array<i32>} : memref<128x256xf32, #tpu.memory_space<vmem>>, vector<32x256xf32>,
    %c32 = arith.constant 32 : index
    %c0_17 = arith.constant 0 : index
    %28 = vector.load %arg7[%c32, %c0_17] : memref<128x256xbf16, #tpu.memory_space<vmem>>, vector<32x256xbf16>
    %cst_18 = arith.constant 0xFF800000 : f32
    %29 = vector.broadcast %cst_18 : f32 to vector<1x256xf32>
    %cst_19 = arith.constant 0.000000e+00 : f32
    %30 = vector.broadcast %cst_19 : f32 to vector<1x256xf32>
    %cst_20 = arith.constant 0.000000e+00 : f32
    %31 = vector.broadcast %cst_20 : f32 to vector<32x256xf32>
    %c0_i32_21 = arith.constant 0 : i32
    %c4_i32_22 = arith.constant 4 : i32
    %32 = arith.addi %c0_i32_21, %c4_i32_22 : i32
    %c1_i32_23 = arith.constant 1 : i32
    %33:3 = scf.for %arg10 = %c0_i32_21 to %32 step %c1_i32_23 iter_args(%arg11 = %29, %arg12 = %30, %arg13 = %31) -> (vector<1x256xf32>, vector<1x256xf32>, vector<32x256xf32>)  : i32 {
      %c256_i32_60 = arith.constant 256 : i32
      %79 = arith.muli %arg10, %c256_i32_60 : i32
      %80 = tpu.assume_multiple %79, 256 : i32
      %c32_61 = arith.constant 32 : index
      %81 = arith.index_cast %80 : i32 to index
      %82 = vector.load %arg8[%c32_61, %81] : memref<256x1024xbf16, #tpu.memory_space<vmem>>, vector<32x256xbf16>
      %c160 = arith.constant 160 : index
      %83 = arith.index_cast %80 : i32 to index
      %84 = vector.load %arg8[%c160, %83] : memref<256x1024xbf16, #tpu.memory_space<vmem>>, vector<32x256xbf16>
      %cst_62 = arith.constant dense<0.000000e+00> : vector<256x256xf32>
      %85 = tpu.matmul %82, %28, %cst_62 {dimension_numbers = #tpu.dot_dimension_numbers<[0], [0], [1], [1], [0, 1, 1, 1], [], []>} : vector<32x256xbf16>, vector<32x256xbf16>, vector<256x256xf32> -> vector<256x256xf32>
      %cst_63 = arith.constant dense<0xFF800000> : vector<256xf32>
      %86 = vector.multi_reduction <maximumf>, %85, %cst_63 [0] : vector<256x256xf32> to vector<256xf32>
      %87 = vector.shape_cast %86 : vector<256xf32> to vector<1x256xf32>
      %88 = arith.maximumf %arg11, %87 : vector<1x256xf32>
      %89 = arith.subf %arg11, %88 : vector<1x256xf32>
      %90 = math.exp %89 : vector<1x256xf32>
      %91 = vector.broadcast %88 : vector<1x256xf32> to vector<256x256xf32>
      %92 = arith.subf %85, %91 : vector<256x256xf32>
      %93 = math.exp %92 : vector<256x256xf32>
      %94 = arith.mulf %90, %arg12 : vector<1x256xf32>
      %cst_64 = arith.constant dense<0.000000e+00> : vector<256xf32>
      %95 = vector.multi_reduction <add>, %93, %cst_64 [0] : vector<256x256xf32> to vector<256xf32>
      %96 = vector.shape_cast %95 : vector<256xf32> to vector<1x256xf32>
      %97 = arith.addf %94, %96 : vector<1x256xf32>
      %98 = vector.broadcast %90 : vector<1x256xf32> to vector<32x256xf32>
      %99 = arith.mulf %98, %arg13 : vector<32x256xf32>
      %100 = arith.truncf %93 : vector<256x256xf32> to vector<256x256xbf16>
      %cst_65 = arith.constant dense<0.000000e+00> : vector<32x256xf32>
      %101 = tpu.matmul %84, %100, %cst_65 {dimension_numbers = #tpu.dot_dimension_numbers<[1], [0], [0], [1], [0, 0, 1, 1], [], []>} : vector<32x256xbf16>, vector<256x256xbf16>, vector<32x256xf32> -> vector<32x256xf32>
      %102 = arith.addf %99, %101 : vector<32x256xf32>
      scf.yield %88, %97, %102 : vector<1x256xf32>, vector<1x256xf32>, vector<32x256xf32>
    }
    %c4_i32_24 = arith.constant 4 : i32
    %34 = tpu.reciprocal %33#1 {approx = true} : vector<1x256xf32> -> vector<1x256xf32>
    %35 = arith.mulf %33#1, %34 : vector<1x256xf32>
    %cst_25 = arith.constant 2.000000e+00 : f32
    %36 = vector.broadcast %cst_25 : f32 to vector<1x256xf32>
    %37 = arith.subf %36, %35 : vector<1x256xf32>
    %38 = arith.mulf %34, %37 : vector<1x256xf32>
    %39 = vector.broadcast %38 : vector<1x256xf32> to vector<32x256xf32>
    %40 = arith.mulf %33#2, %39 : vector<32x256xf32>
    %c32_26 = arith.constant 32 : index
    %c0_27 = arith.constant 0 : index
    %41 = vector.load %arg9[%c32_26, %c0_27] : memref<128x256xf32, #tpu.memory_space<vmem>>, vector<32x256xf32>
    tpu.vector_store %arg9[%c32_26, %c0_27], %40 {strides = array<i32>} : memref<128x256xf32, #tpu.memory_space<vmem>>, vector<32x256xf32>,
    %c64 = arith.constant 64 : index
    %c0_28 = arith.constant 0 : index
    %42 = vector.load %arg7[%c64, %c0_28] : memref<128x256xbf16, #tpu.memory_space<vmem>>, vector<32x256xbf16>
    %cst_29 = arith.constant 0xFF800000 : f32
    %43 = vector.broadcast %cst_29 : f32 to vector<1x256xf32>
    %cst_30 = arith.constant 0.000000e+00 : f32
    %44 = vector.broadcast %cst_30 : f32 to vector<1x256xf32>
    %cst_31 = arith.constant 0.000000e+00 : f32
    %45 = vector.broadcast %cst_31 : f32 to vector<32x256xf32>
    %c0_i32_32 = arith.constant 0 : i32
    %c4_i32_33 = arith.constant 4 : i32
    %46 = arith.addi %c0_i32_32, %c4_i32_33 : i32
    %c1_i32_34 = arith.constant 1 : i32
    %47:3 = scf.for %arg10 = %c0_i32_32 to %46 step %c1_i32_34 iter_args(%arg11 = %43, %arg12 = %44, %arg13 = %45) -> (vector<1x256xf32>, vector<1x256xf32>, vector<32x256xf32>)  : i32 {
      %c256_i32_60 = arith.constant 256 : i32
      %79 = arith.muli %arg10, %c256_i32_60 : i32
      %80 = tpu.assume_multiple %79, 256 : i32
      %c64_61 = arith.constant 64 : index
      %81 = arith.index_cast %80 : i32 to index
      %82 = vector.load %arg8[%c64_61, %81] : memref<256x1024xbf16, #tpu.memory_space<vmem>>, vector<32x256xbf16>
      %c192 = arith.constant 192 : index
      %83 = arith.index_cast %80 : i32 to index
      %84 = vector.load %arg8[%c192, %83] : memref<256x1024xbf16, #tpu.memory_space<vmem>>, vector<32x256xbf16>
      %cst_62 = arith.constant dense<0.000000e+00> : vector<256x256xf32>
      %85 = tpu.matmul %82, %42, %cst_62 {dimension_numbers = #tpu.dot_dimension_numbers<[0], [0], [1], [1], [0, 1, 1, 1], [], []>} : vector<32x256xbf16>, vector<32x256xbf16>, vector<256x256xf32> -> vector<256x256xf32>
      %cst_63 = arith.constant dense<0xFF800000> : vector<256xf32>
      %86 = vector.multi_reduction <maximumf>, %85, %cst_63 [0] : vector<256x256xf32> to vector<256xf32>
      %87 = vector.shape_cast %86 : vector<256xf32> to vector<1x256xf32>
      %88 = arith.maximumf %arg11, %87 : vector<1x256xf32>
      %89 = arith.subf %arg11, %88 : vector<1x256xf32>
      %90 = math.exp %89 : vector<1x256xf32>
      %91 = vector.broadcast %88 : vector<1x256xf32> to vector<256x256xf32>
      %92 = arith.subf %85, %91 : vector<256x256xf32>
      %93 = math.exp %92 : vector<256x256xf32>
      %94 = arith.mulf %90, %arg12 : vector<1x256xf32>
      %cst_64 = arith.constant dense<0.000000e+00> : vector<256xf32>
      %95 = vector.multi_reduction <add>, %93, %cst_64 [0] : vector<256x256xf32> to vector<256xf32>
      %96 = vector.shape_cast %95 : vector<256xf32> to vector<1x256xf32>
      %97 = arith.addf %94, %96 : vector<1x256xf32>
      %98 = vector.broadcast %90 : vector<1x256xf32> to vector<32x256xf32>
      %99 = arith.mulf %98, %arg13 : vector<32x256xf32>
      %100 = arith.truncf %93 : vector<256x256xf32> to vector<256x256xbf16>
      %cst_65 = arith.constant dense<0.000000e+00> : vector<32x256xf32>
      %101 = tpu.matmul %84, %100, %cst_65 {dimension_numbers = #tpu.dot_dimension_numbers<[1], [0], [0], [1], [0, 0, 1, 1], [], []>} : vector<32x256xbf16>, vector<256x256xbf16>, vector<32x256xf32> -> vector<32x256xf32>
      %102 = arith.addf %99, %101 : vector<32x256xf32>
      scf.yield %88, %97, %102 : vector<1x256xf32>, vector<1x256xf32>, vector<32x256xf32>
    }
    %c4_i32_35 = arith.constant 4 : i32
    %48 = tpu.reciprocal %47#1 {approx = true} : vector<1x256xf32> -> vector<1x256xf32>
    %49 = arith.mulf %47#1, %48 : vector<1x256xf32>
    %cst_36 = arith.constant 2.000000e+00 : f32
    %50 = vector.broadcast %cst_36 : f32 to vector<1x256xf32>
    %51 = arith.subf %50, %49 : vector<1x256xf32>
    %52 = arith.mulf %48, %51 : vector<1x256xf32>
    %53 = vector.broadcast %52 : vector<1x256xf32> to vector<32x256xf32>
    %54 = arith.mulf %47#2, %53 : vector<32x256xf32>
    %c64_37 = arith.constant 64 : index
    %c0_38 = arith.constant 0 : index
    %55 = vector.load %arg9[%c64_37, %c0_38] : memref<128x256xf32, #tpu.memory_space<vmem>>, vector<32x256xf32>
    tpu.vector_store %arg9[%c64_37, %c0_38], %54 {strides = array<i32>} : memref<128x256xf32, #tpu.memory_space<vmem>>, vector<32x256xf32>,
    %c96 = arith.constant 96 : index
    %c0_39 = arith.constant 0 : index
    %56 = vector.load %arg7[%c96, %c0_39] : memref<128x256xbf16, #tpu.memory_space<vmem>>, vector<32x256xbf16>
    %cst_40 = arith.constant 0xFF800000 : f32
    %57 = vector.broadcast %cst_40 : f32 to vector<1x256xf32>
    %cst_41 = arith.constant 0.000000e+00 : f32
    %58 = vector.broadcast %cst_41 : f32 to vector<1x256xf32>
    %cst_42 = arith.constant 0.000000e+00 : f32
    %59 = vector.broadcast %cst_42 : f32 to vector<32x256xf32>
    %c0_i32_43 = arith.constant 0 : i32
    %c4_i32_44 = arith.constant 4 : i32
    %60 = arith.addi %c0_i32_43, %c4_i32_44 : i32
    %c1_i32_45 = arith.constant 1 : i32
    %61:3 = scf.for %arg10 = %c0_i32_43 to %60 step %c1_i32_45 iter_args(%arg11 = %57, %arg12 = %58, %arg13 = %59) -> (vector<1x256xf32>, vector<1x256xf32>, vector<32x256xf32>)  : i32 {
      %c256_i32_60 = arith.constant 256 : i32
      %79 = arith.muli %arg10, %c256_i32_60 : i32
      %80 = tpu.assume_multiple %79, 256 : i32
      %c96_61 = arith.constant 96 : index
      %81 = arith.index_cast %80 : i32 to index
      %82 = vector.load %arg8[%c96_61, %81] : memref<256x1024xbf16, #tpu.memory_space<vmem>>, vector<32x256xbf16>
      %c224 = arith.constant 224 : index
      %83 = arith.index_cast %80 : i32 to index
      %84 = vector.load %arg8[%c224, %83] : memref<256x1024xbf16, #tpu.memory_space<vmem>>, vector<32x256xbf16>
      %cst_62 = arith.constant dense<0.000000e+00> : vector<256x256xf32>
      %85 = tpu.matmul %82, %56, %cst_62 {dimension_numbers = #tpu.dot_dimension_numbers<[0], [0], [1], [1], [0, 1, 1, 1], [], []>} : vector<32x256xbf16>, vector<32x256xbf16>, vector<256x256xf32> -> vector<256x256xf32>
      %cst_63 = arith.constant dense<0xFF800000> : vector<256xf32>
      %86 = vector.multi_reduction <maximumf>, %85, %cst_63 [0] : vector<256x256xf32> to vector<256xf32>
      %87 = vector.shape_cast %86 : vector<256xf32> to vector<1x256xf32>
      %88 = arith.maximumf %arg11, %87 : vector<1x256xf32>
      %89 = arith.subf %arg11, %88 : vector<1x256xf32>
      %90 = math.exp %89 : vector<1x256xf32>
      %91 = vector.broadcast %88 : vector<1x256xf32> to vector<256x256xf32>
      %92 = arith.subf %85, %91 : vector<256x256xf32>
      %93 = math.exp %92 : vector<256x256xf32>
      %94 = arith.mulf %90, %arg12 : vector<1x256xf32>
      %cst_64 = arith.constant dense<0.000000e+00> : vector<256xf32>
      %95 = vector.multi_reduction <add>, %93, %cst_64 [0] : vector<256x256xf32> to vector<256xf32>
      %96 = vector.shape_cast %95 : vector<256xf32> to vector<1x256xf32>
      %97 = arith.addf %94, %96 : vector<1x256xf32>
      %98 = vector.broadcast %90 : vector<1x256xf32> to vector<32x256xf32>
      %99 = arith.mulf %98, %arg13 : vector<32x256xf32>
      %100 = arith.truncf %93 : vector<256x256xf32> to vector<256x256xbf16>
      %cst_65 = arith.constant dense<0.000000e+00> : vector<32x256xf32>
      %101 = tpu.matmul %84, %100, %cst_65 {dimension_numbers = #tpu.dot_dimension_numbers<[1], [0], [0], [1], [0, 0, 1, 1], [], []>} : vector<32x256xbf16>, vector<256x256xbf16>, vector<32x256xf32> -> vector<32x256xf32>
      %102 = arith.addf %99, %101 : vector<32x256xf32>
      scf.yield %88, %97, %102 : vector<1x256xf32>, vector<1x256xf32>, vector<32x256xf32>
    }
    %c4_i32_46 = arith.constant 4 : i32
    %62 = tpu.reciprocal %61#1 {approx = true} : vector<1x256xf32> -> vector<1x256xf32>
    %63 = arith.mulf %61#1, %62 : vector<1x256xf32>
    %cst_47 = arith.constant 2.000000e+00 : f32
    %64 = vector.broadcast %cst_47 : f32 to vector<1x256xf32>
    %65 = arith.subf %64, %63 : vector<1x256xf32>
    %66 = arith.mulf %62, %65 : vector<1x256xf32>
    %67 = vector.broadcast %66 : vector<1x256xf32> to vector<32x256xf32>
    %68 = arith.mulf %61#2, %67 : vector<32x256xf32>
    %c96_48 = arith.constant 96 : index
    %c0_49 = arith.constant 0 : index
    %69 = vector.load %arg9[%c96_48, %c0_49] : memref<128x256xf32, #tpu.memory_space<vmem>>, vector<32x256xf32>
    tpu.vector_store %arg9[%c96_48, %c0_49], %68 {strides = array<i32>} : memref<128x256xf32, #tpu.memory_space<vmem>>, vector<32x256xf32>,
    %c0_50 = arith.constant 0 : index
    %c0_51 = arith.constant 0 : index
    %70 = vector.load %arg4[%c0_50, %c0_51] : memref<8x128xf32, #tpu.memory_space<vmem>>, vector<8x128xf32>
    %c0_52 = arith.constant 0 : index
    %c0_53 = arith.constant 0 : index
    %71 = vector.load %arg9[%c0_52, %c0_53] : memref<128x256xf32, #tpu.memory_space<vmem>>, vector<128x256xf32>
    %cst_54 = arith.constant dense<0.000000e+00> : vector<8x256xf32>
    %72 = tpu.matmul %70, %71, %cst_54 {dimension_numbers = #tpu.dot_dimension_numbers<[1], [0], [0], [1], [0, 0, 1, 1], [], []>} : vector<8x128xf32>, vector<128x256xf32>, vector<8x256xf32> -> vector<8x256xf32>
    %c0_55 = arith.constant 0 : index
    %c0_56 = arith.constant 0 : index
    %73 = vector.load %arg5[%c0_55, %c0_56] : memref<8x1xf32, #tpu.memory_space<vmem>>, vector<8x1xf32>
    %74 = vector.broadcast %73 : vector<8x1xf32> to vector<8x256xf32>
    %75 = arith.addf %72, %74 : vector<8x256xf32>
    %c0_57 = arith.constant 0 : index
    %c0_58 = arith.constant 0 : index
    %c0_59 = arith.constant 0 : index
    %76 = vector.load %arg6[%c0_57, %c0_58, %c0_59] : memref<1x8x256xf32, #tpu.memory_space<vmem>>, vector<1x8x256xf32>
    %77 = vector.shape_cast %76 : vector<1x8x256xf32> to vector<8x256xf32>
    %78 = vector.shape_cast %75 : vector<8x256xf32> to vector<1x8x256xf32>
    tpu.vector_store %arg6[%c0_57, %c0_58, %c0_59], %78 {strides = array<i32>} : memref<1x8x256xf32, #tpu.memory_space<vmem>>, vector<1x8x256xf32>,
    return
  }
  func.func @transform_0(%arg0: i32, %arg1: i32) -> (i32, i32, i32) {
    %c0_i32 = arith.constant 0 : i32
    %c0_i32_0 = arith.constant 0 : i32
    %c0_i32_1 = arith.constant 0 : i32
    return %arg0, %c0_i32, %c0_i32_0 : i32, i32, i32
  }
  func.func @transform_1(%arg0: i32, %arg1: i32) -> (i32, i32) {
    %c0_i32 = arith.constant 0 : i32
    %c0_i32_0 = arith.constant 0 : i32
    %c0_i32_1 = arith.constant 0 : i32
    return %c0_i32, %c0_i32_0 : i32, i32
  }
  func.func @transform_2(%arg0: i32, %arg1: i32) -> (i32, i32) {
    %c0_i32 = arith.constant 0 : i32
    %c0_i32_0 = arith.constant 0 : i32
    %c0_i32_1 = arith.constant 0 : i32
    return %c0_i32, %c0_i32_0 : i32, i32
  }
  func.func @transform_3(%arg0: i32, %arg1: i32) -> (i32, i32) {
    %c0_i32 = arith.constant 0 : i32
    %c0_i32_0 = arith.constant 0 : i32
    %c0_i32_1 = arith.constant 0 : i32
    return %c0_i32, %c0_i32_0 : i32, i32
  }
  func.func @transform_4(%arg0: i32, %arg1: i32) -> (i32, i32, i32) {
    %c0_i32 = arith.constant 0 : i32
    %c0_i32_0 = arith.constant 0 : i32
    return %arg0, %c0_i32, %arg1 : i32, i32, i32
  }
}

</mosaic_0001>

<llo_original>
// kernel: tpu_custom_call.1
$region0: #{tpu_custom_call.1}
  #allocation0 [shape = 'u32[]', space=smem, size = 0x4, offset = 0x4, fixed_abs, tag = 'smem constant byte address 0x4 - core index']
  #allocation1 [shape = 'u32[144,128]{1,0:T(1,128)}', space=vmem, size = 0x12000, scoped, tag = 'internal scratch']
  #allocation2 [shape = 'bf16[128,256]{1,0:T(8,128)(2,1)}', space=vmem, size = 0x10000, scoped, tag = 'scratch operand']
  #allocation3 [shape = 'bf16[256,1024]{1,0:T(8,128)(2,1)}', space=vmem, size = 0x80000, scoped, tag = 'scratch operand']
  #allocation4 [shape = 'f32[128,256]{1,0:T(8,128)}', space=vmem, size = 0x20000, scoped, tag = 'scratch operand']
  %s0 = inlined_call_operand.vmem [shape: f32[2,8,1024], index: 0, kind: input, shape index: {}]
  %s1 = inlined_call_operand.vmem [shape: f32[384,8], index: 1, kind: input, shape index: {}]
  %s2 = inlined_call_operand.vmem [shape: f32[8,128], index: 2, kind: input, shape index: {}]
  %s3 = inlined_call_operand.vmem [shape: f32[8,1], index: 3, kind: input, shape index: {}]
  %s4 = inlined_call_operand.hbm [shape: f32[2,8,1024], index: 4, kind: output, shape index: {}]
  %s5 = sld [smem:[#allocation0]]
  $region88: #{tpu_custom_call.1} parent=0
    _
  %s7 = ssub.s32 1, %s5
  %s8 = scalar_select 0, %s7, %s5
  $region1: #{tpu_custom_call.1} parent=0
    #allocation5 [shape = 'u8[16384]{0}', space=vmem, size = 0x4000, scoped, tag = 'output window, operand 0']
    #allocation6 [shape = 's32[2]{0}', space=sflag, size = 0x8, scoped, tag = 'scoped memory for tpu_custom_call.1']
    %9 = vsyncpa [#allocation6], 0
    %s10 = scalar_lea.sflag [#allocation6], 1
    %11 = vsyncpa %s10, 0
    loop: start=0, step=1, limit=10
    $region2: #{tpu_custom_call.1} parent=1 // loop_pre_header
      _
    $region3: #{tpu_custom_call.1} parent=1 // loop_header
      %s13 = sphi 0, %s17
      %p14 = scmp.ge.s32.totalorder %s13, 10
      %s20 = sphi 0, %s32
      %s21 = sphi 0, %s28
      %s22 = sphi 0, %s20
      %s23 = sphi 0, %s21
      %s24 = sphi 0, %s22
      %s25 = sphi 0, %s23
      %s35 = sphi 0, %s37
      %s38 = sphi 0, %s35
      %s39 = sphi 0, %s38
      %s55 = sphi 0, %s39
      %s59 = sphi 0, %s59
      %s61 = sphi 0, %s59
      %s62 = sphi 0, %s61
      %s76 = sphi 0, %s62
      %s80 = sphi 0, %s80
      %s82 = sphi 0, %s80
      %s83 = sphi 0, %s82
      %s97 = sphi 0, %s83
      %s101 = sphi 0, %s101
      %s103 = sphi 0, %s101
      %s104 = sphi 0, %s103
      %s118 = sphi 0, %s104
      %s126 = sphi 0, %s128
      %s129 = sphi 0, %s126
      %s130 = sphi 0, %s129
      %s146 = sphi 0, %s130
    $region4: #{tpu_custom_call.1} parent=1 // loop_header_branch
      %16 = sbr.rel (%p14) target = $region8
    $region5: #{tpu_custom_call.1} parent=1 // loop_body
      %s18 = ssub.s32 %s13, 1
      %s19 = ssub.s32 %s13, 2
      %s26 = sadd.s32 1, %s21
      %p27 = scmp.ge.s32.totalorder %s26, 4
      %s28 = scalar_select %p27, 0, %s26
      %s29 = sadd.s32 1, %s20
      %s30 = scalar_select %p27, %s29, %s20
      %p31 = scmp.ge.s32.totalorder %s30, 2
      %s32 = scalar_select %p31, 0, %s30
      %s33 = ssub.s32 %s20, %s32
      %p34 = scmp.eq.s32.totalorder %s33, 0
      %s36 = sadd.s32 %s35, 1
      %s37 = scalar_select %p34, %s35, %s36
      %p40 = pneg %p34
      %p41 = scmp.eq.s32.totalorder %s13, 7
      %p42 = por %p40, %p41
      %p43 = scmp.ne.s32.totalorder %s35, %s38
      %p44 = scmp.eq.s32.totalorder %s13, 0
      %p45 = por %p43, %p44
      %p46 = scmp.ne.s32.totalorder %s35, %s38
      %p47 = scmp.eq.s32.totalorder %s18, 7
      %p48 = por %p46, %p47
      %p49 = scmp.ne.s32.totalorder %s38, %s39
      %p50 = scmp.eq.s32.totalorder %s18, 0
      %p51 = por %p49, %p50
      %p52 = scmp.ne.s32.totalorder %s38, %s39
      %p53 = scmp.eq.s32.totalorder %s19, 7
      %p54 = por %p52, %p53
      %p56 = scmp.ne.s32.totalorder %s39, %s55
      %p57 = scmp.eq.s32.totalorder %s19, 0
      %p58 = por %p56, %p57
      %s60 = sadd.s32 %s59, 1
      %p63 = scmp.eq.s32.totalorder %s13, 7
      %p64 = scmp.ne.s32.totalorder %s59, %s61
      %p65 = scmp.eq.s32.totalorder %s13, 0
      %p66 = por %p64, %p65
      %p67 = scmp.ne.s32.totalorder %s59, %s61
      %p68 = scmp.eq.s32.totalorder %s18, 7
      %p69 = por %p67, %p68
      %p70 = scmp.ne.s32.totalorder %s61, %s62
      %p71 = scmp.eq.s32.totalorder %s18, 0
      %p72 = por %p70, %p71
      %p73 = scmp.ne.s32.totalorder %s61, %s62
      %p74 = scmp.eq.s32.totalorder %s19, 7
      %p75 = por %p73, %p74
      %p77 = scmp.ne.s32.totalorder %s62, %s76
      %p78 = scmp.eq.s32.totalorder %s19, 0
      %p79 = por %p77, %p78
      %s81 = sadd.s32 %s80, 1
      %p84 = scmp.eq.s32.totalorder %s13, 7
      %p85 = scmp.ne.s32.totalorder %s80, %s82
      %p86 = scmp.eq.s32.totalorder %s13, 0
      %p87 = por %p85, %p86
      %p88 = scmp.ne.s32.totalorder %s80, %s82
      %p89 = scmp.eq.s32.totalorder %s18, 7
      %p90 = por %p88, %p89
      %p91 = scmp.ne.s32.totalorder %s82, %s83
      %p92 = scmp.eq.s32.totalorder %s18, 0
      %p93 = por %p91, %p92
      %p94 = scmp.ne.s32.totalorder %s82, %s83
      %p95 = scmp.eq.s32.totalorder %s19, 7
      %p96 = por %p94, %p95
      %p98 = scmp.ne.s32.totalorder %s83, %s97
      %p99 = scmp.eq.s32.totalorder %s19, 0
      %p100 = por %p98, %p99
      %s102 = sadd.s32 %s101, 1
      %p105 = scmp.eq.s32.totalorder %s13, 7
      %p106 = scmp.ne.s32.totalorder %s101, %s103
      %p107 = scmp.eq.s32.totalorder %s13, 0
      %p108 = por %p106, %p107
      %p109 = scmp.ne.s32.totalorder %s101, %s103
      %p110 = scmp.eq.s32.totalorder %s18, 7
      %p111 = por %p109, %p110
      %p112 = scmp.ne.s32.totalorder %s103, %s104
      %p113 = scmp.eq.s32.totalorder %s18, 0
      %p114 = por %p112, %p113
      %p115 = scmp.ne.s32.totalorder %s103, %s104
      %p116 = scmp.eq.s32.totalorder %s19, 7
      %p117 = por %p115, %p116
      %p119 = scmp.ne.s32.totalorder %s104, %s118
      %p120 = scmp.eq.s32.totalorder %s19, 0
      %p121 = por %p119, %p120
      %s122 = ssub.s32 %s20, %s32
      %s123 = ssub.s32 %s21, %s28
      %s124 = sor.u32 %s122, %s123
      %p125 = scmp.eq.s32.totalorder %s124, 0
      %s127 = sadd.s32 %s126, 1
      %s128 = scalar_select %p125, %s126, %s127
      %p131 = pneg %p125
      %p132 = scmp.eq.s32.totalorder %s13, 7
      %p133 = por %p131, %p132
      %p134 = scmp.ne.s32.totalorder %s126, %s129
      %p135 = scmp.eq.s32.totalorder %s13, 0
      %p136 = por %p134, %p135
      %p137 = scmp.ne.s32.totalorder %s126, %s129
      %p138 = scmp.eq.s32.totalorder %s18, 7
      %p139 = por %p137, %p138
      %p140 = scmp.ne.s32.totalorder %s129, %s130
      %p141 = scmp.eq.s32.totalorder %s18, 0
      %p142 = por %p140, %p141
      %p143 = scmp.ne.s32.totalorder %s129, %s130
      %p144 = scmp.eq.s32.totalorder %s19, 7
      %p145 = por %p143, %p144
      %p147 = scmp.ne.s32.totalorder %s130, %s146
      %p148 = scmp.eq.s32.totalorder %s19, 0
      %p149 = por %p147, %p148
      %p150 = scmp.le.s32.totalorder 1, %s13
      %p151 = scmp.lt.s32.totalorder %s13, 9
      %p152 = pnand %p150, %p151
      %p153 = pneg %p152
      // Predicated region
      $region9: #{tpu_custom_call.1} parent=5 // pred_check
        _
      $region10: #{tpu_custom_call.1} parent=5 // pred_check_branch
        %155 = sbr.rel (%p152) target = $region12
      $region11: #{tpu_custom_call.1} parent=5 // pred_region
        %s156 = ssub.s32 %s13, 1
        // Predicated region
        $region13: #{tpu_custom_call.1} parent=11 // pred_check
          %p157 = pneg %p72
        $region14: #{tpu_custom_call.1} parent=11 // pred_check_branch
          %159 = sbr.rel (%p157) target = $region16
        $region15: #{tpu_custom_call.1} parent=11 // pred_region
          _
        $region16: #{tpu_custom_call.1} parent=11 // pred_fallthru
          _
        // Predicated region
        $region17: #{tpu_custom_call.1} parent=11 // pred_check
          %p160 = pneg %p93
        $region18: #{tpu_custom_call.1} parent=11 // pred_check_branch
          %162 = sbr.rel (%p160) target = $region20
        $region19: #{tpu_custom_call.1} parent=11 // pred_region
          _
        $region20: #{tpu_custom_call.1} parent=11 // pred_fallthru
          _
        // Predicated region
        $region21: #{tpu_custom_call.1} parent=11 // pred_check
          %p163 = pneg %p114
        $region22: #{tpu_custom_call.1} parent=11 // pred_check_branch
          %165 = sbr.rel (%p163) target = $region24
        $region23: #{tpu_custom_call.1} parent=11 // pred_region
          _
        $region24: #{tpu_custom_call.1} parent=11 // pred_fallthru
          _
      $region12: #{tpu_custom_call.1} parent=5 // pred_fallthru
        _
      %p166 = scmp.lt.s32.totalorder %s13, 8
      // Predicated region
      $region25: #{tpu_custom_call.1} parent=5 // pred_check
        %p167 = pneg %p166
      $region26: #{tpu_custom_call.1} parent=5 // pred_check_branch
        %169 = sbr.rel (%p167) target = $region28
      $region27: #{tpu_custom_call.1} parent=5 // pred_region
        // Predicated region
        $region29: #{tpu_custom_call.1} parent=27 // pred_check
          %p170 = pneg %p45
        $region30: #{tpu_custom_call.1} parent=27 // pred_check_branch
          %172 = sbr.rel (%p170) target = $region32
        $region31: #{tpu_custom_call.1} parent=27 // pred_region
          %p173 = scmp.lt.s32.totalorder %s20, 1
          %s174 = scalar_select %p173, %s20, 1
          %s175 = smul.addr %s174, 8
          %s176 = smul.addr %s175, 8
          %s177 = scalar_lea.vmem %s0, %s176
        $region32: #{tpu_custom_call.1} parent=27 // pred_fallthru
          _
      $region28: #{tpu_custom_call.1} parent=5 // pred_fallthru
        _
      %p178 = scmp.le.s32.totalorder 1, %s13
      %p179 = scmp.lt.s32.totalorder %s13, 9
      %p180 = pnand %p178, %p179
      %p181 = pneg %p180
      // Predicated region
      $region33: #{tpu_custom_call.1} parent=5 // pred_check
        _
      $region34: #{tpu_custom_call.1} parent=5 // pred_check_branch
        %183 = sbr.rel (%p180) target = $region36
      $region35: #{tpu_custom_call.1} parent=5 // pred_region
        %s184 = ssub.s32 %s13, 1
        %p185 = scmp.lt.s32.totalorder %s22, 1
        %s186 = scalar_select %p185, %s22, 1
        %s187 = smul.addr %s186, 8
        %s188 = smul.addr %s187, 8
        %s189 = scalar_lea.vmem %s0, %s188
        %p190 = pneg %p51
        %p191 = pneg %p48
        %p192 = pneg %p72
        %p193 = pneg %p69
        %p194 = pneg %p93
        %p195 = pneg %p90
        %p196 = pneg %p114
        %p197 = pneg %p111
        %p198 = pneg %p142
        %p199 = pneg %p139
        %s200 = sand.u32 %s129, 1
        %s201 = scalar_lea.sflag [#allocation6], %s200
        %s202 = sand.u32 %s129, 1
        %s203 = smul.addr %s202, 16
        %s204 = scalar_lea.vmem [#allocation5], %s203
        %p205 = scmp.lt.s32.totalorder %s22, 1
        %s206 = scalar_select %p205, %s22, 1
        %s207 = smul.addr %s206, 8
        %s208 = smul.addr %s207, 8
        %s209 = scalar_lea.vmem %s0, %s208
        %s210 = smul.u32 2, %s23
        %p212 = scmp.eq.s32.totalorder %s23, 0
        // Predicated region
        $region37: #{tpu_custom_call.1} parent=35 // pred_check
          %p213 = pneg %p212
        $region38: #{tpu_custom_call.1} parent=35 // pred_check_branch
          %215 = sbr.rel (%p213) target = $region40
        $region39: #{tpu_custom_call.1} parent=35 // pred_region
          %v216 = vld [vmem:[%s1 + $0x80] sm:$0xff]
          %v217 = vld [vmem:[%s1 + $0x88] sm:$0xff]
          %v218 = vld [vmem:[%s1 + $0x90] sm:$0xff]
          %v219 = vld [vmem:[%s1 + $0x98] sm:$0xff]
          %v220 = vld [vmem:[%s1 + $0xa0] sm:$0xff]
          %v221 = vld [vmem:[%s1 + $0xa8] sm:$0xff]
          %v222 = vld [vmem:[%s1 + $0xb0] sm:$0xff]
          %v223 = vld [vmem:[%s1 + $0xb8] sm:$0xff]
          %v224 = vld [vmem:[%s1 + $0xc0] sm:$0xff]
          %v225 = vld [vmem:[%s1 + $0xc8] sm:$0xff]
          %v226 = vld [vmem:[%s1 + $0xd0] sm:$0xff]
          %v227 = vld [vmem:[%s1 + $0xd8] sm:$0xff]
          %v228 = vld [vmem:[%s1 + $0xe0] sm:$0xff]
          %v229 = vld [vmem:[%s1 + $0xe8] sm:$0xff]
          %v230 = vld [vmem:[%s1 + $0xf0] sm:$0xff]
          %v231 = vld [vmem:[%s1 + $0xf8] sm:$0xff]
          %v232 = vld [vmem:[%s1 + $0x100] sm:$0xff]
          %v233 = vld [vmem:[%s1 + $0x108] sm:$0xff]
          %v234 = vld [vmem:[%s1 + $0x110] sm:$0xff]
          %v235 = vld [vmem:[%s1 + $0x118] sm:$0xff]
          %v236 = vld [vmem:[%s1 + $0x120] sm:$0xff]
          %v237 = vld [vmem:[%s1 + $0x128] sm:$0xff]
          %v238 = vld [vmem:[%s1 + $0x130] sm:$0xff]
          %v239 = vld [vmem:[%s1 + $0x138] sm:$0xff]
          %v240 = vld [vmem:[%s1 + $0x140] sm:$0xff]
          %v241 = vld [vmem:[%s1 + $0x148] sm:$0xff]
          %v242 = vld [vmem:[%s1 + $0x150] sm:$0xff]
          %v243 = vld [vmem:[%s1 + $0x158] sm:$0xff]
          %v244 = vld [vmem:[%s1 + $0x160] sm:$0xff]
          %v245 = vld [vmem:[%s1 + $0x168] sm:$0xff]
          %v246 = vld [vmem:[%s1 + $0x170] sm:$0xff]
          %v247 = vld [vmem:[%s1 + $0x178] sm:$0xff]
          loop: start=0, step=1, limit=4
          $region41: #{tpu_custom_call.1} parent=39 // loop_pre_header
            _
          $region42: #{tpu_custom_call.1} parent=39 // loop_header
            %s249 = sphi 0, %s253
            %p250 = scmp.ge.s32.totalorder %s249, 4
          $region43: #{tpu_custom_call.1} parent=39 // loop_header_branch
            %252 = sbr.rel (%p250) target = $region47
          $region44: #{tpu_custom_call.1} parent=39 // loop_body
            %s254 = smul.u32 %s249, 256
            %s255 = sshra.s32 %s254, 7
            %s256 = sand.u32 %s254, 127
            %s257 = smul.addr %s255, 8
            %s258 = scalar_lea.vmem %s209, %s257
            %v259 = vld [vmem:[%s258] sm:$0xff]
            %v260 = vld [vmem:[%s258 + $0x8] sm:$0xff]
            %vm261 = vcmask 64512
            %v263 = vsel %vm261, %v216, 0
            %v266 = vsel %vm261, %v217, 0
            %v269 = vsel %vm261, %v218, 0
            %v272 = vsel %vm261, %v219, 0
            %v275 = vsel %vm261, %v220, 0
            %v278 = vsel %vm261, %v221, 0
            %v281 = vsel %vm261, %v222, 0
            %v284 = vsel %vm261, %v223, 0
            %v287 = vsel %vm261, %v224, 0
            %v290 = vsel %vm261, %v225, 0
            %v293 = vsel %vm261, %v226, 0
            %v296 = vsel %vm261, %v227, 0
            %v299 = vsel %vm261, %v228, 0
            %v302 = vsel %vm261, %v229, 0
            %v305 = vsel %vm261, %v230, 0
            %v308 = vsel %vm261, %v231, 0
            %v311 = vsel %vm261, %v232, 0
            %v314 = vsel %vm261, %v233, 0
            %v317 = vsel %vm261, %v234, 0
            %v320 = vsel %vm261, %v235, 0
            %v323 = vsel %vm261, %v236, 0
            %v326 = vsel %vm261, %v237, 0
            %v329 = vsel %vm261, %v238, 0
            %v332 = vsel %vm261, %v239, 0
            %v335 = vsel %vm261, %v240, 0
            %v338 = vsel %vm261, %v241, 0
            %v341 = vsel %vm261, %v242, 0
            %v344 = vsel %vm261, %v243, 0
            %v347 = vsel %vm261, %v244, 0
            %v350 = vsel %vm261, %v245, 0
            %v353 = vsel %vm261, %v246, 0
            %v356 = vsel %vm261, %v247, 0
            %358 = vmatprep.subr.mxu0 0.0
            %359 = vmatpush1.msra.mxu0 0.0
            %360 = vmatprep.subr.mxu0 0.0
            %361 = vmatpush1.msra.mxu0 0.0
            %362 = vmatprep.subr.mxu0 0.0
            %363 = vmatpush1.msra.mxu0 0.0
            %364 = vmatprep.subr.mxu0 0.0
            %365 = vmatpush1.msra.mxu0 0.0
            %366 = vmatprep.subr.mxu0 0.0
            %367 = vmatpush1.msra.mxu0 0.0
            %368 = vmatprep.subr.mxu0 0.0
            %369 = vmatpush1.msra.mxu0 0.0
            %370 = vmatprep.subr.mxu0 0.0
            %371 = vmatpush1.msra.mxu0 0.0
            %372 = vmatprep.subr.mxu0 0.0
            %373 = vmatpush1.msra.mxu0 0.0
            %374 = vmatprep.subr.mxu0 0.0
            %375 = vmatpush1.msra.mxu0 0.0
            %376 = vmatprep.subr.mxu0 0.0
            %377 = vmatpush1.msra.mxu0 0.0
            %378 = vmatprep.subr.mxu0 0.0
            %379 = vmatpush1.msra.mxu0 0.0
            %380 = vmatprep.subr.mxu0 0.0
            %381 = vmatpush1.msra.mxu0 0.0
            %382 = vmatprep.subr.mxu0 0.0
            %383 = vmatpush1.msra.mxu0 0.0
            %384 = vmatprep.subr.mxu0 0.0
            %385 = vmatpush1.msra.mxu0 0.0
            %386 = vmatprep.subr.mxu0 0.0
            %387 = vmatpush1.msra.mxu0 0.0
            %388 = vmatprep.subr.mxu0 %v260
            %389 = vmatpush1.msra.mxu0 %v259
            %390 = vmatprep.subr.mxu0 0.0
            %391 = vmatpush2.msra.mxu0 0.0
            %392 = vmatprep.subr.mxu0 0.0
            %393 = vmatpush2.msra.mxu0 0.0
            %394 = vmatprep.subr.mxu0 0.0
            %395 = vmatpush2.msra.mxu0 0.0
            %396 = vmatprep.subr.mxu0 0.0
            %397 = vmatpush2.msra.mxu0 0.0
            %398 = vmatprep.subr.mxu0 0.0
            %399 = vmatpush2.msra.mxu0 0.0
            %400 = vmatprep.subr.mxu0 0.0
            %401 = vmatpush2.msra.mxu0 0.0
            %402 = vmatprep.subr.mxu0 0.0
            %403 = vmatpush2.msra.mxu0 0.0
            %404 = vmatprep.subr.mxu0 0.0
            %405 = vmatpush2.msra.mxu0 0.0
            %406 = vmatprep.subr.mxu0 0.0
            %407 = vmatpush2.msra.mxu0 0.0
            %408 = vmatprep.subr.mxu0 0.0
            %409 = vmatpush2.msra.mxu0 0.0
            %410 = vmatprep.subr.mxu0 0.0
            %411 = vmatpush2.msra.mxu0 0.0
            %412 = vmatprep.subr.mxu0 0.0
            %413 = vmatpush2.msra.mxu0 0.0
            %414 = vmatprep.subr.mxu0 0.0
            %415 = vmatpush2.msra.mxu0 0.0
            %416 = vmatprep.subr.mxu0 0.0
            %417 = vmatpush2.msra.mxu0 0.0
            %418 = vmatprep.subr.mxu0 0.0
            %419 = vmatpush2.msra.mxu0 0.0
            %420 = vmatprep.subr.mxu0 0.0
            %421 = vmatpush2.msra.mxu0 0.0
            %422 = vmatprep.mubr.f32.mxu0 0.0
            %423 = vmatmul.mubr.f32.gmra.mxu0 %v263
            %v424 = vpop.f32.mrf.mxu0
            %v425 = vadd.f32 0.0, %v424
            %v426 = vpop.f32.mrf.mxu0
            %v427 = vadd.f32 0.0, %v426
            %428 = vmatprep.mubr.f32.mxu0 0.0
            %429 = vmatmul.mubr.f32.gmra.mxu0 %v266
            %v430 = vpop.f32.mrf.mxu0
            %v431 = vadd.f32 0.0, %v430
            %v432 = vpop.f32.mrf.mxu0
            %v433 = vadd.f32 0.0, %v432
            %434 = vmatprep.mubr.f32.mxu0 0.0
            %435 = vmatmul.mubr.f32.gmra.mxu0 %v269
            %v436 = vpop.f32.mrf.mxu0
            %v437 = vadd.f32 0.0, %v436
            %v438 = vpop.f32.mrf.mxu0
            %v439 = vadd.f32 0.0, %v438
            %440 = vmatprep.mubr.f32.mxu0 0.0
            %441 = vmatmul.mubr.f32.gmra.mxu0 %v272
            %v442 = vpop.f32.mrf.mxu0
            %v443 = vadd.f32 0.0, %v442
            %v444 = vpop.f32.mrf.mxu0
            %v445 = vadd.f32 0.0, %v444
            %446 = vmatprep.mubr.f32.mxu0 0.0
            %447 = vmatmul.mubr.f32.gmra.mxu0 %v275
            %v448 = vpop.f32.mrf.mxu0
            %v449 = vadd.f32 0.0, %v448
            %v450 = vpop.f32.mrf.mxu0
            %v451 = vadd.f32 0.0, %v450
            %452 = vmatprep.mubr.f32.mxu0 0.0
            %453 = vmatmul.mubr.f32.gmra.mxu0 %v278
            %v454 = vpop.f32.mrf.mxu0
            %v455 = vadd.f32 0.0, %v454
            %v456 = vpop.f32.mrf.mxu0
            %v457 = vadd.f32 0.0, %v456
            %458 = vmatprep.mubr.f32.mxu0 0.0
            %459 = vmatmul.mubr.f32.gmra.mxu0 %v281
            %v460 = vpop.f32.mrf.mxu0
            %v461 = vadd.f32 0.0, %v460
            %v462 = vpop.f32.mrf.mxu0
            %v463 = vadd.f32 0.0, %v462
            %464 = vmatprep.mubr.f32.mxu0 0.0
            %465 = vmatmul.mubr.f32.gmra.mxu0 %v284
            %v466 = vpop.f32.mrf.mxu0
            %v467 = vadd.f32 0.0, %v466
            %v468 = vpop.f32.mrf.mxu0
            %v469 = vadd.f32 0.0, %v468
            %470 = vmatprep.mubr.f32.mxu0 0.0
            %471 = vmatmul.mubr.f32.gmra.mxu0 %v287
            %v472 = vpop.f32.mrf.mxu0
            %v473 = vadd.f32 0.0, %v472
            %v474 = vpop.f32.mrf.mxu0
            %v475 = vadd.f32 0.0, %v474
            %476 = vmatprep.mubr.f32.mxu0 0.0
            %477 = vmatmul.mubr.f32.gmra.mxu0 %v290
            %v478 = vpop.f32.mrf.mxu0
            %v479 = vadd.f32 0.0, %v478
            %v480 = vpop.f32.mrf.mxu0
            %v481 = vadd.f32 0.0, %v480
            %482 = vmatprep.mubr.f32.mxu0 0.0
            %483 = vmatmul.mubr.f32.gmra.mxu0 %v293
            %v484 = vpop.f32.mrf.mxu0
            %v485 = vadd.f32 0.0, %v484
            %v486 = vpop.f32.mrf.mxu0
            %v487 = vadd.f32 0.0, %v486
            %488 = vmatprep.mubr.f32.mxu0 0.0
            %489 = vmatmul.mubr.f32.gmra.mxu0 %v296
            %v490 = vpop.f32.mrf.mxu0
            %v491 = vadd.f32 0.0, %v490
            %v492 = vpop.f32.mrf.mxu0
            %v493 = vadd.f32 0.0, %v492
            %494 = vmatprep.mubr.f32.mxu0 0.0
            %495 = vmatmul.mubr.f32.gmra.mxu0 %v299
            %v496 = vpop.f32.mrf.mxu0
            %v497 = vadd.f32 0.0, %v496
            %v498 = vpop.f32.mrf.mxu0
            %v499 = vadd.f32 0.0, %v498
            %500 = vmatprep.mubr.f32.mxu0 0.0
            %501 = vmatmul.mubr.f32.gmra.mxu0 %v302
            %v502 = vpop.f32.mrf.mxu0
            %v503 = vadd.f32 0.0, %v502
            %v504 = vpop.f32.mrf.mxu0
            %v505 = vadd.f32 0.0, %v504
            %506 = vmatprep.mubr.f32.mxu0 0.0
            %507 = vmatmul.mubr.f32.gmra.mxu0 %v305
            %v508 = vpop.f32.mrf.mxu0
            %v509 = vadd.f32 0.0, %v508
            %v510 = vpop.f32.mrf.mxu0
            %v511 = vadd.f32 0.0, %v510
            %512 = vmatprep.mubr.f32.mxu0 0.0
            %513 = vmatmul.mubr.f32.gmra.mxu0 %v308
            %v514 = vpop.f32.mrf.mxu0
            %v515 = vadd.f32 0.0, %v514
            %v516 = vpop.f32.mrf.mxu0
            %v517 = vadd.f32 0.0, %v516
            %518 = vmatprep.mubr.f32.mxu0 0.0
            %519 = vmatmul.mubr.f32.gmra.mxu0 %v311
            %v520 = vpop.f32.mrf.mxu0
            %v521 = vadd.f32 0.0, %v520
            %v522 = vpop.f32.mrf.mxu0
            %v523 = vadd.f32 0.0, %v522
            %524 = vmatprep.mubr.f32.mxu0 0.0
            %525 = vmatmul.mubr.f32.gmra.mxu0 %v314
            %v526 = vpop.f32.mrf.mxu0
            %v527 = vadd.f32 0.0, %v526
            %v528 = vpop.f32.mrf.mxu0
            %v529 = vadd.f32 0.0, %v528
            %530 = vmatprep.mubr.f32.mxu0 0.0
            %531 = vmatmul.mubr.f32.gmra.mxu0 %v317
            %v532 = vpop.f32.mrf.mxu0
            %v533 = vadd.f32 0.0, %v532
            %v534 = vpop.f32.mrf.mxu0
            %v535 = vadd.f32 0.0, %v534
            %536 = vmatprep.mubr.f32.mxu0 0.0
            %537 = vmatmul.mubr.f32.gmra.mxu0 %v320
            %v538 = vpop.f32.mrf.mxu0
            %v539 = vadd.f32 0.0, %v538
            %v540 = vpop.f32.mrf.mxu0
            %v541 = vadd.f32 0.0, %v540
            %542 = vmatprep.mubr.f32.mxu0 0.0
            %543 = vmatmul.mubr.f32.gmra.mxu0 %v323
            %v544 = vpop.f32.mrf.mxu0
            %v545 = vadd.f32 0.0, %v544
            %v546 = vpop.f32.mrf.mxu0
            %v547 = vadd.f32 0.0, %v546
            %548 = vmatprep.mubr.f32.mxu0 0.0
            %549 = vmatmul.mubr.f32.gmra.mxu0 %v326
            %v550 = vpop.f32.mrf.mxu0
            %v551 = vadd.f32 0.0, %v550
            %v552 = vpop.f32.mrf.mxu0
            %v553 = vadd.f32 0.0, %v552
            %554 = vmatprep.mubr.f32.mxu0 0.0
            %555 = vmatmul.mubr.f32.gmra.mxu0 %v329
            %v556 = vpop.f32.mrf.mxu0
            %v557 = vadd.f32 0.0, %v556
            %v558 = vpop.f32.mrf.mxu0
            %v559 = vadd.f32 0.0, %v558
            %560 = vmatprep.mubr.f32.mxu0 0.0
            %561 = vmatmul.mubr.f32.gmra.mxu0 %v332
            %v562 = vpop.f32.mrf.mxu0
            %v563 = vadd.f32 0.0, %v562
            %v564 = vpop.f32.mrf.mxu0
            %v565 = vadd.f32 0.0, %v564
            %566 = vmatprep.mubr.f32.mxu0 0.0
            %567 = vmatmul.mubr.f32.gmra.mxu0 %v335
            %v568 = vpop.f32.mrf.mxu0
            %v569 = vadd.f32 0.0, %v568
            %v570 = vpop.f32.mrf.mxu0
            %v571 = vadd.f32 0.0, %v570
            %572 = vmatprep.mubr.f32.mxu0 0.0
            %573 = vmatmul.mubr.f32.gmra.mxu0 %v338
            %v574 = vpop.f32.mrf.mxu0
            %v575 = vadd.f32 0.0, %v574
            %v576 = vpop.f32.mrf.mxu0
            %v577 = vadd.f32 0.0, %v576
            %578 = vmatprep.mubr.f32.mxu0 0.0
            %579 = vmatmul.mubr.f32.gmra.mxu0 %v341
            %v580 = vpop.f32.mrf.mxu0
            %v581 = vadd.f32 0.0, %v580
            %v582 = vpop.f32.mrf.mxu0
            %v583 = vadd.f32 0.0, %v582
            %584 = vmatprep.mubr.f32.mxu0 0.0
            %585 = vmatmul.mubr.f32.gmra.mxu0 %v344
            %v586 = vpop.f32.mrf.mxu0
            %v587 = vadd.f32 0.0, %v586
            %v588 = vpop.f32.mrf.mxu0
            %v589 = vadd.f32 0.0, %v588
            %590 = vmatprep.mubr.f32.mxu0 0.0
            %591 = vmatmul.mubr.f32.gmra.mxu0 %v347
            %v592 = vpop.f32.mrf.mxu0
            %v593 = vadd.f32 0.0, %v592
            %v594 = vpop.f32.mrf.mxu0
            %v595 = vadd.f32 0.0, %v594
            %596 = vmatprep.mubr.f32.mxu0 0.0
            %597 = vmatmul.mubr.f32.gmra.mxu0 %v350
            %v598 = vpop.f32.mrf.mxu0
            %v599 = vadd.f32 0.0, %v598
            %v600 = vpop.f32.mrf.mxu0
            %v601 = vadd.f32 0.0, %v600
            %602 = vmatprep.mubr.f32.mxu0 0.0
            %603 = vmatmul.mubr.f32.gmra.mxu0 %v353
            %v604 = vpop.f32.mrf.mxu0
            %v605 = vadd.f32 0.0, %v604
            %v606 = vpop.f32.mrf.mxu0
            %v607 = vadd.f32 0.0, %v606
            %608 = vmatprep.mubr.f32.mxu0 0.0
            %609 = vmatmul.mubr.f32.gmra.mxu0 %v356
            %v610 = vpop.f32.mrf.mxu0
            %v611 = vadd.f32 0.0, %v610
            %v612 = vpop.f32.mrf.mxu0
            %v613 = vadd.f32 0.0, %v612
            %614 = vdwg.mxu0
            %v615 = vpack.c.bf16 %v431, %v425
            %v616 = vpack.c.bf16 %v433, %v427
            %v617 = vpack.c.bf16 %v443, %v437
            %v618 = vpack.c.bf16 %v445, %v439
            %v619 = vpack.c.bf16 %v455, %v449
            %v620 = vpack.c.bf16 %v457, %v451
            %v621 = vpack.c.bf16 %v467, %v461
            %v622 = vpack.c.bf16 %v469, %v463
            %v623 = vpack.c.bf16 %v479, %v473
            %v624 = vpack.c.bf16 %v481, %v475
            %v625 = vpack.c.bf16 %v491, %v485
            %v626 = vpack.c.bf16 %v493, %v487
            %v627 = vpack.c.bf16 %v503, %v497
            %v628 = vpack.c.bf16 %v505, %v499
            %v629 = vpack.c.bf16 %v515, %v509
            %v630 = vpack.c.bf16 %v517, %v511
            %v631 = vpack.c.bf16 %v527, %v521
            %v632 = vpack.c.bf16 %v529, %v523
            %v633 = vpack.c.bf16 %v539, %v533
            %v634 = vpack.c.bf16 %v541, %v535
            %v635 = vpack.c.bf16 %v551, %v545
            %v636 = vpack.c.bf16 %v553, %v547
            %v637 = vpack.c.bf16 %v563, %v557
            %v638 = vpack.c.bf16 %v565, %v559
            %v639 = vpack.c.bf16 %v575, %v569
            %v640 = vpack.c.bf16 %v577, %v571
            %v641 = vpack.c.bf16 %v587, %v581
            %v642 = vpack.c.bf16 %v589, %v583
            %v643 = vpack.c.bf16 %v599, %v593
            %v644 = vpack.c.bf16 %v601, %v595
            %v645 = vpack.c.bf16 %v611, %v605
            %v646 = vpack.c.bf16 %v613, %v607
            %v679 = vunpack.c.l.b16 %v615
            %v680 = vunpack.c.l.b16 %v616
            %v681 = vunpack.c.h.b16 %v615
            %v682 = vunpack.c.h.b16 %v616
            %v683 = vunpack.c.l.b16 %v617
            %v684 = vunpack.c.l.b16 %v618
            %v685 = vunpack.c.h.b16 %v617
            %v686 = vunpack.c.h.b16 %v618
            %v687 = vunpack.c.l.b16 %v619
            %v688 = vunpack.c.l.b16 %v620
            %v689 = vunpack.c.h.b16 %v619
            %v690 = vunpack.c.h.b16 %v620
            %v691 = vunpack.c.l.b16 %v621
            %v692 = vunpack.c.l.b16 %v622
            %v693 = vunpack.c.h.b16 %v621
            %v694 = vunpack.c.h.b16 %v622
            %v695 = vunpack.c.l.b16 %v623
            %v696 = vunpack.c.l.b16 %v624
            %v697 = vunpack.c.h.b16 %v623
            %v698 = vunpack.c.h.b16 %v624
            %v699 = vunpack.c.l.b16 %v625
            %v700 = vunpack.c.l.b16 %v626
            %v701 = vunpack.c.h.b16 %v625
            %v702 = vunpack.c.h.b16 %v626
            %v703 = vunpack.c.l.b16 %v627
            %v704 = vunpack.c.l.b16 %v628
            %v705 = vunpack.c.h.b16 %v627
            %v706 = vunpack.c.h.b16 %v628
            %v707 = vunpack.c.l.b16 %v629
            %v708 = vunpack.c.l.b16 %v630
            %v709 = vunpack.c.h.b16 %v629
            %v710 = vunpack.c.h.b16 %v630
            %v711 = vunpack.c.l.b16 %v631
            %v712 = vunpack.c.l.b16 %v632
            %v713 = vunpack.c.h.b16 %v631
            %v714 = vunpack.c.h.b16 %v632
            %v715 = vunpack.c.l.b16 %v633
            %v716 = vunpack.c.l.b16 %v634
            %v717 = vunpack.c.h.b16 %v633
            %v718 = vunpack.c.h.b16 %v634
            %v719 = vunpack.c.l.b16 %v635
            %v720 = vunpack.c.l.b16 %v636
            %v721 = vunpack.c.h.b16 %v635
            %v722 = vunpack.c.h.b16 %v636
            %v723 = vunpack.c.l.b16 %v637
            %v724 = vunpack.c.l.b16 %v638
            %v725 = vunpack.c.h.b16 %v637
            %v726 = vunpack.c.h.b16 %v638
            %v727 = vunpack.c.l.b16 %v639
            %v728 = vunpack.c.l.b16 %v640
            %v729 = vunpack.c.h.b16 %v639
            %v730 = vunpack.c.h.b16 %v640
            %v731 = vunpack.c.l.b16 %v641
            %v732 = vunpack.c.l.b16 %v642
            %v733 = vunpack.c.h.b16 %v641
            %v734 = vunpack.c.h.b16 %v642
            %v735 = vunpack.c.l.b16 %v643
            %v736 = vunpack.c.l.b16 %v644
            %v737 = vunpack.c.h.b16 %v643
            %v738 = vunpack.c.h.b16 %v644
            %v739 = vunpack.c.l.b16 %v645
            %v740 = vunpack.c.l.b16 %v646
            %v741 = vunpack.c.h.b16 %v645
            %v742 = vunpack.c.h.b16 %v646
            %v743 = vpack.c.b16 %v680, %v679
            %v744 = vpack.c.b16 %v682, %v681
            %v745 = vpack.c.b16 %v684, %v683
            %v746 = vpack.c.b16 %v686, %v685
            %v747 = vpack.c.b16 %v688, %v687
            %v748 = vpack.c.b16 %v690, %v689
            %v749 = vpack.c.b16 %v692, %v691
            %v750 = vpack.c.b16 %v694, %v693
            %v751 = vpack.c.b16 %v696, %v695
            %v752 = vpack.c.b16 %v698, %v697
            %v753 = vpack.c.b16 %v700, %v699
            %v754 = vpack.c.b16 %v702, %v701
            %v755 = vpack.c.b16 %v704, %v703
            %v756 = vpack.c.b16 %v706, %v705
            %v757 = vpack.c.b16 %v708, %v707
            %v758 = vpack.c.b16 %v710, %v709
            %v759 = vpack.c.b16 %v712, %v711
            %v760 = vpack.c.b16 %v714, %v713
            %v761 = vpack.c.b16 %v716, %v715
            %v762 = vpack.c.b16 %v718, %v717
            %v763 = vpack.c.b16 %v720, %v719
            %v764 = vpack.c.b16 %v722, %v721
            %v765 = vpack.c.b16 %v724, %v723
            %v766 = vpack.c.b16 %v726, %v725
            %v767 = vpack.c.b16 %v728, %v727
            %v768 = vpack.c.b16 %v730, %v729
            %v769 = vpack.c.b16 %v732, %v731
            %v770 = vpack.c.b16 %v734, %v733
            %v771 = vpack.c.b16 %v736, %v735
            %v772 = vpack.c.b16 %v738, %v737
            %v773 = vpack.c.b16 %v740, %v739
            %v774 = vpack.c.b16 %v742, %v741
            %s807 = smul.addr %s255, 4
            %s808 = scalar_lea.vmem [#allocation3], %s807
            %809 = vst [vmem:[%s808] sm:$0xff] %v743
            %810 = vst [vmem:[%s808 + $0x20] sm:$0xff] %v744
            %811 = vst [vmem:[%s808 + $0x40] sm:$0xff] %v745
            %812 = vst [vmem:[%s808 + $0x60] sm:$0xff] %v746
            %813 = vst [vmem:[%s808 + $0x80] sm:$0xff] %v747
            %814 = vst [vmem:[%s808 + $0xa0] sm:$0xff] %v748
            %815 = vst [vmem:[%s808 + $0xc0] sm:$0xff] %v749
            %816 = vst [vmem:[%s808 + $0xe0] sm:$0xff] %v750
            %817 = vst [vmem:[%s808 + $0x100] sm:$0xff] %v751
            %818 = vst [vmem:[%s808 + $0x120] sm:$0xff] %v752
            %819 = vst [vmem:[%s808 + $0x140] sm:$0xff] %v753
            %820 = vst [vmem:[%s808 + $0x160] sm:$0xff] %v754
            %821 = vst [vmem:[%s808 + $0x180] sm:$0xff] %v755
            %822 = vst [vmem:[%s808 + $0x1a0] sm:$0xff] %v756
            %823 = vst [vmem:[%s808 + $0x1c0] sm:$0xff] %v757
            %824 = vst [vmem:[%s808 + $0x1e0] sm:$0xff] %v758
            %825 = vst [vmem:[%s808 + $0x200] sm:$0xff] %v759
            %826 = vst [vmem:[%s808 + $0x220] sm:$0xff] %v760
            %827 = vst [vmem:[%s808 + $0x240] sm:$0xff] %v761
            %828 = vst [vmem:[%s808 + $0x260] sm:$0xff] %v762
            %829 = vst [vmem:[%s808 + $0x280] sm:$0xff] %v763
            %830 = vst [vmem:[%s808 + $0x2a0] sm:$0xff] %v764
            %831 = vst [vmem:[%s808 + $0x2c0] sm:$0xff] %v765
            %832 = vst [vmem:[%s808 + $0x2e0] sm:$0xff] %v766
            %833 = vst [vmem:[%s808 + $0x300] sm:$0xff] %v767
            %834 = vst [vmem:[%s808 + $0x320] sm:$0xff] %v768
            %835 = vst [vmem:[%s808 + $0x340] sm:$0xff] %v769
            %836 = vst [vmem:[%s808 + $0x360] sm:$0xff] %v770
            %837 = vst [vmem:[%s808 + $0x380] sm:$0xff] %v771
            %838 = vst [vmem:[%s808 + $0x3a0] sm:$0xff] %v772
            %839 = vst [vmem:[%s808 + $0x3c0] sm:$0xff] %v773
            %840 = vst [vmem:[%s808 + $0x3e0] sm:$0xff] %v774
          $region45: #{tpu_custom_call.1} parent=39 // loop_footer
            %s253 = sadd.s32 1, %s249
          $region46: #{tpu_custom_call.1} parent=39 // loop_footer_branch
            %248 = sbr.rel target = $region42
          $region47: #{tpu_custom_call.1} parent=39 // loop_exit
            _
        $region40: #{tpu_custom_call.1} parent=35 // pred_fallthru
          _
        %s841 = smul.u32 %s23, 256
        %s842 = sshra.s32 %s841, 7
        %s843 = sand.u32 %s841, 127
        %s844 = smul.addr %s842, 8
        %s845 = scalar_lea.vmem %s209, %s844
        %v846 = vld [vmem:[%s845] sm:$0xff]
        %v847 = vld [vmem:[%s845 + $0x8] sm:$0xff]
        %v848 = vld [vmem:[%s1] sm:$0xff]
        %v849 = vld [vmem:[%s1 + $0x8] sm:$0xff]
        %v850 = vld [vmem:[%s1 + $0x10] sm:$0xff]
        %v851 = vld [vmem:[%s1 + $0x18] sm:$0xff]
        %v852 = vld [vmem:[%s1 + $0x20] sm:$0xff]
        %v853 = vld [vmem:[%s1 + $0x28] sm:$0xff]
        %v854 = vld [vmem:[%s1 + $0x30] sm:$0xff]
        %v855 = vld [vmem:[%s1 + $0x38] sm:$0xff]
        %v856 = vld [vmem:[%s1 + $0x40] sm:$0xff]
        %v857 = vld [vmem:[%s1 + $0x48] sm:$0xff]
        %v858 = vld [vmem:[%s1 + $0x50] sm:$0xff]
        %v859 = vld [vmem:[%s1 + $0x58] sm:$0xff]
        %v860 = vld [vmem:[%s1 + $0x60] sm:$0xff]
        %v861 = vld [vmem:[%s1 + $0x68] sm:$0xff]
        %v862 = vld [vmem:[%s1 + $0x70] sm:$0xff]
        %v863 = vld [vmem:[%s1 + $0x78] sm:$0xff]
        %vm864 = vcmask 64512
        %v866 = vsel %vm864, %v848, 0
        %v869 = vsel %vm864, %v849, 0
        %v872 = vsel %vm864, %v850, 0
        %v875 = vsel %vm864, %v851, 0
        %v878 = vsel %vm864, %v852, 0
        %v881 = vsel %vm864, %v853, 0
        %v884 = vsel %vm864, %v854, 0
        %v887 = vsel %vm864, %v855, 0
        %v890 = vsel %vm864, %v856, 0
        %v893 = vsel %vm864, %v857, 0
        %v896 = vsel %vm864, %v858, 0
        %v899 = vsel %vm864, %v859, 0
        %v902 = vsel %vm864, %v860, 0
        %v905 = vsel %vm864, %v861, 0
        %v908 = vsel %vm864, %v862, 0
        %v911 = vsel %vm864, %v863, 0
        %913 = vmatprep.subr.mxu0 0.0
        %914 = vmatpush1.msra.mxu0 0.0
        %915 = vmatprep.subr.mxu0 0.0
        %916 = vmatpush1.msra.mxu0 0.0
        %917 = vmatprep.subr.mxu0 0.0
        %918 = vmatpush1.msra.mxu0 0.0
        %919 = vmatprep.subr.mxu0 0.0
        %920 = vmatpush1.msra.mxu0 0.0
        %921 = vmatprep.subr.mxu0 0.0
        %922 = vmatpush1.msra.mxu0 0.0
        %923 = vmatprep.subr.mxu0 0.0
        %924 = vmatpush1.msra.mxu0 0.0
        %925 = vmatprep.subr.mxu0 0.0
        %926 = vmatpush1.msra.mxu0 0.0
        %927 = vmatprep.subr.mxu0 0.0
        %928 = vmatpush1.msra.mxu0 0.0
        %929 = vmatprep.subr.mxu0 0.0
        %930 = vmatpush1.msra.mxu0 0.0
        %931 = vmatprep.subr.mxu0 0.0
        %932 = vmatpush1.msra.mxu0 0.0
        %933 = vmatprep.subr.mxu0 0.0
        %934 = vmatpush1.msra.mxu0 0.0
        %935 = vmatprep.subr.mxu0 0.0
        %936 = vmatpush1.msra.mxu0 0.0
        %937 = vmatprep.subr.mxu0 0.0
        %938 = vmatpush1.msra.mxu0 0.0
        %939 = vmatprep.subr.mxu0 0.0
        %940 = vmatpush1.msra.mxu0 0.0
        %941 = vmatprep.subr.mxu0 0.0
        %942 = vmatpush1.msra.mxu0 0.0
        %943 = vmatprep.subr.mxu0 %v847
        %944 = vmatpush1.msra.mxu0 %v846
        %945 = vmatprep.subr.mxu0 0.0
        %946 = vmatpush2.msra.mxu0 0.0
        %947 = vmatprep.subr.mxu0 0.0
        %948 = vmatpush2.msra.mxu0 0.0
        %949 = vmatprep.subr.mxu0 0.0
        %950 = vmatpush2.msra.mxu0 0.0
        %951 = vmatprep.subr.mxu0 0.0
        %952 = vmatpush2.msra.mxu0 0.0
        %953 = vmatprep.subr.mxu0 0.0
        %954 = vmatpush2.msra.mxu0 0.0
        %955 = vmatprep.subr.mxu0 0.0
        %956 = vmatpush2.msra.mxu0 0.0
        %957 = vmatprep.subr.mxu0 0.0
        %958 = vmatpush2.msra.mxu0 0.0
        %959 = vmatprep.subr.mxu0 0.0
        %960 = vmatpush2.msra.mxu0 0.0
        %961 = vmatprep.subr.mxu0 0.0
        %962 = vmatpush2.msra.mxu0 0.0
        %963 = vmatprep.subr.mxu0 0.0
        %964 = vmatpush2.msra.mxu0 0.0
        %965 = vmatprep.subr.mxu0 0.0
        %966 = vmatpush2.msra.mxu0 0.0
        %967 = vmatprep.subr.mxu0 0.0
        %968 = vmatpush2.msra.mxu0 0.0
        %969 = vmatprep.subr.mxu0 0.0
        %970 = vmatpush2.msra.mxu0 0.0
        %971 = vmatprep.subr.mxu0 0.0
        %972 = vmatpush2.msra.mxu0 0.0
        %973 = vmatprep.subr.mxu0 0.0
        %974 = vmatpush2.msra.mxu0 0.0
        %975 = vmatprep.subr.mxu0 0.0
        %976 = vmatpush2.msra.mxu0 0.0
        %977 = vmatprep.mubr.f32.mxu0 0.0
        %978 = vmatmul.mubr.f32.gmra.mxu0 %v866
        %v979 = vpop.f32.mrf.mxu0
        %v980 = vadd.f32 0.0, %v979
        %v981 = vpop.f32.mrf.mxu0
        %v982 = vadd.f32 0.0, %v981
        %983 = vmatprep.mubr.f32.mxu0 0.0
        %984 = vmatmul.mubr.f32.gmra.mxu0 %v869
        %v985 = vpop.f32.mrf.mxu0
        %v986 = vadd.f32 0.0, %v985
        %v987 = vpop.f32.mrf.mxu0
        %v988 = vadd.f32 0.0, %v987
        %989 = vmatprep.mubr.f32.mxu0 0.0
        %990 = vmatmul.mubr.f32.gmra.mxu0 %v872
        %v991 = vpop.f32.mrf.mxu0
        %v992 = vadd.f32 0.0, %v991
        %v993 = vpop.f32.mrf.mxu0
        %v994 = vadd.f32 0.0, %v993
        %995 = vmatprep.mubr.f32.mxu0 0.0
        %996 = vmatmul.mubr.f32.gmra.mxu0 %v875
        %v997 = vpop.f32.mrf.mxu0
        %v998 = vadd.f32 0.0, %v997
        %v999 = vpop.f32.mrf.mxu0
        %v1000 = vadd.f32 0.0, %v999
        %1001 = vmatprep.mubr.f32.mxu0 0.0
        %1002 = vmatmul.mubr.f32.gmra.mxu0 %v878
        %v1003 = vpop.f32.mrf.mxu0
        %v1004 = vadd.f32 0.0, %v1003
        %v1005 = vpop.f32.mrf.mxu0
        %v1006 = vadd.f32 0.0, %v1005
        %1007 = vmatprep.mubr.f32.mxu0 0.0
        %1008 = vmatmul.mubr.f32.gmra.mxu0 %v881
        %v1009 = vpop.f32.mrf.mxu0
        %v1010 = vadd.f32 0.0, %v1009
        %v1011 = vpop.f32.mrf.mxu0
        %v1012 = vadd.f32 0.0, %v1011
        %1013 = vmatprep.mubr.f32.mxu0 0.0
        %1014 = vmatmul.mubr.f32.gmra.mxu0 %v884
        %v1015 = vpop.f32.mrf.mxu0
        %v1016 = vadd.f32 0.0, %v1015
        %v1017 = vpop.f32.mrf.mxu0
        %v1018 = vadd.f32 0.0, %v1017
        %1019 = vmatprep.mubr.f32.mxu0 0.0
        %1020 = vmatmul.mubr.f32.gmra.mxu0 %v887
        %v1021 = vpop.f32.mrf.mxu0
        %v1022 = vadd.f32 0.0, %v1021
        %v1023 = vpop.f32.mrf.mxu0
        %v1024 = vadd.f32 0.0, %v1023
        %1025 = vmatprep.mubr.f32.mxu0 0.0
        %1026 = vmatmul.mubr.f32.gmra.mxu0 %v890
        %v1027 = vpop.f32.mrf.mxu0
        %v1028 = vadd.f32 0.0, %v1027
        %v1029 = vpop.f32.mrf.mxu0
        %v1030 = vadd.f32 0.0, %v1029
        %1031 = vmatprep.mubr.f32.mxu0 0.0
        %1032 = vmatmul.mubr.f32.gmra.mxu0 %v893
        %v1033 = vpop.f32.mrf.mxu0
        %v1034 = vadd.f32 0.0, %v1033
        %v1035 = vpop.f32.mrf.mxu0
        %v1036 = vadd.f32 0.0, %v1035
        %1037 = vmatprep.mubr.f32.mxu0 0.0
        %1038 = vmatmul.mubr.f32.gmra.mxu0 %v896
        %v1039 = vpop.f32.mrf.mxu0
        %v1040 = vadd.f32 0.0, %v1039
        %v1041 = vpop.f32.mrf.mxu0
        %v1042 = vadd.f32 0.0, %v1041
        %1043 = vmatprep.mubr.f32.mxu0 0.0
        %1044 = vmatmul.mubr.f32.gmra.mxu0 %v899
        %v1045 = vpop.f32.mrf.mxu0
        %v1046 = vadd.f32 0.0, %v1045
        %v1047 = vpop.f32.mrf.mxu0
        %v1048 = vadd.f32 0.0, %v1047
        %1049 = vmatprep.mubr.f32.mxu0 0.0
        %1050 = vmatmul.mubr.f32.gmra.mxu0 %v902
        %v1051 = vpop.f32.mrf.mxu0
        %v1052 = vadd.f32 0.0, %v1051
        %v1053 = vpop.f32.mrf.mxu0
        %v1054 = vadd.f32 0.0, %v1053
        %1055 = vmatprep.mubr.f32.mxu0 0.0
        %1056 = vmatmul.mubr.f32.gmra.mxu0 %v905
        %v1057 = vpop.f32.mrf.mxu0
        %v1058 = vadd.f32 0.0, %v1057
        %v1059 = vpop.f32.mrf.mxu0
        %v1060 = vadd.f32 0.0, %v1059
        %1061 = vmatprep.mubr.f32.mxu0 0.0
        %1062 = vmatmul.mubr.f32.gmra.mxu0 %v908
        %v1063 = vpop.f32.mrf.mxu0
        %v1064 = vadd.f32 0.0, %v1063
        %v1065 = vpop.f32.mrf.mxu0
        %v1066 = vadd.f32 0.0, %v1065
        %1067 = vmatprep.mubr.f32.mxu0 0.0
        %1068 = vmatmul.mubr.f32.gmra.mxu0 %v911
        %v1069 = vpop.f32.mrf.mxu0
        %v1070 = vadd.f32 0.0, %v1069
        %v1071 = vpop.f32.mrf.mxu0
        %v1072 = vadd.f32 0.0, %v1071
        %1073 = vdwg.mxu0
        %v1074 = vmul.f32 %v980, 0.17677669
        %v1075 = vmul.f32 %v982, 0.17677669
        %v1076 = vmul.f32 %v986, 0.17677669
        %v1077 = vmul.f32 %v988, 0.17677669
        %v1078 = vmul.f32 %v992, 0.17677669
        %v1079 = vmul.f32 %v994, 0.17677669
        %v1080 = vmul.f32 %v998, 0.17677669
        %v1081 = vmul.f32 %v1000, 0.17677669
        %v1082 = vmul.f32 %v1004, 0.17677669
        %v1083 = vmul.f32 %v1006, 0.17677669
        %v1084 = vmul.f32 %v1010, 0.17677669
        %v1085 = vmul.f32 %v1012, 0.17677669
        %v1086 = vmul.f32 %v1016, 0.17677669
        %v1087 = vmul.f32 %v1018, 0.17677669
        %v1088 = vmul.f32 %v1022, 0.17677669
        %v1089 = vmul.f32 %v1024, 0.17677669
        %v1090 = vmul.f32 %v1028, 0.17677669
        %v1091 = vmul.f32 %v1030, 0.17677669
        %v1092 = vmul.f32 %v1034, 0.17677669
        %v1093 = vmul.f32 %v1036, 0.17677669
        %v1094 = vmul.f32 %v1040, 0.17677669
        %v1095 = vmul.f32 %v1042, 0.17677669
        %v1096 = vmul.f32 %v1046, 0.17677669
        %v1097 = vmul.f32 %v1048, 0.17677669
        %v1098 = vmul.f32 %v1052, 0.17677669
        %v1099 = vmul.f32 %v1054, 0.17677669
        %v1100 = vmul.f32 %v1058, 0.17677669
        %v1101 = vmul.f32 %v1060, 0.17677669
        %v1102 = vmul.f32 %v1064, 0.17677669
        %v1103 = vmul.f32 %v1066, 0.17677669
        %v1104 = vmul.f32 %v1070, 0.17677669
        %v1105 = vmul.f32 %v1072, 0.17677669
        %v1106 = vpack.c.bf16 %v1076, %v1074
        %v1107 = vpack.c.bf16 %v1077, %v1075
        %v1108 = vpack.c.bf16 %v1080, %v1078
        %v1109 = vpack.c.bf16 %v1081, %v1079
        %v1110 = vpack.c.bf16 %v1084, %v1082
        %v1111 = vpack.c.bf16 %v1085, %v1083
        %v1112 = vpack.c.bf16 %v1088, %v1086
        %v1113 = vpack.c.bf16 %v1089, %v1087
        %v1114 = vpack.c.bf16 %v1092, %v1090
        %v1115 = vpack.c.bf16 %v1093, %v1091
        %v1116 = vpack.c.bf16 %v1096, %v1094
        %v1117 = vpack.c.bf16 %v1097, %v1095
        %v1118 = vpack.c.bf16 %v1100, %v1098
        %v1119 = vpack.c.bf16 %v1101, %v1099
        %v1120 = vpack.c.bf16 %v1104, %v1102
        %v1121 = vpack.c.bf16 %v1105, %v1103
        %v1138 = vunpack.c.l.b16 %v1106
        %v1139 = vunpack.c.l.b16 %v1107
        %v1140 = vunpack.c.h.b16 %v1106
        %v1141 = vunpack.c.h.b16 %v1107
        %v1142 = vunpack.c.l.b16 %v1108
        %v1143 = vunpack.c.l.b16 %v1109
        %v1144 = vunpack.c.h.b16 %v1108
        %v1145 = vunpack.c.h.b16 %v1109
        %v1146 = vunpack.c.l.b16 %v1110
        %v1147 = vunpack.c.l.b16 %v1111
        %v1148 = vunpack.c.h.b16 %v1110
        %v1149 = vunpack.c.h.b16 %v1111
        %v1150 = vunpack.c.l.b16 %v1112
        %v1151 = vunpack.c.l.b16 %v1113
        %v1152 = vunpack.c.h.b16 %v1112
        %v1153 = vunpack.c.h.b16 %v1113
        %v1154 = vunpack.c.l.b16 %v1114
        %v1155 = vunpack.c.l.b16 %v1115
        %v1156 = vunpack.c.h.b16 %v1114
        %v1157 = vunpack.c.h.b16 %v1115
        %v1158 = vunpack.c.l.b16 %v1116
        %v1159 = vunpack.c.l.b16 %v1117
        %v1160 = vunpack.c.h.b16 %v1116
        %v1161 = vunpack.c.h.b16 %v1117
        %v1162 = vunpack.c.l.b16 %v1118
        %v1163 = vunpack.c.l.b16 %v1119
        %v1164 = vunpack.c.h.b16 %v1118
        %v1165 = vunpack.c.h.b16 %v1119
        %v1166 = vunpack.c.l.b16 %v1120
        %v1167 = vunpack.c.l.b16 %v1121
        %v1168 = vunpack.c.h.b16 %v1120
        %v1169 = vunpack.c.h.b16 %v1121
        %v1170 = vpack.c.b16 %v1139, %v1138
        %v1171 = vpack.c.b16 %v1141, %v1140
        %v1172 = vpack.c.b16 %v1143, %v1142
        %v1173 = vpack.c.b16 %v1145, %v1144
        %v1174 = vpack.c.b16 %v1147, %v1146
        %v1175 = vpack.c.b16 %v1149, %v1148
        %v1176 = vpack.c.b16 %v1151, %v1150
        %v1177 = vpack.c.b16 %v1153, %v1152
        %v1178 = vpack.c.b16 %v1155, %v1154
        %v1179 = vpack.c.b16 %v1157, %v1156
        %v1180 = vpack.c.b16 %v1159, %v1158
        %v1181 = vpack.c.b16 %v1161, %v1160
        %v1182 = vpack.c.b16 %v1163, %v1162
        %v1183 = vpack.c.b16 %v1165, %v1164
        %v1184 = vpack.c.b16 %v1167, %v1166
        %v1185 = vpack.c.b16 %v1169, %v1168
        %1202 = vst [vmem:[#allocation2] sm:$0xff] %v1170
        %1203 = vst [vmem:[#allocation2 + $0x8] sm:$0xff] %v1171
        %1204 = vst [vmem:[#allocation2 + $0x10] sm:$0xff] %v1172
        %1205 = vst [vmem:[#allocation2 + $0x18] sm:$0xff] %v1173
        %1206 = vst [vmem:[#allocation2 + $0x20] sm:$0xff] %v1174
        %1207 = vst [vmem:[#allocation2 + $0x28] sm:$0xff] %v1175
        %1208 = vst [vmem:[#allocation2 + $0x30] sm:$0xff] %v1176
        %1209 = vst [vmem:[#allocation2 + $0x38] sm:$0xff] %v1177
        %1210 = vst [vmem:[#allocation2 + $0x40] sm:$0xff] %v1178
        %1211 = vst [vmem:[#allocation2 + $0x48] sm:$0xff] %v1179
        %1212 = vst [vmem:[#allocation2 + $0x50] sm:$0xff] %v1180
        %1213 = vst [vmem:[#allocation2 + $0x58] sm:$0xff] %v1181
        %1214 = vst [vmem:[#allocation2 + $0x60] sm:$0xff] %v1182
        %1215 = vst [vmem:[#allocation2 + $0x68] sm:$0xff] %v1183
        %1216 = vst [vmem:[#allocation2 + $0x70] sm:$0xff] %v1184
        %1217 = vst [vmem:[#allocation2 + $0x78] sm:$0xff] %v1185
        %v1218 = vld [vmem:[#allocation2] sm:$0xff]
        %v1219 = vld [vmem:[#allocation2 + $0x8] sm:$0xff]
        %v1220 = vld [vmem:[#allocation2 + $0x10] sm:$0xff]
        %v1221 = vld [vmem:[#allocation2 + $0x18] sm:$0xff]
        loop: start=0, step=1, limit=4
        $region48: #{tpu_custom_call.1} parent=35 // loop_pre_header
          _
        $region49: #{tpu_custom_call.1} parent=35 // loop_header
          %s1223 = sphi 0, %s1227
          %p1224 = scmp.ge.s32.totalorder %s1223, 4
          %v1228 = vphi -inf, %v1641
          %v1229 = vphi -inf, %v1642
          %v1230 = vphi 0.0, %v1917
          %v1231 = vphi 0.0, %v1918
          %v1232 = vphi 0.0, %v2032
          %v1233 = vphi 0.0, %v2033
          %v1234 = vphi 0.0, %v2034
          %v1235 = vphi 0.0, %v2035
          %v1236 = vphi 0.0, %v2036
          %v1237 = vphi 0.0, %v2037
          %v1238 = vphi 0.0, %v2038
          %v1239 = vphi 0.0, %v2039
        $region50: #{tpu_custom_call.1} parent=35 // loop_header_branch
          %1226 = sbr.rel (%p1224) target = $region54
        $region51: #{tpu_custom_call.1} parent=35 // loop_body
          %s1240 = smul.u32 %s1223, 256
          %s1241 = sshra.s32 %s1240, 7
          %s1242 = sand.u32 %s1240, 127
          %s1243 = smul.addr %s1241, 4
          %s1244 = scalar_lea.vmem [#allocation3], %s1243
          %v1245 = vld [vmem:[%s1244] sm:$0xff]
          %v1246 = vld [vmem:[%s1244 + $0x20] sm:$0xff]
          %v1247 = vld [vmem:[%s1244 + $0x40] sm:$0xff]
          %v1248 = vld [vmem:[%s1244 + $0x60] sm:$0xff]
          %v1249 = vld [vmem:[%s1244 + $0x200] sm:$0xff]
          %v1250 = vld [vmem:[%s1244 + $0x220] sm:$0xff]
          %v1251 = vld [vmem:[%s1244 + $0x240] sm:$0xff]
          %v1252 = vld [vmem:[%s1244 + $0x260] sm:$0xff]
          %v1257 = vunpack.c.l.b16 %v1245
          %v1258 = vunpack.c.h.b16 %v1245
          %v1259 = vunpack.c.l.b16 %v1246
          %v1260 = vunpack.c.h.b16 %v1246
          %v1261 = vunpack.c.l.b16 %v1247
          %v1262 = vunpack.c.h.b16 %v1247
          %v1263 = vunpack.c.l.b16 %v1248
          %v1264 = vunpack.c.h.b16 %v1248
          %v1265 = vpack.c.b16 %v1259, %v1257
          %v1266 = vpack.c.b16 %v1260, %v1258
          %v1267 = vpack.c.b16 %v1263, %v1261
          %v1268 = vpack.c.b16 %v1264, %v1262
          %1273 = vxpose.xlu0.c.b16.start [1/8] %v1265, 128
          %1274 = vxpose.xlu0.c.b16.cont [2/8] %v1267, 128
          %1275 = vxpose.xlu0.c.b16.cont [3/8] 0, 128
          %1276 = vxpose.xlu0.c.b16.cont [4/8] 0, 128
          %1277 = vxpose.xlu0.c.b16.cont [5/8] 0, 128
          %1278 = vxpose.xlu0.c.b16.cont [6/8] 0, 128
          %1279 = vxpose.xlu0.c.b16.cont [7/8] 0, 128
          %1280 = vxpose.xlu0.c.b16.end [8/8] 0, 128
          %v1281 = vpop.trf.xlu0
          %v1282 = vpop.trf.xlu0
          %v1283 = vpop.trf.xlu0
          %v1284 = vpop.trf.xlu0
          %v1285 = vpop.trf.xlu0
          %v1286 = vpop.trf.xlu0
          %v1287 = vpop.trf.xlu0
          %v1288 = vpop.trf.xlu0
          %1289 = vxpose.xlu0.c.b16.start [1/8] %v1266, 128
          %1290 = vxpose.xlu0.c.b16.cont [2/8] %v1268, 128
          %1291 = vxpose.xlu0.c.b16.cont [3/8] 0, 128
          %1292 = vxpose.xlu0.c.b16.cont [4/8] 0, 128
          %1293 = vxpose.xlu0.c.b16.cont [5/8] 0, 128
          %1294 = vxpose.xlu0.c.b16.cont [6/8] 0, 128
          %1295 = vxpose.xlu0.c.b16.cont [7/8] 0, 128
          %1296 = vxpose.xlu0.c.b16.end [8/8] 0, 128
          %v1297 = vpop.trf.xlu0
          %v1298 = vpop.trf.xlu0
          %v1299 = vpop.trf.xlu0
          %v1300 = vpop.trf.xlu0
          %v1301 = vpop.trf.xlu0
          %v1302 = vpop.trf.xlu0
          %v1303 = vpop.trf.xlu0
          %v1304 = vpop.trf.xlu0
          %v1309 = vunpack.c.l.b16 %v1218
          %v1310 = vunpack.c.h.b16 %v1218
          %v1311 = vunpack.c.l.b16 %v1219
          %v1312 = vunpack.c.h.b16 %v1219
          %v1313 = vunpack.c.l.b16 %v1220
          %v1314 = vunpack.c.h.b16 %v1220
          %v1315 = vunpack.c.l.b16 %v1221
          %v1316 = vunpack.c.h.b16 %v1221
          %v1317 = vpack.c.b16 %v1311, %v1309
          %v1318 = vpack.c.b16 %v1312, %v1310
          %v1319 = vpack.c.b16 %v1315, %v1313
          %v1320 = vpack.c.b16 %v1316, %v1314
          %vm1325 = vcmask 261120
          %v1327 = vsel %vm1325, %v1281, 0
          %v1330 = vsel %vm1325, %v1282, 0
          %v1333 = vsel %vm1325, %v1283, 0
          %v1336 = vsel %vm1325, %v1284, 0
          %v1339 = vsel %vm1325, %v1285, 0
          %v1342 = vsel %vm1325, %v1286, 0
          %v1345 = vsel %vm1325, %v1287, 0
          %v1348 = vsel %vm1325, %v1288, 0
          %v1351 = vsel %vm1325, %v1297, 0
          %v1354 = vsel %vm1325, %v1298, 0
          %v1357 = vsel %vm1325, %v1299, 0
          %v1360 = vsel %vm1325, %v1300, 0
          %v1363 = vsel %vm1325, %v1301, 0
          %v1366 = vsel %vm1325, %v1302, 0
          %v1369 = vsel %vm1325, %v1303, 0
          %v1372 = vsel %vm1325, %v1304, 0
          %1374 = vmatprep.subr.bf16.mxu0 0
          %1375 = vmatpush1.bf16.msra.mxu0 0
          %1376 = vmatprep.subr.bf16.mxu0 0
          %1377 = vmatpush1.bf16.msra.mxu0 0
          %1378 = vmatprep.subr.bf16.mxu0 0
          %1379 = vmatpush1.bf16.msra.mxu0 0
          %1380 = vmatprep.subr.bf16.mxu0 0
          %1381 = vmatpush1.bf16.msra.mxu0 0
          %1382 = vmatprep.subr.bf16.mxu0 0
          %1383 = vmatpush1.bf16.msra.mxu0 0
          %1384 = vmatprep.subr.bf16.mxu0 0
          %1385 = vmatpush1.bf16.msra.mxu0 0
          %1386 = vmatprep.subr.bf16.mxu0 %v1320
          %1387 = vmatpush1.bf16.msra.mxu0 %v1319
          %1388 = vmatprep.subr.bf16.mxu0 %v1318
          %1389 = vmatpush1.bf16.msra.mxu0 %v1317
          %1390 = vmatprep.subr.bf16.mxu0 0
          %1391 = vmatpush2.bf16.msra.mxu0 0
          %1392 = vmatprep.subr.bf16.mxu0 0
          %1393 = vmatpush2.bf16.msra.mxu0 0
          %1394 = vmatprep.subr.bf16.mxu0 0
          %1395 = vmatpush2.bf16.msra.mxu0 0
          %1396 = vmatprep.subr.bf16.mxu0 0
          %1397 = vmatpush2.bf16.msra.mxu0 0
          %1398 = vmatprep.subr.bf16.mxu0 0
          %1399 = vmatpush2.bf16.msra.mxu0 0
          %1400 = vmatprep.subr.bf16.mxu0 0
          %1401 = vmatpush2.bf16.msra.mxu0 0
          %1402 = vmatprep.subr.bf16.mxu0 0
          %1403 = vmatpush2.bf16.msra.mxu0 0
          %1404 = vmatprep.subr.bf16.mxu0 0
          %1405 = vmatpush2.bf16.msra.mxu0 0
          %1406 = vmatprep.mubr.bf16.mxu0 0
          %1407 = vmatmul.mubr.bf16.gmra.mxu0 %v1327
          %v1408 = vpop.f32.mrf.mxu0
          %v1409 = vadd.f32 0.0, %v1408
          %v1410 = vpop.f32.mrf.mxu0
          %v1411 = vadd.f32 0.0, %v1410
          %v1412 = vpop.f32.mrf.mxu0
          %v1413 = vadd.f32 0.0, %v1412
          %v1414 = vpop.f32.mrf.mxu0
          %v1415 = vadd.f32 0.0, %v1414
          %1416 = vmatprep.mubr.bf16.mxu0 0
          %1417 = vmatmul.mubr.bf16.gmra.mxu0 %v1330
          %v1418 = vpop.f32.mrf.mxu0
          %v1419 = vadd.f32 0.0, %v1418
          %v1420 = vpop.f32.mrf.mxu0
          %v1421 = vadd.f32 0.0, %v1420
          %v1422 = vpop.f32.mrf.mxu0
          %v1423 = vadd.f32 0.0, %v1422
          %v1424 = vpop.f32.mrf.mxu0
          %v1425 = vadd.f32 0.0, %v1424
          %1426 = vmatprep.mubr.bf16.mxu0 0
          %1427 = vmatmul.mubr.bf16.gmra.mxu0 %v1333
          %v1428 = vpop.f32.mrf.mxu0
          %v1429 = vadd.f32 0.0, %v1428
          %v1430 = vpop.f32.mrf.mxu0
          %v1431 = vadd.f32 0.0, %v1430
          %v1432 = vpop.f32.mrf.mxu0
          %v1433 = vadd.f32 0.0, %v1432
          %v1434 = vpop.f32.mrf.mxu0
          %v1435 = vadd.f32 0.0, %v1434
          %1436 = vmatprep.mubr.bf16.mxu0 0
          %1437 = vmatmul.mubr.bf16.gmra.mxu0 %v1336
          %v1438 = vpop.f32.mrf.mxu0
          %v1439 = vadd.f32 0.0, %v1438
          %v1440 = vpop.f32.mrf.mxu0
          %v1441 = vadd.f32 0.0, %v1440
          %v1442 = vpop.f32.mrf.mxu0
          %v1443 = vadd.f32 0.0, %v1442
          %v1444 = vpop.f32.mrf.mxu0
          %v1445 = vadd.f32 0.0, %v1444
          %1446 = vmatprep.mubr.bf16.mxu0 0
          %1447 = vmatmul.mubr.bf16.gmra.mxu0 %v1339
          %v1448 = vpop.f32.mrf.mxu0
          %v1449 = vadd.f32 0.0, %v1448
          %v1450 = vpop.f32.mrf.mxu0
          %v1451 = vadd.f32 0.0, %v1450
          %v1452 = vpop.f32.mrf.mxu0
          %v1453 = vadd.f32 0.0, %v1452
          %v1454 = vpop.f32.mrf.mxu0
          %v1455 = vadd.f32 0.0, %v1454
          %1456 = vmatprep.mubr.bf16.mxu0 0
          %1457 = vmatmul.mubr.bf16.gmra.mxu0 %v1342
          %v1458 = vpop.f32.mrf.mxu0
          %v1459 = vadd.f32 0.0, %v1458
          %v1460 = vpop.f32.mrf.mxu0
          %v1461 = vadd.f32 0.0, %v1460
          %v1462 = vpop.f32.mrf.mxu0
          %v1463 = vadd.f32 0.0, %v1462
          %v1464 = vpop.f32.mrf.mxu0
          %v1465 = vadd.f32 0.0, %v1464
          %1466 = vmatprep.mubr.bf16.mxu0 0
          %1467 = vmatmul.mubr.bf16.gmra.mxu0 %v1345
          %v1468 = vpop.f32.mrf.mxu0
          %v1469 = vadd.f32 0.0, %v1468
          %v1470 = vpop.f32.mrf.mxu0
          %v1471 = vadd.f32 0.0, %v1470
          %v1472 = vpop.f32.mrf.mxu0
          %v1473 = vadd.f32 0.0, %v1472
          %v1474 = vpop.f32.mrf.mxu0
          %v1475 = vadd.f32 0.0, %v1474
          %1476 = vmatprep.mubr.bf16.mxu0 0
          %1477 = vmatmul.mubr.bf16.gmra.mxu0 %v1348
          %v1478 = vpop.f32.mrf.mxu0
          %v1479 = vadd.f32 0.0, %v1478
          %v1480 = vpop.f32.mrf.mxu0
          %v1481 = vadd.f32 0.0, %v1480
          %v1482 = vpop.f32.mrf.mxu0
          %v1483 = vadd.f32 0.0, %v1482
          %v1484 = vpop.f32.mrf.mxu0
          %v1485 = vadd.f32 0.0, %v1484
          %1486 = vmatprep.mubr.bf16.mxu0 0
          %1487 = vmatmul.mubr.bf16.gmra.mxu0 %v1351
          %v1488 = vpop.f32.mrf.mxu0
          %v1489 = vadd.f32 0.0, %v1488
          %v1490 = vpop.f32.mrf.mxu0
          %v1491 = vadd.f32 0.0, %v1490
          %v1492 = vpop.f32.mrf.mxu0
          %v1493 = vadd.f32 0.0, %v1492
          %v1494 = vpop.f32.mrf.mxu0
          %v1495 = vadd.f32 0.0, %v1494
          %1496 = vmatprep.mubr.bf16.mxu0 0
          %1497 = vmatmul.mubr.bf16.gmra.mxu0 %v1354
          %v1498 = vpop.f32.mrf.mxu0
          %v1499 = vadd.f32 0.0, %v1498
          %v1500 = vpop.f32.mrf.mxu0
          %v1501 = vadd.f32 0.0, %v1500
          %v1502 = vpop.f32.mrf.mxu0
          %v1503 = vadd.f32 0.0, %v1502
          %v1504 = vpop.f32.mrf.mxu0
          %v1505 = vadd.f32 0.0, %v1504
          %1506 = vmatprep.mubr.bf16.mxu0 0
          %1507 = vmatmul.mubr.bf16.gmra.mxu0 %v1357
          %v1508 = vpop.f32.mrf.mxu0
          %v1509 = vadd.f32 0.0, %v1508
          %v1510 = vpop.f32.mrf.mxu0
          %v1511 = vadd.f32 0.0, %v1510
          %v1512 = vpop.f32.mrf.mxu0
          %v1513 = vadd.f32 0.0, %v1512
          %v1514 = vpop.f32.mrf.mxu0
          %v1515 = vadd.f32 0.0, %v1514
          %1516 = vmatprep.mubr.bf16.mxu0 0
          %1517 = vmatmul.mubr.bf16.gmra.mxu0 %v1360
          %v1518 = vpop.f32.mrf.mxu0
          %v1519 = vadd.f32 0.0, %v1518
          %v1520 = vpop.f32.mrf.mxu0
          %v1521 = vadd.f32 0.0, %v1520
          %v1522 = vpop.f32.mrf.mxu0
          %v1523 = vadd.f32 0.0, %v1522
          %v1524 = vpop.f32.mrf.mxu0
          %v1525 = vadd.f32 0.0, %v1524
          %1526 = vmatprep.mubr.bf16.mxu0 0
          %1527 = vmatmul.mubr.bf16.gmra.mxu0 %v1363
          %v1528 = vpop.f32.mrf.mxu0
          %v1529 = vadd.f32 0.0, %v1528
          %v1530 = vpop.f32.mrf.mxu0
          %v1531 = vadd.f32 0.0, %v1530
          %v1532 = vpop.f32.mrf.mxu0
          %v1533 = vadd.f32 0.0, %v1532
          %v1534 = vpop.f32.mrf.mxu0
          %v1535 = vadd.f32 0.0, %v1534
          %1536 = vmatprep.mubr.bf16.mxu0 0
          %1537 = vmatmul.mubr.bf16.gmra.mxu0 %v1366
          %v1538 = vpop.f32.mrf.mxu0
          %v1539 = vadd.f32 0.0, %v1538
          %v1540 = vpop.f32.mrf.mxu0
          %v1541 = vadd.f32 0.0, %v1540
          %v1542 = vpop.f32.mrf.mxu0
          %v1543 = vadd.f32 0.0, %v1542
          %v1544 = vpop.f32.mrf.mxu0
          %v1545 = vadd.f32 0.0, %v1544
          %1546 = vmatprep.mubr.bf16.mxu0 0
          %1547 = vmatmul.mubr.bf16.gmra.mxu0 %v1369
          %v1548 = vpop.f32.mrf.mxu0
          %v1549 = vadd.f32 0.0, %v1548
          %v1550 = vpop.f32.mrf.mxu0
          %v1551 = vadd.f32 0.0, %v1550
          %v1552 = vpop.f32.mrf.mxu0
          %v1553 = vadd.f32 0.0, %v1552
          %v1554 = vpop.f32.mrf.mxu0
          %v1555 = vadd.f32 0.0, %v1554
          %1556 = vmatprep.mubr.bf16.mxu0 0
          %1557 = vmatmul.mubr.bf16.gmra.mxu0 %v1372
          %v1558 = vpop.f32.mrf.mxu0
          %v1559 = vadd.f32 0.0, %v1558
          %v1560 = vpop.f32.mrf.mxu0
          %v1561 = vadd.f32 0.0, %v1560
          %v1562 = vpop.f32.mrf.mxu0
          %v1563 = vadd.f32 0.0, %v1562
          %v1564 = vpop.f32.mrf.mxu0
          %v1565 = vadd.f32 0.0, %v1564
          %1566 = vdwg.mxu0
          %v1567 = vmax.f32 %v1409, %v1419
          %v1568 = vmax.f32 %v1413, %v1423
          %v1569 = vmax.f32 %v1567, %v1429
          %v1570 = vmax.f32 %v1568, %v1433
          %v1571 = vmax.f32 %v1569, %v1439
          %v1572 = vmax.f32 %v1570, %v1443
          %v1573 = vmax.f32 %v1571, %v1449
          %v1574 = vmax.f32 %v1572, %v1453
          %v1575 = vmax.f32 %v1573, %v1459
          %v1576 = vmax.f32 %v1574, %v1463
          %v1577 = vmax.f32 %v1575, %v1469
          %v1578 = vmax.f32 %v1576, %v1473
          %v1579 = vmax.f32 %v1577, %v1479
          %v1580 = vmax.f32 %v1578, %v1483
          %v1581 = vmax.f32 %v1579, %v1489
          %v1582 = vmax.f32 %v1580, %v1493
          %v1583 = vmax.f32 %v1581, %v1499
          %v1584 = vmax.f32 %v1582, %v1503
          %v1585 = vmax.f32 %v1583, %v1509
          %v1586 = vmax.f32 %v1584, %v1513
          %v1587 = vmax.f32 %v1585, %v1519
          %v1588 = vmax.f32 %v1586, %v1523
          %v1589 = vmax.f32 %v1587, %v1529
          %v1590 = vmax.f32 %v1588, %v1533
          %v1591 = vmax.f32 %v1589, %v1539
          %v1592 = vmax.f32 %v1590, %v1543
          %v1593 = vmax.f32 %v1591, %v1549
          %v1594 = vmax.f32 %v1592, %v1553
          %v1595 = vmax.f32 %v1593, %v1559
          %v1596 = vmax.f32 %v1594, %v1563
          %v1597 = vmax.f32 %v1595, %v1596
          %v1598 = vrot.slane %v1597, 4
          %v1599 = vmax.f32 %v1597, %v1598
          %v1600 = vrot.slane %v1599, 2
          %v1601 = vmax.f32 %v1599, %v1600
          %v1602 = vrot.slane %v1601, 1
          %v1603 = vmax.f32 %v1601, %v1602
          %v1604 = vmax.f32 %v1411, %v1421
          %v1605 = vmax.f32 %v1415, %v1425
          %v1606 = vmax.f32 %v1604, %v1431
          %v1607 = vmax.f32 %v1605, %v1435
          %v1608 = vmax.f32 %v1606, %v1441
          %v1609 = vmax.f32 %v1607, %v1445
          %v1610 = vmax.f32 %v1608, %v1451
          %v1611 = vmax.f32 %v1609, %v1455
          %v1612 = vmax.f32 %v1610, %v1461
          %v1613 = vmax.f32 %v1611, %v1465
          %v1614 = vmax.f32 %v1612, %v1471
          %v1615 = vmax.f32 %v1613, %v1475
          %v1616 = vmax.f32 %v1614, %v1481
          %v1617 = vmax.f32 %v1615, %v1485
          %v1618 = vmax.f32 %v1616, %v1491
          %v1619 = vmax.f32 %v1617, %v1495
          %v1620 = vmax.f32 %v1618, %v1501
          %v1621 = vmax.f32 %v1619, %v1505
          %v1622 = vmax.f32 %v1620, %v1511
          %v1623 = vmax.f32 %v1621, %v1515
          %v1624 = vmax.f32 %v1622, %v1521
          %v1625 = vmax.f32 %v1623, %v1525
          %v1626 = vmax.f32 %v1624, %v1531
          %v1627 = vmax.f32 %v1625, %v1535
          %v1628 = vmax.f32 %v1626, %v1541
          %v1629 = vmax.f32 %v1627, %v1545
          %v1630 = vmax.f32 %v1628, %v1551
          %v1631 = vmax.f32 %v1629, %v1555
          %v1632 = vmax.f32 %v1630, %v1561
          %v1633 = vmax.f32 %v1631, %v1565
          %v1634 = vmax.f32 %v1632, %v1633
          %v1635 = vrot.slane %v1634, 4
          %v1636 = vmax.f32 %v1634, %v1635
          %v1637 = vrot.slane %v1636, 2
          %v1638 = vmax.f32 %v1636, %v1637
          %v1639 = vrot.slane %v1638, 1
          %v1640 = vmax.f32 %v1638, %v1639
          %v1641 = vmax.f32 %v1228, %v1603
          %v1642 = vmax.f32 %v1229, %v1640
          %v1643 = vsub.f32 %v1228, %v1641
          %v1644 = vsub.f32 %v1229, %v1642
          %v1645 = vmul.f32 %v1643, 1.442695
          %v1646 = vpow.pop %v1645
          %v1647 = vmul.f32 %v1644, 1.442695
          %v1648 = vpow.pop %v1647
          %v1649 = vsub.f32 %v1409, %v1641
          %v1650 = vsub.f32 %v1411, %v1642
          %v1651 = vsub.f32 %v1413, %v1641
          %v1652 = vsub.f32 %v1415, %v1642
          %v1653 = vsub.f32 %v1419, %v1641
          %v1654 = vsub.f32 %v1421, %v1642
          %v1655 = vsub.f32 %v1423, %v1641
          %v1656 = vsub.f32 %v1425, %v1642
          %v1657 = vsub.f32 %v1429, %v1641
          %v1658 = vsub.f32 %v1431, %v1642
          %v1659 = vsub.f32 %v1433, %v1641
          %v1660 = vsub.f32 %v1435, %v1642
          %v1661 = vsub.f32 %v1439, %v1641
          %v1662 = vsub.f32 %v1441, %v1642
          %v1663 = vsub.f32 %v1443, %v1641
          %v1664 = vsub.f32 %v1445, %v1642
          %v1665 = vsub.f32 %v1449, %v1641
          %v1666 = vsub.f32 %v1451, %v1642
          %v1667 = vsub.f32 %v1453, %v1641
          %v1668 = vsub.f32 %v1455, %v1642
          %v1669 = vsub.f32 %v1459, %v1641
          %v1670 = vsub.f32 %v1461, %v1642
          %v1671 = vsub.f32 %v1463, %v1641
          %v1672 = vsub.f32 %v1465, %v1642
          %v1673 = vsub.f32 %v1469, %v1641
          %v1674 = vsub.f32 %v1471, %v1642
          %v1675 = vsub.f32 %v1473, %v1641
          %v1676 = vsub.f32 %v1475, %v1642
          %v1677 = vsub.f32 %v1479, %v1641
          %v1678 = vsub.f32 %v1481, %v1642
          %v1679 = vsub.f32 %v1483, %v1641
          %v1680 = vsub.f32 %v1485, %v1642
          %v1681 = vsub.f32 %v1489, %v1641
          %v1682 = vsub.f32 %v1491, %v1642
          %v1683 = vsub.f32 %v1493, %v1641
          %v1684 = vsub.f32 %v1495, %v1642
          %v1685 = vsub.f32 %v1499, %v1641
          %v1686 = vsub.f32 %v1501, %v1642
          %v1687 = vsub.f32 %v1503, %v1641
          %v1688 = vsub.f32 %v1505, %v1642
          %v1689 = vsub.f32 %v1509, %v1641
          %v1690 = vsub.f32 %v1511, %v1642
          %v1691 = vsub.f32 %v1513, %v1641
          %v1692 = vsub.f32 %v1515, %v1642
          %v1693 = vsub.f32 %v1519, %v1641
          %v1694 = vsub.f32 %v1521, %v1642
          %v1695 = vsub.f32 %v1523, %v1641
          %v1696 = vsub.f32 %v1525, %v1642
          %v1697 = vsub.f32 %v1529, %v1641
          %v1698 = vsub.f32 %v1531, %v1642
          %v1699 = vsub.f32 %v1533, %v1641
          %v1700 = vsub.f32 %v1535, %v1642
          %v1701 = vsub.f32 %v1539, %v1641
          %v1702 = vsub.f32 %v1541, %v1642
          %v1703 = vsub.f32 %v1543, %v1641
          %v1704 = vsub.f32 %v1545, %v1642
          %v1705 = vsub.f32 %v1549, %v1641
          %v1706 = vsub.f32 %v1551, %v1642
          %v1707 = vsub.f32 %v1553, %v1641
          %v1708 = vsub.f32 %v1555, %v1642
          %v1709 = vsub.f32 %v1559, %v1641
          %v1710 = vsub.f32 %v1561, %v1642
          %v1711 = vsub.f32 %v1563, %v1641
          %v1712 = vsub.f32 %v1565, %v1642
          %v1713 = vmul.f32 %v1649, 1.442695
          %v1714 = vpow.pop %v1713
          %v1715 = vmul.f32 %v1650, 1.442695
          %v1716 = vpow.pop %v1715
          %v1717 = vmul.f32 %v1651, 1.442695
          %v1718 = vpow.pop %v1717
          %v1719 = vmul.f32 %v1652, 1.442695
          %v1720 = vpow.pop %v1719
          %v1721 = vmul.f32 %v1653, 1.442695
          %v1722 = vpow.pop %v1721
          %v1723 = vmul.f32 %v1654, 1.442695
          %v1724 = vpow.pop %v1723
          %v1725 = vmul.f32 %v1655, 1.442695
          %v1726 = vpow.pop %v1725
          %v1727 = vmul.f32 %v1656, 1.442695
          %v1728 = vpow.pop %v1727
          %v1729 = vmul.f32 %v1657, 1.442695
          %v1730 = vpow.pop %v1729
          %v1731 = vmul.f32 %v1658, 1.442695
          %v1732 = vpow.pop %v1731
          %v1733 = vmul.f32 %v1659, 1.442695
          %v1734 = vpow.pop %v1733
          %v1735 = vmul.f32 %v1660, 1.442695
          %v1736 = vpow.pop %v1735
          %v1737 = vmul.f32 %v1661, 1.442695
          %v1738 = vpow.pop %v1737
          %v1739 = vmul.f32 %v1662, 1.442695
          %v1740 = vpow.pop %v1739
          %v1741 = vmul.f32 %v1663, 1.442695
          %v1742 = vpow.pop %v1741
          %v1743 = vmul.f32 %v1664, 1.442695
          %v1744 = vpow.pop %v1743
          %v1745 = vmul.f32 %v1665, 1.442695
          %v1746 = vpow.pop %v1745
          %v1747 = vmul.f32 %v1666, 1.442695
          %v1748 = vpow.pop %v1747
          %v1749 = vmul.f32 %v1667, 1.442695
          %v1750 = vpow.pop %v1749
          %v1751 = vmul.f32 %v1668, 1.442695
          %v1752 = vpow.pop %v1751
          %v1753 = vmul.f32 %v1669, 1.442695
          %v1754 = vpow.pop %v1753
          %v1755 = vmul.f32 %v1670, 1.442695
          %v1756 = vpow.pop %v1755
          %v1757 = vmul.f32 %v1671, 1.442695
          %v1758 = vpow.pop %v1757
          %v1759 = vmul.f32 %v1672, 1.442695
          %v1760 = vpow.pop %v1759
          %v1761 = vmul.f32 %v1673, 1.442695
          %v1762 = vpow.pop %v1761
          %v1763 = vmul.f32 %v1674, 1.442695
          %v1764 = vpow.pop %v1763
          %v1765 = vmul.f32 %v1675, 1.442695
          %v1766 = vpow.pop %v1765
          %v1767 = vmul.f32 %v1676, 1.442695
          %v1768 = vpow.pop %v1767
          %v1769 = vmul.f32 %v1677, 1.442695
          %v1770 = vpow.pop %v1769
          %v1771 = vmul.f32 %v1678, 1.442695
          %v1772 = vpow.pop %v1771
          %v1773 = vmul.f32 %v1679, 1.442695
          %v1774 = vpow.pop %v1773
          %v1775 = vmul.f32 %v1680, 1.442695
          %v1776 = vpow.pop %v1775
          %v1777 = vmul.f32 %v1681, 1.442695
          %v1778 = vpow.pop %v1777
          %v1779 = vmul.f32 %v1682, 1.442695
          %v1780 = vpow.pop %v1779
          %v1781 = vmul.f32 %v1683, 1.442695
          %v1782 = vpow.pop %v1781
          %v1783 = vmul.f32 %v1684, 1.442695
          %v1784 = vpow.pop %v1783
          %v1785 = vmul.f32 %v1685, 1.442695
          %v1786 = vpow.pop %v1785
          %v1787 = vmul.f32 %v1686, 1.442695
          %v1788 = vpow.pop %v1787
          %v1789 = vmul.f32 %v1687, 1.442695
          %v1790 = vpow.pop %v1789
          %v1791 = vmul.f32 %v1688, 1.442695
          %v1792 = vpow.pop %v1791
          %v1793 = vmul.f32 %v1689, 1.442695
          %v1794 = vpow.pop %v1793
          %v1795 = vmul.f32 %v1690, 1.442695
          %v1796 = vpow.pop %v1795
          %v1797 = vmul.f32 %v1691, 1.442695
          %v1798 = vpow.pop %v1797
          %v1799 = vmul.f32 %v1692, 1.442695
          %v1800 = vpow.pop %v1799
          %v1801 = vmul.f32 %v1693, 1.442695
          %v1802 = vpow.pop %v1801
          %v1803 = vmul.f32 %v1694, 1.442695
          %v1804 = vpow.pop %v1803
          %v1805 = vmul.f32 %v1695, 1.442695
          %v1806 = vpow.pop %v1805
          %v1807 = vmul.f32 %v1696, 1.442695
          %v1808 = vpow.pop %v1807
          %v1809 = vmul.f32 %v1697, 1.442695
          %v1810 = vpow.pop %v1809
          %v1811 = vmul.f32 %v1698, 1.442695
          %v1812 = vpow.pop %v1811
          %v1813 = vmul.f32 %v1699, 1.442695
          %v1814 = vpow.pop %v1813
          %v1815 = vmul.f32 %v1700, 1.442695
          %v1816 = vpow.pop %v1815
          %v1817 = vmul.f32 %v1701, 1.442695
          %v1818 = vpow.pop %v1817
          %v1819 = vmul.f32 %v1702, 1.442695
          %v1820 = vpow.pop %v1819
          %v1821 = vmul.f32 %v1703, 1.442695
          %v1822 = vpow.pop %v1821
          %v1823 = vmul.f32 %v1704, 1.442695
          %v1824 = vpow.pop %v1823
          %v1825 = vmul.f32 %v1705, 1.442695
          %v1826 = vpow.pop %v1825
          %v1827 = vmul.f32 %v1706, 1.442695
          %v1828 = vpow.pop %v1827
          %v1829 = vmul.f32 %v1707, 1.442695
          %v1830 = vpow.pop %v1829
          %v1831 = vmul.f32 %v1708, 1.442695
          %v1832 = vpow.pop %v1831
          %v1833 = vmul.f32 %v1709, 1.442695
          %v1834 = vpow.pop %v1833
          %v1835 = vmul.f32 %v1710, 1.442695
          %v1836 = vpow.pop %v1835
          %v1837 = vmul.f32 %v1711, 1.442695
          %v1838 = vpow.pop %v1837
          %v1839 = vmul.f32 %v1712, 1.442695
          %v1840 = vpow.pop %v1839
          %v1841 = vmul.f32 %v1646, %v1230
          %v1842 = vmul.f32 %v1648, %v1231
          %v1843 = vadd.f32 %v1714, %v1718
          %v1844 = vadd.f32 %v1843, %v1722
          %v1845 = vadd.f32 %v1844, %v1726
          %v1846 = vadd.f32 %v1845, %v1730
          %v1847 = vadd.f32 %v1846, %v1734
          %v1848 = vadd.f32 %v1847, %v1738
          %v1849 = vadd.f32 %v1848, %v1742
          %v1850 = vadd.f32 %v1849, %v1746
          %v1851 = vadd.f32 %v1850, %v1750
          %v1852 = vadd.f32 %v1851, %v1754
          %v1853 = vadd.f32 %v1852, %v1758
          %v1854 = vadd.f32 %v1853, %v1762
          %v1855 = vadd.f32 %v1854, %v1766
          %v1856 = vadd.f32 %v1855, %v1770
          %v1857 = vadd.f32 %v1856, %v1774
          %v1858 = vadd.f32 %v1857, %v1778
          %v1859 = vadd.f32 %v1858, %v1782
          %v1860 = vadd.f32 %v1859, %v1786
          %v1861 = vadd.f32 %v1860, %v1790
          %v1862 = vadd.f32 %v1861, %v1794
          %v1863 = vadd.f32 %v1862, %v1798
          %v1864 = vadd.f32 %v1863, %v1802
          %v1865 = vadd.f32 %v1864, %v1806
          %v1866 = vadd.f32 %v1865, %v1810
          %v1867 = vadd.f32 %v1866, %v1814
          %v1868 = vadd.f32 %v1867, %v1818
          %v1869 = vadd.f32 %v1868, %v1822
          %v1870 = vadd.f32 %v1869, %v1826
          %v1871 = vadd.f32 %v1870, %v1830
          %v1872 = vadd.f32 %v1871, %v1834
          %v1873 = vadd.f32 %v1872, %v1838
          %v1874 = vrot.slane %v1873, 4
          %v1875 = vadd.f32 %v1873, %v1874
          %v1876 = vrot.slane %v1875, 2
          %v1877 = vadd.f32 %v1875, %v1876
          %v1878 = vrot.slane %v1877, 1
          %v1879 = vadd.f32 %v1877, %v1878
          %v1880 = vadd.f32 %v1716, %v1720
          %v1881 = vadd.f32 %v1880, %v1724
          %v1882 = vadd.f32 %v1881, %v1728
          %v1883 = vadd.f32 %v1882, %v1732
          %v1884 = vadd.f32 %v1883, %v1736
          %v1885 = vadd.f32 %v1884, %v1740
          %v1886 = vadd.f32 %v1885, %v1744
          %v1887 = vadd.f32 %v1886, %v1748
          %v1888 = vadd.f32 %v1887, %v1752
          %v1889 = vadd.f32 %v1888, %v1756
          %v1890 = vadd.f32 %v1889, %v1760
          %v1891 = vadd.f32 %v1890, %v1764
          %v1892 = vadd.f32 %v1891, %v1768
          %v1893 = vadd.f32 %v1892, %v1772
          %v1894 = vadd.f32 %v1893, %v1776
          %v1895 = vadd.f32 %v1894, %v1780
          %v1896 = vadd.f32 %v1895, %v1784
          %v1897 = vadd.f32 %v1896, %v1788
          %v1898 = vadd.f32 %v1897, %v1792
          %v1899 = vadd.f32 %v1898, %v1796
          %v1900 = vadd.f32 %v1899, %v1800
          %v1901 = vadd.f32 %v1900, %v1804
          %v1902 = vadd.f32 %v1901, %v1808
          %v1903 = vadd.f32 %v1902, %v1812
          %v1904 = vadd.f32 %v1903, %v1816
          %v1905 = vadd.f32 %v1904, %v1820
          %v1906 = vadd.f32 %v1905, %v1824
          %v1907 = vadd.f32 %v1906, %v1828
          %v1908 = vadd.f32 %v1907, %v1832
          %v1909 = vadd.f32 %v1908, %v1836
          %v1910 = vadd.f32 %v1909, %v1840
          %v1911 = vrot.slane %v1910, 4
          %v1912 = vadd.f32 %v1910, %v1911
          %v1913 = vrot.slane %v1912, 2
          %v1914 = vadd.f32 %v1912, %v1913
          %v1915 = vrot.slane %v1914, 1
          %v1916 = vadd.f32 %v1914, %v1915
          %v1917 = vadd.f32 %v1841, %v1879
          %v1918 = vadd.f32 %v1842, %v1916
          %v1919 = vmul.f32 %v1646, %v1232
          %v1920 = vmul.f32 %v1648, %v1233
          %v1921 = vmul.f32 %v1646, %v1234
          %v1922 = vmul.f32 %v1648, %v1235
          %v1923 = vmul.f32 %v1646, %v1236
          %v1924 = vmul.f32 %v1648, %v1237
          %v1925 = vmul.f32 %v1646, %v1238
          %v1926 = vmul.f32 %v1648, %v1239
          %v1927 = vpack.c.bf16 %v1718, %v1714
          %v1928 = vpack.c.bf16 %v1720, %v1716
          %v1929 = vpack.c.bf16 %v1726, %v1722
          %v1930 = vpack.c.bf16 %v1728, %v1724
          %v1931 = vpack.c.bf16 %v1734, %v1730
          %v1932 = vpack.c.bf16 %v1736, %v1732
          %v1933 = vpack.c.bf16 %v1742, %v1738
          %v1934 = vpack.c.bf16 %v1744, %v1740
          %v1935 = vpack.c.bf16 %v1750, %v1746
          %v1936 = vpack.c.bf16 %v1752, %v1748
          %v1937 = vpack.c.bf16 %v1758, %v1754
          %v1938 = vpack.c.bf16 %v1760, %v1756
          %v1939 = vpack.c.bf16 %v1766, %v1762
          %v1940 = vpack.c.bf16 %v1768, %v1764
          %v1941 = vpack.c.bf16 %v1774, %v1770
          %v1942 = vpack.c.bf16 %v1776, %v1772
          %v1943 = vpack.c.bf16 %v1782, %v1778
          %v1944 = vpack.c.bf16 %v1784, %v1780
          %v1945 = vpack.c.bf16 %v1790, %v1786
          %v1946 = vpack.c.bf16 %v1792, %v1788
          %v1947 = vpack.c.bf16 %v1798, %v1794
          %v1948 = vpack.c.bf16 %v1800, %v1796
          %v1949 = vpack.c.bf16 %v1806, %v1802
          %v1950 = vpack.c.bf16 %v1808, %v1804
          %v1951 = vpack.c.bf16 %v1814, %v1810
          %v1952 = vpack.c.bf16 %v1816, %v1812
          %v1953 = vpack.c.bf16 %v1822, %v1818
          %v1954 = vpack.c.bf16 %v1824, %v1820
          %v1955 = vpack.c.bf16 %v1830, %v1826
          %v1956 = vpack.c.bf16 %v1832, %v1828
          %v1957 = vpack.c.bf16 %v1838, %v1834
          %v1958 = vpack.c.bf16 %v1840, %v1836
          %v1963 = vunpack.c.l.b16 %v1249
          %v1964 = vunpack.c.h.b16 %v1249
          %v1965 = vunpack.c.l.b16 %v1250
          %v1966 = vunpack.c.h.b16 %v1250
          %v1967 = vunpack.c.l.b16 %v1251
          %v1968 = vunpack.c.h.b16 %v1251
          %v1969 = vunpack.c.l.b16 %v1252
          %v1970 = vunpack.c.h.b16 %v1252
          %v1971 = vpack.c.b16 %v1965, %v1963
          %v1972 = vpack.c.b16 %v1966, %v1964
          %v1973 = vpack.c.b16 %v1969, %v1967
          %v1974 = vpack.c.b16 %v1970, %v1968
          %1979 = vmatprep.subr.bf16.mxu0 %v1942
          %1980 = vmatpush1.bf16.msra.mxu0 %v1941
          %1981 = vmatprep.subr.bf16.mxu0 %v1940
          %1982 = vmatpush1.bf16.msra.mxu0 %v1939
          %1983 = vmatprep.subr.bf16.mxu0 %v1938
          %1984 = vmatpush1.bf16.msra.mxu0 %v1937
          %1985 = vmatprep.subr.bf16.mxu0 %v1936
          %1986 = vmatpush1.bf16.msra.mxu0 %v1935
          %1987 = vmatprep.subr.bf16.mxu0 %v1934
          %1988 = vmatpush1.bf16.msra.mxu0 %v1933
          %1989 = vmatprep.subr.bf16.mxu0 %v1932
          %1990 = vmatpush1.bf16.msra.mxu0 %v1931
          %1991 = vmatprep.subr.bf16.mxu0 %v1930
          %1992 = vmatpush1.bf16.msra.mxu0 %v1929
          %1993 = vmatprep.subr.bf16.mxu0 %v1928
          %1994 = vmatpush1.bf16.msra.mxu0 %v1927
          %1995 = vmatprep.subr.bf16.mxu0 %v1958
          %1996 = vmatpush2.bf16.msra.mxu0 %v1957
          %1997 = vmatprep.subr.bf16.mxu0 %v1956
          %1998 = vmatpush2.bf16.msra.mxu0 %v1955
          %1999 = vmatprep.subr.bf16.mxu0 %v1954
          %2000 = vmatpush2.bf16.msra.mxu0 %v1953
          %2001 = vmatprep.subr.bf16.mxu0 %v1952
          %2002 = vmatpush2.bf16.msra.mxu0 %v1951
          %2003 = vmatprep.subr.bf16.mxu0 %v1950
          %2004 = vmatpush2.bf16.msra.mxu0 %v1949
          %2005 = vmatprep.subr.bf16.mxu0 %v1948
          %2006 = vmatpush2.bf16.msra.mxu0 %v1947
          %2007 = vmatprep.subr.bf16.mxu0 %v1946
          %2008 = vmatpush2.bf16.msra.mxu0 %v1945
          %2009 = vmatprep.subr.bf16.mxu0 %v1944
          %2010 = vmatpush2.bf16.msra.mxu0 %v1943
          %2011 = vmatprep.mubr.bf16.mxu0 %v1972
          %2012 = vmatmul.mubr.bf16.gmra.mxu0 %v1971
          %v2013 = vpop.f32.mrf.mxu0
          %v2014 = vadd.f32 0.0, %v2013
          %v2015 = vpop.f32.mrf.mxu0
          %v2016 = vadd.f32 0.0, %v2015
          %v2017 = vpop.f32.mrf.mxu0
          %v2018 = vadd.f32 0.0, %v2017
          %v2019 = vpop.f32.mrf.mxu0
          %v2020 = vadd.f32 0.0, %v2019
          %2021 = vmatprep.mubr.bf16.mxu0 %v1974
          %2022 = vmatmul.mubr.bf16.gmra.mxu0 %v1973
          %v2023 = vpop.f32.mrf.mxu0
          %v2024 = vadd.f32 0.0, %v2023
          %v2025 = vpop.f32.mrf.mxu0
          %v2026 = vadd.f32 0.0, %v2025
          %v2027 = vpop.f32.mrf.mxu0
          %v2028 = vadd.f32 0.0, %v2027
          %v2029 = vpop.f32.mrf.mxu0
          %v2030 = vadd.f32 0.0, %v2029
          %2031 = vdwg.mxu0
          %v2032 = vadd.f32 %v1919, %v2014
          %v2033 = vadd.f32 %v1920, %v2016
          %v2034 = vadd.f32 %v1921, %v2018
          %v2035 = vadd.f32 %v1922, %v2020
          %v2036 = vadd.f32 %v1923, %v2024
          %v2037 = vadd.f32 %v1924, %v2026
          %v2038 = vadd.f32 %v1925, %v2028
          %v2039 = vadd.f32 %v1926, %v2030
        $region52: #{tpu_custom_call.1} parent=35 // loop_footer
          %s1227 = sadd.s32 1, %s1223
        $region53: #{tpu_custom_call.1} parent=35 // loop_footer_branch
          %1222 = sbr.rel target = $region49
        $region54: #{tpu_custom_call.1} parent=35 // loop_exit
          _
        %v2040 = vrcp.pop %v1230
        %v2041 = vrcp.pop %v1231
        %v2042 = vmul.f32 %v1230, %v2040
        %v2043 = vmul.f32 %v1231, %v2041
        %v2044 = vsub.f32 2.0, %v2042
        %v2045 = vsub.f32 2.0, %v2043
        %v2046 = vmul.f32 %v2040, %v2044
        %v2047 = vmul.f32 %v2041, %v2045
        %v2048 = vmul.f32 %v1232, %v2046
        %v2049 = vmul.f32 %v1233, %v2047
        %v2050 = vmul.f32 %v1234, %v2046
        %v2051 = vmul.f32 %v1235, %v2047
        %v2052 = vmul.f32 %v1236, %v2046
        %v2053 = vmul.f32 %v1237, %v2047
        %v2054 = vmul.f32 %v1238, %v2046
        %v2055 = vmul.f32 %v1239, %v2047
        %2056 = vst [vmem:[#allocation4] sm:$0xff] %v2048
        %2057 = vst [vmem:[#allocation4 + $0x8] sm:$0xff] %v2049
        %2058 = vst [vmem:[#allocation4 + $0x10] sm:$0xff] %v2050
        %2059 = vst [vmem:[#allocation4 + $0x18] sm:$0xff] %v2051
        %2060 = vst [vmem:[#allocation4 + $0x20] sm:$0xff] %v2052
        %2061 = vst [vmem:[#allocation4 + $0x28] sm:$0xff] %v2053
        %2062 = vst [vmem:[#allocation4 + $0x30] sm:$0xff] %v2054
        %2063 = vst [vmem:[#allocation4 + $0x38] sm:$0xff] %v2055
        %v2064 = vld [vmem:[#allocation2 + $0x20] sm:$0xff]
        %v2065 = vld [vmem:[#allocation2 + $0x28] sm:$0xff]
        %v2066 = vld [vmem:[#allocation2 + $0x30] sm:$0xff]
        %v2067 = vld [vmem:[#allocation2 + $0x38] sm:$0xff]
        loop: start=0, step=1, limit=4
        $region55: #{tpu_custom_call.1} parent=35 // loop_pre_header
          _
        $region56: #{tpu_custom_call.1} parent=35 // loop_header
          %s2069 = sphi 0, %s2073
          %p2070 = scmp.ge.s32.totalorder %s2069, 4
          %v2074 = vphi -inf, %v2487
          %v2075 = vphi -inf, %v2488
          %v2076 = vphi 0.0, %v2763
          %v2077 = vphi 0.0, %v2764
          %v2078 = vphi 0.0, %v2878
          %v2079 = vphi 0.0, %v2879
          %v2080 = vphi 0.0, %v2880
          %v2081 = vphi 0.0, %v2881
          %v2082 = vphi 0.0, %v2882
          %v2083 = vphi 0.0, %v2883
          %v2084 = vphi 0.0, %v2884
          %v2085 = vphi 0.0, %v2885
        $region57: #{tpu_custom_call.1} parent=35 // loop_header_branch
          %2072 = sbr.rel (%p2070) target = $region61
        $region58: #{tpu_custom_call.1} parent=35 // loop_body
          %s2086 = smul.u32 %s2069, 256
          %s2087 = sshra.s32 %s2086, 7
          %s2088 = sand.u32 %s2086, 127
          %s2089 = smul.addr %s2087, 4
          %s2090 = scalar_lea.vmem [#allocation3], %s2089
          %v2091 = vld [vmem:[%s2090 + $0x80] sm:$0xff]
          %v2092 = vld [vmem:[%s2090 + $0xa0] sm:$0xff]
          %v2093 = vld [vmem:[%s2090 + $0xc0] sm:$0xff]
          %v2094 = vld [vmem:[%s2090 + $0xe0] sm:$0xff]
          %v2095 = vld [vmem:[%s2090 + $0x280] sm:$0xff]
          %v2096 = vld [vmem:[%s2090 + $0x2a0] sm:$0xff]
          %v2097 = vld [vmem:[%s2090 + $0x2c0] sm:$0xff]
          %v2098 = vld [vmem:[%s2090 + $0x2e0] sm:$0xff]
          %v2103 = vunpack.c.l.b16 %v2091
          %v2104 = vunpack.c.h.b16 %v2091
          %v2105 = vunpack.c.l.b16 %v2092
          %v2106 = vunpack.c.h.b16 %v2092
          %v2107 = vunpack.c.l.b16 %v2093
          %v2108 = vunpack.c.h.b16 %v2093
          %v2109 = vunpack.c.l.b16 %v2094
          %v2110 = vunpack.c.h.b16 %v2094
          %v2111 = vpack.c.b16 %v2105, %v2103
          %v2112 = vpack.c.b16 %v2106, %v2104
          %v2113 = vpack.c.b16 %v2109, %v2107
          %v2114 = vpack.c.b16 %v2110, %v2108
          %2119 = vxpose.xlu0.c.b16.start [1/8] %v2111, 128
          %2120 = vxpose.xlu0.c.b16.cont [2/8] %v2113, 128
          %2121 = vxpose.xlu0.c.b16.cont [3/8] 0, 128
          %2122 = vxpose.xlu0.c.b16.cont [4/8] 0, 128
          %2123 = vxpose.xlu0.c.b16.cont [5/8] 0, 128
          %2124 = vxpose.xlu0.c.b16.cont [6/8] 0, 128
          %2125 = vxpose.xlu0.c.b16.cont [7/8] 0, 128
          %2126 = vxpose.xlu0.c.b16.end [8/8] 0, 128
          %v2127 = vpop.trf.xlu0
          %v2128 = vpop.trf.xlu0
          %v2129 = vpop.trf.xlu0
          %v2130 = vpop.trf.xlu0
          %v2131 = vpop.trf.xlu0
          %v2132 = vpop.trf.xlu0
          %v2133 = vpop.trf.xlu0
          %v2134 = vpop.trf.xlu0
          %2135 = vxpose.xlu0.c.b16.start [1/8] %v2112, 128
          %2136 = vxpose.xlu0.c.b16.cont [2/8] %v2114, 128
          %2137 = vxpose.xlu0.c.b16.cont [3/8] 0, 128
          %2138 = vxpose.xlu0.c.b16.cont [4/8] 0, 128
          %2139 = vxpose.xlu0.c.b16.cont [5/8] 0, 128
          %2140 = vxpose.xlu0.c.b16.cont [6/8] 0, 128
          %2141 = vxpose.xlu0.c.b16.cont [7/8] 0, 128
          %2142 = vxpose.xlu0.c.b16.end [8/8] 0, 128
          %v2143 = vpop.trf.xlu0
          %v2144 = vpop.trf.xlu0
          %v2145 = vpop.trf.xlu0
          %v2146 = vpop.trf.xlu0
          %v2147 = vpop.trf.xlu0
          %v2148 = vpop.trf.xlu0
          %v2149 = vpop.trf.xlu0
          %v2150 = vpop.trf.xlu0
          %v2155 = vunpack.c.l.b16 %v2064
          %v2156 = vunpack.c.h.b16 %v2064
          %v2157 = vunpack.c.l.b16 %v2065
          %v2158 = vunpack.c.h.b16 %v2065
          %v2159 = vunpack.c.l.b16 %v2066
          %v2160 = vunpack.c.h.b16 %v2066
          %v2161 = vunpack.c.l.b16 %v2067
          %v2162 = vunpack.c.h.b16 %v2067
          %v2163 = vpack.c.b16 %v2157, %v2155
          %v2164 = vpack.c.b16 %v2158, %v2156
          %v2165 = vpack.c.b16 %v2161, %v2159
          %v2166 = vpack.c.b16 %v2162, %v2160
          %vm2171 = vcmask 261120
          %v2173 = vsel %vm2171, %v2127, 0
          %v2176 = vsel %vm2171, %v2128, 0
          %v2179 = vsel %vm2171, %v2129, 0
          %v2182 = vsel %vm2171, %v2130, 0
          %v2185 = vsel %vm2171, %v2131, 0
          %v2188 = vsel %vm2171, %v2132, 0
          %v2191 = vsel %vm2171, %v2133, 0
          %v2194 = vsel %vm2171, %v2134, 0
          %v2197 = vsel %vm2171, %v2143, 0
          %v2200 = vsel %vm2171, %v2144, 0
          %v2203 = vsel %vm2171, %v2145, 0
          %v2206 = vsel %vm2171, %v2146, 0
          %v2209 = vsel %vm2171, %v2147, 0
          %v2212 = vsel %vm2171, %v2148, 0
          %v2215 = vsel %vm2171, %v2149, 0
          %v2218 = vsel %vm2171, %v2150, 0
          %2220 = vmatprep.subr.bf16.mxu0 0
          %2221 = vmatpush1.bf16.msra.mxu0 0
          %2222 = vmatprep.subr.bf16.mxu0 0
          %2223 = vmatpush1.bf16.msra.mxu0 0
          %2224 = vmatprep.subr.bf16.mxu0 0
          %2225 = vmatpush1.bf16.msra.mxu0 0
          %2226 = vmatprep.subr.bf16.mxu0 0
          %2227 = vmatpush1.bf16.msra.mxu0 0
          %2228 = vmatprep.subr.bf16.mxu0 0
          %2229 = vmatpush1.bf16.msra.mxu0 0
          %2230 = vmatprep.subr.bf16.mxu0 0
          %2231 = vmatpush1.bf16.msra.mxu0 0
          %2232 = vmatprep.subr.bf16.mxu0 %v2166
          %2233 = vmatpush1.bf16.msra.mxu0 %v2165
          %2234 = vmatprep.subr.bf16.mxu0 %v2164
          %2235 = vmatpush1.bf16.msra.mxu0 %v2163
          %2236 = vmatprep.subr.bf16.mxu0 0
          %2237 = vmatpush2.bf16.msra.mxu0 0
          %2238 = vmatprep.subr.bf16.mxu0 0
          %2239 = vmatpush2.bf16.msra.mxu0 0
          %2240 = vmatprep.subr.bf16.mxu0 0
          %2241 = vmatpush2.bf16.msra.mxu0 0
          %2242 = vmatprep.subr.bf16.mxu0 0
          %2243 = vmatpush2.bf16.msra.mxu0 0
          %2244 = vmatprep.subr.bf16.mxu0 0
          %2245 = vmatpush2.bf16.msra.mxu0 0
          %2246 = vmatprep.subr.bf16.mxu0 0
          %2247 = vmatpush2.bf16.msra.mxu0 0
          %2248 = vmatprep.subr.bf16.mxu0 0
          %2249 = vmatpush2.bf16.msra.mxu0 0
          %2250 = vmatprep.subr.bf16.mxu0 0
          %2251 = vmatpush2.bf16.msra.mxu0 0
          %2252 = vmatprep.mubr.bf16.mxu0 0
          %2253 = vmatmul.mubr.bf16.gmra.mxu0 %v2173
          %v2254 = vpop.f32.mrf.mxu0
          %v2255 = vadd.f32 0.0, %v2254
          %v2256 = vpop.f32.mrf.mxu0
          %v2257 = vadd.f32 0.0, %v2256
          %v2258 = vpop.f32.mrf.mxu0
          %v2259 = vadd.f32 0.0, %v2258
          %v2260 = vpop.f32.mrf.mxu0
          %v2261 = vadd.f32 0.0, %v2260
          %2262 = vmatprep.mubr.bf16.mxu0 0
          %2263 = vmatmul.mubr.bf16.gmra.mxu0 %v2176
          %v2264 = vpop.f32.mrf.mxu0
          %v2265 = vadd.f32 0.0, %v2264
          %v2266 = vpop.f32.mrf.mxu0
          %v2267 = vadd.f32 0.0, %v2266
          %v2268 = vpop.f32.mrf.mxu0
          %v2269 = vadd.f32 0.0, %v2268
          %v2270 = vpop.f32.mrf.mxu0
          %v2271 = vadd.f32 0.0, %v2270
          %2272 = vmatprep.mubr.bf16.mxu0 0
          %2273 = vmatmul.mubr.bf16.gmra.mxu0 %v2179
          %v2274 = vpop.f32.mrf.mxu0
          %v2275 = vadd.f32 0.0, %v2274
          %v2276 = vpop.f32.mrf.mxu0
          %v2277 = vadd.f32 0.0, %v2276
          %v2278 = vpop.f32.mrf.mxu0
          %v2279 = vadd.f32 0.0, %v2278
          %v2280 = vpop.f32.mrf.mxu0
          %v2281 = vadd.f32 0.0, %v2280
          %2282 = vmatprep.mubr.bf16.mxu0 0
          %2283 = vmatmul.mubr.bf16.gmra.mxu0 %v2182
          %v2284 = vpop.f32.mrf.mxu0
          %v2285 = vadd.f32 0.0, %v2284
          %v2286 = vpop.f32.mrf.mxu0
          %v2287 = vadd.f32 0.0, %v2286
          %v2288 = vpop.f32.mrf.mxu0
          %v2289 = vadd.f32 0.0, %v2288
          %v2290 = vpop.f32.mrf.mxu0
          %v2291 = vadd.f32 0.0, %v2290
          %2292 = vmatprep.mubr.bf16.mxu0 0
          %2293 = vmatmul.mubr.bf16.gmra.mxu0 %v2185
          %v2294 = vpop.f32.mrf.mxu0
          %v2295 = vadd.f32 0.0, %v2294
          %v2296 = vpop.f32.mrf.mxu0
          %v2297 = vadd.f32 0.0, %v2296
          %v2298 = vpop.f32.mrf.mxu0
          %v2299 = vadd.f32 0.0, %v2298
          %v2300 = vpop.f32.mrf.mxu0
          %v2301 = vadd.f32 0.0, %v2300
          %2302 = vmatprep.mubr.bf16.mxu0 0
          %2303 = vmatmul.mubr.bf16.gmra.mxu0 %v2188
          %v2304 = vpop.f32.mrf.mxu0
          %v2305 = vadd.f32 0.0, %v2304
          %v2306 = vpop.f32.mrf.mxu0
          %v2307 = vadd.f32 0.0, %v2306
          %v2308 = vpop.f32.mrf.mxu0
          %v2309 = vadd.f32 0.0, %v2308
          %v2310 = vpop.f32.mrf.mxu0
          %v2311 = vadd.f32 0.0, %v2310
          %2312 = vmatprep.mubr.bf16.mxu0 0
          %2313 = vmatmul.mubr.bf16.gmra.mxu0 %v2191
          %v2314 = vpop.f32.mrf.mxu0
          %v2315 = vadd.f32 0.0, %v2314
          %v2316 = vpop.f32.mrf.mxu0
          %v2317 = vadd.f32 0.0, %v2316
          %v2318 = vpop.f32.mrf.mxu0
          %v2319 = vadd.f32 0.0, %v2318
          %v2320 = vpop.f32.mrf.mxu0
          %v2321 = vadd.f32 0.0, %v2320
          %2322 = vmatprep.mubr.bf16.mxu0 0
          %2323 = vmatmul.mubr.bf16.gmra.mxu0 %v2194
          %v2324 = vpop.f32.mrf.mxu0
          %v2325 = vadd.f32 0.0, %v2324
          %v2326 = vpop.f32.mrf.mxu0
          %v2327 = vadd.f32 0.0, %v2326
          %v2328 = vpop.f32.mrf.mxu0
          %v2329 = vadd.f32 0.0, %v2328
          %v2330 = vpop.f32.mrf.mxu0
          %v2331 = vadd.f32 0.0, %v2330
          %2332 = vmatprep.mubr.bf16.mxu0 0
          %2333 = vmatmul.mubr.bf16.gmra.mxu0 %v2197
          %v2334 = vpop.f32.mrf.mxu0
          %v2335 = vadd.f32 0.0, %v2334
          %v2336 = vpop.f32.mrf.mxu0
          %v2337 = vadd.f32 0.0, %v2336
          %v2338 = vpop.f32.mrf.mxu0
          %v2339 = vadd.f32 0.0, %v2338
          %v2340 = vpop.f32.mrf.mxu0
          %v2341 = vadd.f32 0.0, %v2340
          %2342 = vmatprep.mubr.bf16.mxu0 0
          %2343 = vmatmul.mubr.bf16.gmra.mxu0 %v2200
          %v2344 = vpop.f32.mrf.mxu0
          %v2345 = vadd.f32 0.0, %v2344
          %v2346 = vpop.f32.mrf.mxu0
          %v2347 = vadd.f32 0.0, %v2346
          %v2348 = vpop.f32.mrf.mxu0
          %v2349 = vadd.f32 0.0, %v2348
          %v2350 = vpop.f32.mrf.mxu0
          %v2351 = vadd.f32 0.0, %v2350
          %2352 = vmatprep.mubr.bf16.mxu0 0
          %2353 = vmatmul.mubr.bf16.gmra.mxu0 %v2203
          %v2354 = vpop.f32.mrf.mxu0
          %v2355 = vadd.f32 0.0, %v2354
          %v2356 = vpop.f32.mrf.mxu0
          %v2357 = vadd.f32 0.0, %v2356
          %v2358 = vpop.f32.mrf.mxu0
          %v2359 = vadd.f32 0.0, %v2358
          %v2360 = vpop.f32.mrf.mxu0
          %v2361 = vadd.f32 0.0, %v2360
          %2362 = vmatprep.mubr.bf16.mxu0 0
          %2363 = vmatmul.mubr.bf16.gmra.mxu0 %v2206
          %v2364 = vpop.f32.mrf.mxu0
          %v2365 = vadd.f32 0.0, %v2364
          %v2366 = vpop.f32.mrf.mxu0
          %v2367 = vadd.f32 0.0, %v2366
          %v2368 = vpop.f32.mrf.mxu0
          %v2369 = vadd.f32 0.0, %v2368
          %v2370 = vpop.f32.mrf.mxu0
          %v2371 = vadd.f32 0.0, %v2370
          %2372 = vmatprep.mubr.bf16.mxu0 0
          %2373 = vmatmul.mubr.bf16.gmra.mxu0 %v2209
          %v2374 = vpop.f32.mrf.mxu0
          %v2375 = vadd.f32 0.0, %v2374
          %v2376 = vpop.f32.mrf.mxu0
          %v2377 = vadd.f32 0.0, %v2376
          %v2378 = vpop.f32.mrf.mxu0
          %v2379 = vadd.f32 0.0, %v2378
          %v2380 = vpop.f32.mrf.mxu0
          %v2381 = vadd.f32 0.0, %v2380
          %2382 = vmatprep.mubr.bf16.mxu0 0
          %2383 = vmatmul.mubr.bf16.gmra.mxu0 %v2212
          %v2384 = vpop.f32.mrf.mxu0
          %v2385 = vadd.f32 0.0, %v2384
          %v2386 = vpop.f32.mrf.mxu0
          %v2387 = vadd.f32 0.0, %v2386
          %v2388 = vpop.f32.mrf.mxu0
          %v2389 = vadd.f32 0.0, %v2388
          %v2390 = vpop.f32.mrf.mxu0
          %v2391 = vadd.f32 0.0, %v2390
          %2392 = vmatprep.mubr.bf16.mxu0 0
          %2393 = vmatmul.mubr.bf16.gmra.mxu0 %v2215
          %v2394 = vpop.f32.mrf.mxu0
          %v2395 = vadd.f32 0.0, %v2394
          %v2396 = vpop.f32.mrf.mxu0
          %v2397 = vadd.f32 0.0, %v2396
          %v2398 = vpop.f32.mrf.mxu0
          %v2399 = vadd.f32 0.0, %v2398
          %v2400 = vpop.f32.mrf.mxu0
          %v2401 = vadd.f32 0.0, %v2400
          %2402 = vmatprep.mubr.bf16.mxu0 0
          %2403 = vmatmul.mubr.bf16.gmra.mxu0 %v2218
          %v2404 = vpop.f32.mrf.mxu0
          %v2405 = vadd.f32 0.0, %v2404
          %v2406 = vpop.f32.mrf.mxu0
          %v2407 = vadd.f32 0.0, %v2406
          %v2408 = vpop.f32.mrf.mxu0
          %v2409 = vadd.f32 0.0, %v2408
          %v2410 = vpop.f32.mrf.mxu0
          %v2411 = vadd.f32 0.0, %v2410
          %2412 = vdwg.mxu0
          %v2413 = vmax.f32 %v2255, %v2265
          %v2414 = vmax.f32 %v2259, %v2269
          %v2415 = vmax.f32 %v2413, %v2275
          %v2416 = vmax.f32 %v2414, %v2279
          %v2417 = vmax.f32 %v2415, %v2285
          %v2418 = vmax.f32 %v2416, %v2289
          %v2419 = vmax.f32 %v2417, %v2295
          %v2420 = vmax.f32 %v2418, %v2299
          %v2421 = vmax.f32 %v2419, %v2305
          %v2422 = vmax.f32 %v2420, %v2309
          %v2423 = vmax.f32 %v2421, %v2315
          %v2424 = vmax.f32 %v2422, %v2319
          %v2425 = vmax.f32 %v2423, %v2325
          %v2426 = vmax.f32 %v2424, %v2329
          %v2427 = vmax.f32 %v2425, %v2335
          %v2428 = vmax.f32 %v2426, %v2339
          %v2429 = vmax.f32 %v2427, %v2345
          %v2430 = vmax.f32 %v2428, %v2349
          %v2431 = vmax.f32 %v2429, %v2355
          %v2432 = vmax.f32 %v2430, %v2359
          %v2433 = vmax.f32 %v2431, %v2365
          %v2434 = vmax.f32 %v2432, %v2369
          %v2435 = vmax.f32 %v2433, %v2375
          %v2436 = vmax.f32 %v2434, %v2379
          %v2437 = vmax.f32 %v2435, %v2385
          %v2438 = vmax.f32 %v2436, %v2389
          %v2439 = vmax.f32 %v2437, %v2395
          %v2440 = vmax.f32 %v2438, %v2399
          %v2441 = vmax.f32 %v2439, %v2405
          %v2442 = vmax.f32 %v2440, %v2409
          %v2443 = vmax.f32 %v2441, %v2442
          %v2444 = vrot.slane %v2443, 4
          %v2445 = vmax.f32 %v2443, %v2444
          %v2446 = vrot.slane %v2445, 2
          %v2447 = vmax.f32 %v2445, %v2446
          %v2448 = vrot.slane %v2447, 1
          %v2449 = vmax.f32 %v2447, %v2448
          %v2450 = vmax.f32 %v2257, %v2267
          %v2451 = vmax.f32 %v2261, %v2271
          %v2452 = vmax.f32 %v2450, %v2277
          %v2453 = vmax.f32 %v2451, %v2281
          %v2454 = vmax.f32 %v2452, %v2287
          %v2455 = vmax.f32 %v2453, %v2291
          %v2456 = vmax.f32 %v2454, %v2297
          %v2457 = vmax.f32 %v2455, %v2301
          %v2458 = vmax.f32 %v2456, %v2307
          %v2459 = vmax.f32 %v2457, %v2311
          %v2460 = vmax.f32 %v2458, %v2317
          %v2461 = vmax.f32 %v2459, %v2321
          %v2462 = vmax.f32 %v2460, %v2327
          %v2463 = vmax.f32 %v2461, %v2331
          %v2464 = vmax.f32 %v2462, %v2337
          %v2465 = vmax.f32 %v2463, %v2341
          %v2466 = vmax.f32 %v2464, %v2347
          %v2467 = vmax.f32 %v2465, %v2351
          %v2468 = vmax.f32 %v2466, %v2357
          %v2469 = vmax.f32 %v2467, %v2361
          %v2470 = vmax.f32 %v2468, %v2367
          %v2471 = vmax.f32 %v2469, %v2371
          %v2472 = vmax.f32 %v2470, %v2377
          %v2473 = vmax.f32 %v2471, %v2381
          %v2474 = vmax.f32 %v2472, %v2387
          %v2475 = vmax.f32 %v2473, %v2391
          %v2476 = vmax.f32 %v2474, %v2397
          %v2477 = vmax.f32 %v2475, %v2401
          %v2478 = vmax.f32 %v2476, %v2407
          %v2479 = vmax.f32 %v2477, %v2411
          %v2480 = vmax.f32 %v2478, %v2479
          %v2481 = vrot.slane %v2480, 4
          %v2482 = vmax.f32 %v2480, %v2481
          %v2483 = vrot.slane %v2482, 2
          %v2484 = vmax.f32 %v2482, %v2483
          %v2485 = vrot.slane %v2484, 1
          %v2486 = vmax.f32 %v2484, %v2485
          %v2487 = vmax.f32 %v2074, %v2449
          %v2488 = vmax.f32 %v2075, %v2486
          %v2489 = vsub.f32 %v2074, %v2487
          %v2490 = vsub.f32 %v2075, %v2488
          %v2491 = vmul.f32 %v2489, 1.442695
          %v2492 = vpow.pop %v2491
          %v2493 = vmul.f32 %v2490, 1.442695
          %v2494 = vpow.pop %v2493
          %v2495 = vsub.f32 %v2255, %v2487
          %v2496 = vsub.f32 %v2257, %v2488
          %v2497 = vsub.f32 %v2259, %v2487
          %v2498 = vsub.f32 %v2261, %v2488
          %v2499 = vsub.f32 %v2265, %v2487
          %v2500 = vsub.f32 %v2267, %v2488
          %v2501 = vsub.f32 %v2269, %v2487
          %v2502 = vsub.f32 %v2271, %v2488
          %v2503 = vsub.f32 %v2275, %v2487
          %v2504 = vsub.f32 %v2277, %v2488
          %v2505 = vsub.f32 %v2279, %v2487
          %v2506 = vsub.f32 %v2281, %v2488
          %v2507 = vsub.f32 %v2285, %v2487
          %v2508 = vsub.f32 %v2287, %v2488
          %v2509 = vsub.f32 %v2289, %v2487
          %v2510 = vsub.f32 %v2291, %v2488
          %v2511 = vsub.f32 %v2295, %v2487
          %v2512 = vsub.f32 %v2297, %v2488
          %v2513 = vsub.f32 %v2299, %v2487
          %v2514 = vsub.f32 %v2301, %v2488
          %v2515 = vsub.f32 %v2305, %v2487
          %v2516 = vsub.f32 %v2307, %v2488
          %v2517 = vsub.f32 %v2309, %v2487
          %v2518 = vsub.f32 %v2311, %v2488
          %v2519 = vsub.f32 %v2315, %v2487
          %v2520 = vsub.f32 %v2317, %v2488
          %v2521 = vsub.f32 %v2319, %v2487
          %v2522 = vsub.f32 %v2321, %v2488
          %v2523 = vsub.f32 %v2325, %v2487
          %v2524 = vsub.f32 %v2327, %v2488
          %v2525 = vsub.f32 %v2329, %v2487
          %v2526 = vsub.f32 %v2331, %v2488
          %v2527 = vsub.f32 %v2335, %v2487
          %v2528 = vsub.f32 %v2337, %v2488
          %v2529 = vsub.f32 %v2339, %v2487
          %v2530 = vsub.f32 %v2341, %v2488
          %v2531 = vsub.f32 %v2345, %v2487
          %v2532 = vsub.f32 %v2347, %v2488
          %v2533 = vsub.f32 %v2349, %v2487
          %v2534 = vsub.f32 %v2351, %v2488
          %v2535 = vsub.f32 %v2355, %v2487
          %v2536 = vsub.f32 %v2357, %v2488
          %v2537 = vsub.f32 %v2359, %v2487
          %v2538 = vsub.f32 %v2361, %v2488
          %v2539 = vsub.f32 %v2365, %v2487
          %v2540 = vsub.f32 %v2367, %v2488
          %v2541 = vsub.f32 %v2369, %v2487
          %v2542 = vsub.f32 %v2371, %v2488
          %v2543 = vsub.f32 %v2375, %v2487
          %v2544 = vsub.f32 %v2377, %v2488
          %v2545 = vsub.f32 %v2379, %v2487
          %v2546 = vsub.f32 %v2381, %v2488
          %v2547 = vsub.f32 %v2385, %v2487
          %v2548 = vsub.f32 %v2387, %v2488
          %v2549 = vsub.f32 %v2389, %v2487
          %v2550 = vsub.f32 %v2391, %v2488
          %v2551 = vsub.f32 %v2395, %v2487
          %v2552 = vsub.f32 %v2397, %v2488
          %v2553 = vsub.f32 %v2399, %v2487
          %v2554 = vsub.f32 %v2401, %v2488
          %v2555 = vsub.f32 %v2405, %v2487
          %v2556 = vsub.f32 %v2407, %v2488
          %v2557 = vsub.f32 %v2409, %v2487
          %v2558 = vsub.f32 %v2411, %v2488
          %v2559 = vmul.f32 %v2495, 1.442695
          %v2560 = vpow.pop %v2559
          %v2561 = vmul.f32 %v2496, 1.442695
          %v2562 = vpow.pop %v2561
          %v2563 = vmul.f32 %v2497, 1.442695
          %v2564 = vpow.pop %v2563
          %v2565 = vmul.f32 %v2498, 1.442695
          %v2566 = vpow.pop %v2565
          %v2567 = vmul.f32 %v2499, 1.442695
          %v2568 = vpow.pop %v2567
          %v2569 = vmul.f32 %v2500, 1.442695
          %v2570 = vpow.pop %v2569
          %v2571 = vmul.f32 %v2501, 1.442695
          %v2572 = vpow.pop %v2571
          %v2573 = vmul.f32 %v2502, 1.442695
          %v2574 = vpow.pop %v2573
          %v2575 = vmul.f32 %v2503, 1.442695
          %v2576 = vpow.pop %v2575
          %v2577 = vmul.f32 %v2504, 1.442695
          %v2578 = vpow.pop %v2577
          %v2579 = vmul.f32 %v2505, 1.442695
          %v2580 = vpow.pop %v2579
          %v2581 = vmul.f32 %v2506, 1.442695
          %v2582 = vpow.pop %v2581
          %v2583 = vmul.f32 %v2507, 1.442695
          %v2584 = vpow.pop %v2583
          %v2585 = vmul.f32 %v2508, 1.442695
          %v2586 = vpow.pop %v2585
          %v2587 = vmul.f32 %v2509, 1.442695
          %v2588 = vpow.pop %v2587
          %v2589 = vmul.f32 %v2510, 1.442695
          %v2590 = vpow.pop %v2589
          %v2591 = vmul.f32 %v2511, 1.442695
          %v2592 = vpow.pop %v2591
          %v2593 = vmul.f32 %v2512, 1.442695
          %v2594 = vpow.pop %v2593
          %v2595 = vmul.f32 %v2513, 1.442695
          %v2596 = vpow.pop %v2595
          %v2597 = vmul.f32 %v2514, 1.442695
          %v2598 = vpow.pop %v2597
          %v2599 = vmul.f32 %v2515, 1.442695
          %v2600 = vpow.pop %v2599
          %v2601 = vmul.f32 %v2516, 1.442695
          %v2602 = vpow.pop %v2601
          %v2603 = vmul.f32 %v2517, 1.442695
          %v2604 = vpow.pop %v2603
          %v2605 = vmul.f32 %v2518, 1.442695
          %v2606 = vpow.pop %v2605
          %v2607 = vmul.f32 %v2519, 1.442695
          %v2608 = vpow.pop %v2607
          %v2609 = vmul.f32 %v2520, 1.442695
          %v2610 = vpow.pop %v2609
          %v2611 = vmul.f32 %v2521, 1.442695
          %v2612 = vpow.pop %v2611
          %v2613 = vmul.f32 %v2522, 1.442695
          %v2614 = vpow.pop %v2613
          %v2615 = vmul.f32 %v2523, 1.442695
          %v2616 = vpow.pop %v2615
          %v2617 = vmul.f32 %v2524, 1.442695
          %v2618 = vpow.pop %v2617
          %v2619 = vmul.f32 %v2525, 1.442695
          %v2620 = vpow.pop %v2619
          %v2621 = vmul.f32 %v2526, 1.442695
          %v2622 = vpow.pop %v2621
          %v2623 = vmul.f32 %v2527, 1.442695
          %v2624 = vpow.pop %v2623
          %v2625 = vmul.f32 %v2528, 1.442695
          %v2626 = vpow.pop %v2625
          %v2627 = vmul.f32 %v2529, 1.442695
          %v2628 = vpow.pop %v2627
          %v2629 = vmul.f32 %v2530, 1.442695
          %v2630 = vpow.pop %v2629
          %v2631 = vmul.f32 %v2531, 1.442695
          %v2632 = vpow.pop %v2631
          %v2633 = vmul.f32 %v2532, 1.442695
          %v2634 = vpow.pop %v2633
          %v2635 = vmul.f32 %v2533, 1.442695
          %v2636 = vpow.pop %v2635
          %v2637 = vmul.f32 %v2534, 1.442695
          %v2638 = vpow.pop %v2637
          %v2639 = vmul.f32 %v2535, 1.442695
          %v2640 = vpow.pop %v2639
          %v2641 = vmul.f32 %v2536, 1.442695
          %v2642 = vpow.pop %v2641
          %v2643 = vmul.f32 %v2537, 1.442695
          %v2644 = vpow.pop %v2643
          %v2645 = vmul.f32 %v2538, 1.442695
          %v2646 = vpow.pop %v2645
          %v2647 = vmul.f32 %v2539, 1.442695
          %v2648 = vpow.pop %v2647
          %v2649 = vmul.f32 %v2540, 1.442695
          %v2650 = vpow.pop %v2649
          %v2651 = vmul.f32 %v2541, 1.442695
          %v2652 = vpow.pop %v2651
          %v2653 = vmul.f32 %v2542, 1.442695
          %v2654 = vpow.pop %v2653
          %v2655 = vmul.f32 %v2543, 1.442695
          %v2656 = vpow.pop %v2655
          %v2657 = vmul.f32 %v2544, 1.442695
          %v2658 = vpow.pop %v2657
          %v2659 = vmul.f32 %v2545, 1.442695
          %v2660 = vpow.pop %v2659
          %v2661 = vmul.f32 %v2546, 1.442695
          %v2662 = vpow.pop %v2661
          %v2663 = vmul.f32 %v2547, 1.442695
          %v2664 = vpow.pop %v2663
          %v2665 = vmul.f32 %v2548, 1.442695
          %v2666 = vpow.pop %v2665
          %v2667 = vmul.f32 %v2549, 1.442695
          %v2668 = vpow.pop %v2667
          %v2669 = vmul.f32 %v2550, 1.442695
          %v2670 = vpow.pop %v2669
          %v2671 = vmul.f32 %v2551, 1.442695
          %v2672 = vpow.pop %v2671
          %v2673 = vmul.f32 %v2552, 1.442695
          %v2674 = vpow.pop %v2673
          %v2675 = vmul.f32 %v2553, 1.442695
          %v2676 = vpow.pop %v2675
          %v2677 = vmul.f32 %v2554, 1.442695
          %v2678 = vpow.pop %v2677
          %v2679 = vmul.f32 %v2555, 1.442695
          %v2680 = vpow.pop %v2679
          %v2681 = vmul.f32 %v2556, 1.442695
          %v2682 = vpow.pop %v2681
          %v2683 = vmul.f32 %v2557, 1.442695
          %v2684 = vpow.pop %v2683
          %v2685 = vmul.f32 %v2558, 1.442695
          %v2686 = vpow.pop %v2685
          %v2687 = vmul.f32 %v2492, %v2076
          %v2688 = vmul.f32 %v2494, %v2077
          %v2689 = vadd.f32 %v2560, %v2564
          %v2690 = vadd.f32 %v2689, %v2568
          %v2691 = vadd.f32 %v2690, %v2572
          %v2692 = vadd.f32 %v2691, %v2576
          %v2693 = vadd.f32 %v2692, %v2580
          %v2694 = vadd.f32 %v2693, %v2584
          %v2695 = vadd.f32 %v2694, %v2588
          %v2696 = vadd.f32 %v2695, %v2592
          %v2697 = vadd.f32 %v2696, %v2596
          %v2698 = vadd.f32 %v2697, %v2600
          %v2699 = vadd.f32 %v2698, %v2604
          %v2700 = vadd.f32 %v2699, %v2608
          %v2701 = vadd.f32 %v2700, %v2612
          %v2702 = vadd.f32 %v2701, %v2616
          %v2703 = vadd.f32 %v2702, %v2620
          %v2704 = vadd.f32 %v2703, %v2624
          %v2705 = vadd.f32 %v2704, %v2628
          %v2706 = vadd.f32 %v2705, %v2632
          %v2707 = vadd.f32 %v2706, %v2636
          %v2708 = vadd.f32 %v2707, %v2640
          %v2709 = vadd.f32 %v2708, %v2644
          %v2710 = vadd.f32 %v2709, %v2648
          %v2711 = vadd.f32 %v2710, %v2652
          %v2712 = vadd.f32 %v2711, %v2656
          %v2713 = vadd.f32 %v2712, %v2660
          %v2714 = vadd.f32 %v2713, %v2664
          %v2715 = vadd.f32 %v2714, %v2668
          %v2716 = vadd.f32 %v2715, %v2672
          %v2717 = vadd.f32 %v2716, %v2676
          %v2718 = vadd.f32 %v2717, %v2680
          %v2719 = vadd.f32 %v2718, %v2684
          %v2720 = vrot.slane %v2719, 4
          %v2721 = vadd.f32 %v2719, %v2720
          %v2722 = vrot.slane %v2721, 2
          %v2723 = vadd.f32 %v2721, %v2722
          %v2724 = vrot.slane %v2723, 1
          %v2725 = vadd.f32 %v2723, %v2724
          %v2726 = vadd.f32 %v2562, %v2566
          %v2727 = vadd.f32 %v2726, %v2570
          %v2728 = vadd.f32 %v2727, %v2574
          %v2729 = vadd.f32 %v2728, %v2578
          %v2730 = vadd.f32 %v2729, %v2582
          %v2731 = vadd.f32 %v2730, %v2586
          %v2732 = vadd.f32 %v2731, %v2590
          %v2733 = vadd.f32 %v2732, %v2594
          %v2734 = vadd.f32 %v2733, %v2598
          %v2735 = vadd.f32 %v2734, %v2602
          %v2736 = vadd.f32 %v2735, %v2606
          %v2737 = vadd.f32 %v2736, %v2610
          %v2738 = vadd.f32 %v2737, %v2614
          %v2739 = vadd.f32 %v2738, %v2618
          %v2740 = vadd.f32 %v2739, %v2622
          %v2741 = vadd.f32 %v2740, %v2626
          %v2742 = vadd.f32 %v2741, %v2630
          %v2743 = vadd.f32 %v2742, %v2634
          %v2744 = vadd.f32 %v2743, %v2638
          %v2745 = vadd.f32 %v2744, %v2642
          %v2746 = vadd.f32 %v2745, %v2646
          %v2747 = vadd.f32 %v2746, %v2650
          %v2748 = vadd.f32 %v2747, %v2654
          %v2749 = vadd.f32 %v2748, %v2658
          %v2750 = vadd.f32 %v2749, %v2662
          %v2751 = vadd.f32 %v2750, %v2666
          %v2752 = vadd.f32 %v2751, %v2670
          %v2753 = vadd.f32 %v2752, %v2674
          %v2754 = vadd.f32 %v2753, %v2678
          %v2755 = vadd.f32 %v2754, %v2682
          %v2756 = vadd.f32 %v2755, %v2686
          %v2757 = vrot.slane %v2756, 4
          %v2758 = vadd.f32 %v2756, %v2757
          %v2759 = vrot.slane %v2758, 2
          %v2760 = vadd.f32 %v2758, %v2759
          %v2761 = vrot.slane %v2760, 1
          %v2762 = vadd.f32 %v2760, %v2761
          %v2763 = vadd.f32 %v2687, %v2725
          %v2764 = vadd.f32 %v2688, %v2762
          %v2765 = vmul.f32 %v2492, %v2078
          %v2766 = vmul.f32 %v2494, %v2079
          %v2767 = vmul.f32 %v2492, %v2080
          %v2768 = vmul.f32 %v2494, %v2081
          %v2769 = vmul.f32 %v2492, %v2082
          %v2770 = vmul.f32 %v2494, %v2083
          %v2771 = vmul.f32 %v2492, %v2084
          %v2772 = vmul.f32 %v2494, %v2085
          %v2773 = vpack.c.bf16 %v2564, %v2560
          %v2774 = vpack.c.bf16 %v2566, %v2562
          %v2775 = vpack.c.bf16 %v2572, %v2568
          %v2776 = vpack.c.bf16 %v2574, %v2570
          %v2777 = vpack.c.bf16 %v2580, %v2576
          %v2778 = vpack.c.bf16 %v2582, %v2578
          %v2779 = vpack.c.bf16 %v2588, %v2584
          %v2780 = vpack.c.bf16 %v2590, %v2586
          %v2781 = vpack.c.bf16 %v2596, %v2592
          %v2782 = vpack.c.bf16 %v2598, %v2594
          %v2783 = vpack.c.bf16 %v2604, %v2600
          %v2784 = vpack.c.bf16 %v2606, %v2602
          %v2785 = vpack.c.bf16 %v2612, %v2608
          %v2786 = vpack.c.bf16 %v2614, %v2610
          %v2787 = vpack.c.bf16 %v2620, %v2616
          %v2788 = vpack.c.bf16 %v2622, %v2618
          %v2789 = vpack.c.bf16 %v2628, %v2624
          %v2790 = vpack.c.bf16 %v2630, %v2626
          %v2791 = vpack.c.bf16 %v2636, %v2632
          %v2792 = vpack.c.bf16 %v2638, %v2634
          %v2793 = vpack.c.bf16 %v2644, %v2640
          %v2794 = vpack.c.bf16 %v2646, %v2642
          %v2795 = vpack.c.bf16 %v2652, %v2648
          %v2796 = vpack.c.bf16 %v2654, %v2650
          %v2797 = vpack.c.bf16 %v2660, %v2656
          %v2798 = vpack.c.bf16 %v2662, %v2658
          %v2799 = vpack.c.bf16 %v2668, %v2664
          %v2800 = vpack.c.bf16 %v2670, %v2666
          %v2801 = vpack.c.bf16 %v2676, %v2672
          %v2802 = vpack.c.bf16 %v2678, %v2674
          %v2803 = vpack.c.bf16 %v2684, %v2680
          %v2804 = vpack.c.bf16 %v2686, %v2682
          %v2809 = vunpack.c.l.b16 %v2095
          %v2810 = vunpack.c.h.b16 %v2095
          %v2811 = vunpack.c.l.b16 %v2096
          %v2812 = vunpack.c.h.b16 %v2096
          %v2813 = vunpack.c.l.b16 %v2097
          %v2814 = vunpack.c.h.b16 %v2097
          %v2815 = vunpack.c.l.b16 %v2098
          %v2816 = vunpack.c.h.b16 %v2098
          %v2817 = vpack.c.b16 %v2811, %v2809
          %v2818 = vpack.c.b16 %v2812, %v2810
          %v2819 = vpack.c.b16 %v2815, %v2813
          %v2820 = vpack.c.b16 %v2816, %v2814
          %2825 = vmatprep.subr.bf16.mxu0 %v2788
          %2826 = vmatpush1.bf16.msra.mxu0 %v2787
          %2827 = vmatprep.subr.bf16.mxu0 %v2786
          %2828 = vmatpush1.bf16.msra.mxu0 %v2785
          %2829 = vmatprep.subr.bf16.mxu0 %v2784
          %2830 = vmatpush1.bf16.msra.mxu0 %v2783
          %2831 = vmatprep.subr.bf16.mxu0 %v2782
          %2832 = vmatpush1.bf16.msra.mxu0 %v2781
          %2833 = vmatprep.subr.bf16.mxu0 %v2780
          %2834 = vmatpush1.bf16.msra.mxu0 %v2779
          %2835 = vmatprep.subr.bf16.mxu0 %v2778
          %2836 = vmatpush1.bf16.msra.mxu0 %v2777
          %2837 = vmatprep.subr.bf16.mxu0 %v2776
          %2838 = vmatpush1.bf16.msra.mxu0 %v2775
          %2839 = vmatprep.subr.bf16.mxu0 %v2774
          %2840 = vmatpush1.bf16.msra.mxu0 %v2773
          %2841 = vmatprep.subr.bf16.mxu0 %v2804
          %2842 = vmatpush2.bf16.msra.mxu0 %v2803
          %2843 = vmatprep.subr.bf16.mxu0 %v2802
          %2844 = vmatpush2.bf16.msra.mxu0 %v2801
          %2845 = vmatprep.subr.bf16.mxu0 %v2800
          %2846 = vmatpush2.bf16.msra.mxu0 %v2799
          %2847 = vmatprep.subr.bf16.mxu0 %v2798
          %2848 = vmatpush2.bf16.msra.mxu0 %v2797
          %2849 = vmatprep.subr.bf16.mxu0 %v2796
          %2850 = vmatpush2.bf16.msra.mxu0 %v2795
          %2851 = vmatprep.subr.bf16.mxu0 %v2794
          %2852 = vmatpush2.bf16.msra.mxu0 %v2793
          %2853 = vmatprep.subr.bf16.mxu0 %v2792
          %2854 = vmatpush2.bf16.msra.mxu0 %v2791
          %2855 = vmatprep.subr.bf16.mxu0 %v2790
          %2856 = vmatpush2.bf16.msra.mxu0 %v2789
          %2857 = vmatprep.mubr.bf16.mxu0 %v2818
          %2858 = vmatmul.mubr.bf16.gmra.mxu0 %v2817
          %v2859 = vpop.f32.mrf.mxu0
          %v2860 = vadd.f32 0.0, %v2859
          %v2861 = vpop.f32.mrf.mxu0
          %v2862 = vadd.f32 0.0, %v2861
          %v2863 = vpop.f32.mrf.mxu0
          %v2864 = vadd.f32 0.0, %v2863
          %v2865 = vpop.f32.mrf.mxu0
          %v2866 = vadd.f32 0.0, %v2865
          %2867 = vmatprep.mubr.bf16.mxu0 %v2820
          %2868 = vmatmul.mubr.bf16.gmra.mxu0 %v2819
          %v2869 = vpop.f32.mrf.mxu0
          %v2870 = vadd.f32 0.0, %v2869
          %v2871 = vpop.f32.mrf.mxu0
          %v2872 = vadd.f32 0.0, %v2871
          %v2873 = vpop.f32.mrf.mxu0
          %v2874 = vadd.f32 0.0, %v2873
          %v2875 = vpop.f32.mrf.mxu0
          %v2876 = vadd.f32 0.0, %v2875
          %2877 = vdwg.mxu0
          %v2878 = vadd.f32 %v2765, %v2860
          %v2879 = vadd.f32 %v2766, %v2862
          %v2880 = vadd.f32 %v2767, %v2864
          %v2881 = vadd.f32 %v2768, %v2866
          %v2882 = vadd.f32 %v2769, %v2870
          %v2883 = vadd.f32 %v2770, %v2872
          %v2884 = vadd.f32 %v2771, %v2874
          %v2885 = vadd.f32 %v2772, %v2876
        $region59: #{tpu_custom_call.1} parent=35 // loop_footer
          %s2073 = sadd.s32 1, %s2069
        $region60: #{tpu_custom_call.1} parent=35 // loop_footer_branch
          %2068 = sbr.rel target = $region56
        $region61: #{tpu_custom_call.1} parent=35 // loop_exit
          _
        %v2886 = vrcp.pop %v2076
        %v2887 = vrcp.pop %v2077
        %v2888 = vmul.f32 %v2076, %v2886
        %v2889 = vmul.f32 %v2077, %v2887
        %v2890 = vsub.f32 2.0, %v2888
        %v2891 = vsub.f32 2.0, %v2889
        %v2892 = vmul.f32 %v2886, %v2890
        %v2893 = vmul.f32 %v2887, %v2891
        %v2894 = vmul.f32 %v2078, %v2892
        %v2895 = vmul.f32 %v2079, %v2893
        %v2896 = vmul.f32 %v2080, %v2892
        %v2897 = vmul.f32 %v2081, %v2893
        %v2898 = vmul.f32 %v2082, %v2892
        %v2899 = vmul.f32 %v2083, %v2893
        %v2900 = vmul.f32 %v2084, %v2892
        %v2901 = vmul.f32 %v2085, %v2893
        %2902 = vst [vmem:[#allocation4 + $0x40] sm:$0xff] %v2894
        %2903 = vst [vmem:[#allocation4 + $0x48] sm:$0xff] %v2895
        %2904 = vst [vmem:[#allocation4 + $0x50] sm:$0xff] %v2896
        %2905 = vst [vmem:[#allocation4 + $0x58] sm:$0xff] %v2897
        %2906 = vst [vmem:[#allocation4 + $0x60] sm:$0xff] %v2898
        %2907 = vst [vmem:[#allocation4 + $0x68] sm:$0xff] %v2899
        %2908 = vst [vmem:[#allocation4 + $0x70] sm:$0xff] %v2900
        %2909 = vst [vmem:[#allocation4 + $0x78] sm:$0xff] %v2901
        %v2910 = vld [vmem:[#allocation2 + $0x40] sm:$0xff]
        %v2911 = vld [vmem:[#allocation2 + $0x48] sm:$0xff]
        %v2912 = vld [vmem:[#allocation2 + $0x50] sm:$0xff]
        %v2913 = vld [vmem:[#allocation2 + $0x58] sm:$0xff]
        loop: start=0, step=1, limit=4
        $region62: #{tpu_custom_call.1} parent=35 // loop_pre_header
          _
        $region63: #{tpu_custom_call.1} parent=35 // loop_header
          %s2915 = sphi 0, %s2919
          %p2916 = scmp.ge.s32.totalorder %s2915, 4
          %v2920 = vphi -inf, %v3333
          %v2921 = vphi -inf, %v3334
          %v2922 = vphi 0.0, %v3609
          %v2923 = vphi 0.0, %v3610
          %v2924 = vphi 0.0, %v3724
          %v2925 = vphi 0.0, %v3725
          %v2926 = vphi 0.0, %v3726
          %v2927 = vphi 0.0, %v3727
          %v2928 = vphi 0.0, %v3728
          %v2929 = vphi 0.0, %v3729
          %v2930 = vphi 0.0, %v3730
          %v2931 = vphi 0.0, %v3731
        $region64: #{tpu_custom_call.1} parent=35 // loop_header_branch
          %2918 = sbr.rel (%p2916) target = $region68
        $region65: #{tpu_custom_call.1} parent=35 // loop_body
          %s2932 = smul.u32 %s2915, 256
          %s2933 = sshra.s32 %s2932, 7
          %s2934 = sand.u32 %s2932, 127
          %s2935 = smul.addr %s2933, 4
          %s2936 = scalar_lea.vmem [#allocation3], %s2935
          %v2937 = vld [vmem:[%s2936 + $0x100] sm:$0xff]
          %v2938 = vld [vmem:[%s2936 + $0x120] sm:$0xff]
          %v2939 = vld [vmem:[%s2936 + $0x140] sm:$0xff]
          %v2940 = vld [vmem:[%s2936 + $0x160] sm:$0xff]
          %v2941 = vld [vmem:[%s2936 + $0x300] sm:$0xff]
          %v2942 = vld [vmem:[%s2936 + $0x320] sm:$0xff]
          %v2943 = vld [vmem:[%s2936 + $0x340] sm:$0xff]
          %v2944 = vld [vmem:[%s2936 + $0x360] sm:$0xff]
          %v2949 = vunpack.c.l.b16 %v2937
          %v2950 = vunpack.c.h.b16 %v2937
          %v2951 = vunpack.c.l.b16 %v2938
          %v2952 = vunpack.c.h.b16 %v2938
          %v2953 = vunpack.c.l.b16 %v2939
          %v2954 = vunpack.c.h.b16 %v2939
          %v2955 = vunpack.c.l.b16 %v2940
          %v2956 = vunpack.c.h.b16 %v2940
          %v2957 = vpack.c.b16 %v2951, %v2949
          %v2958 = vpack.c.b16 %v2952, %v2950
          %v2959 = vpack.c.b16 %v2955, %v2953
          %v2960 = vpack.c.b16 %v2956, %v2954
          %2965 = vxpose.xlu0.c.b16.start [1/8] %v2957, 128
          %2966 = vxpose.xlu0.c.b16.cont [2/8] %v2959, 128
          %2967 = vxpose.xlu0.c.b16.cont [3/8] 0, 128
          %2968 = vxpose.xlu0.c.b16.cont [4/8] 0, 128
          %2969 = vxpose.xlu0.c.b16.cont [5/8] 0, 128
          %2970 = vxpose.xlu0.c.b16.cont [6/8] 0, 128
          %2971 = vxpose.xlu0.c.b16.cont [7/8] 0, 128
          %2972 = vxpose.xlu0.c.b16.end [8/8] 0, 128
          %v2973 = vpop.trf.xlu0
          %v2974 = vpop.trf.xlu0
          %v2975 = vpop.trf.xlu0
          %v2976 = vpop.trf.xlu0
          %v2977 = vpop.trf.xlu0
          %v2978 = vpop.trf.xlu0
          %v2979 = vpop.trf.xlu0
          %v2980 = vpop.trf.xlu0
          %2981 = vxpose.xlu0.c.b16.start [1/8] %v2958, 128
          %2982 = vxpose.xlu0.c.b16.cont [2/8] %v2960, 128
          %2983 = vxpose.xlu0.c.b16.cont [3/8] 0, 128
          %2984 = vxpose.xlu0.c.b16.cont [4/8] 0, 128
          %2985 = vxpose.xlu0.c.b16.cont [5/8] 0, 128
          %2986 = vxpose.xlu0.c.b16.cont [6/8] 0, 128
          %2987 = vxpose.xlu0.c.b16.cont [7/8] 0, 128
          %2988 = vxpose.xlu0.c.b16.end [8/8] 0, 128
          %v2989 = vpop.trf.xlu0
          %v2990 = vpop.trf.xlu0
          %v2991 = vpop.trf.xlu0
          %v2992 = vpop.trf.xlu0
          %v2993 = vpop.trf.xlu0
          %v2994 = vpop.trf.xlu0
          %v2995 = vpop.trf.xlu0
          %v2996 = vpop.trf.xlu0
          %v3001 = vunpack.c.l.b16 %v2910
          %v3002 = vunpack.c.h.b16 %v2910
          %v3003 = vunpack.c.l.b16 %v2911
          %v3004 = vunpack.c.h.b16 %v2911
          %v3005 = vunpack.c.l.b16 %v2912
          %v3006 = vunpack.c.h.b16 %v2912
          %v3007 = vunpack.c.l.b16 %v2913
          %v3008 = vunpack.c.h.b16 %v2913
          %v3009 = vpack.c.b16 %v3003, %v3001
          %v3010 = vpack.c.b16 %v3004, %v3002
          %v3011 = vpack.c.b16 %v3007, %v3005
          %v3012 = vpack.c.b16 %v3008, %v3006
          %vm3017 = vcmask 261120
          %v3019 = vsel %vm3017, %v2973, 0
          %v3022 = vsel %vm3017, %v2974, 0
          %v3025 = vsel %vm3017, %v2975, 0
          %v3028 = vsel %vm3017, %v2976, 0
          %v3031 = vsel %vm3017, %v2977, 0
          %v3034 = vsel %vm3017, %v2978, 0
          %v3037 = vsel %vm3017, %v2979, 0
          %v3040 = vsel %vm3017, %v2980, 0
          %v3043 = vsel %vm3017, %v2989, 0
          %v3046 = vsel %vm3017, %v2990, 0
          %v3049 = vsel %vm3017, %v2991, 0
          %v3052 = vsel %vm3017, %v2992, 0
          %v3055 = vsel %vm3017, %v2993, 0
          %v3058 = vsel %vm3017, %v2994, 0
          %v3061 = vsel %vm3017, %v2995, 0
          %v3064 = vsel %vm3017, %v2996, 0
          %3066 = vmatprep.subr.bf16.mxu0 0
          %3067 = vmatpush1.bf16.msra.mxu0 0
          %3068 = vmatprep.subr.bf16.mxu0 0
          %3069 = vmatpush1.bf16.msra.mxu0 0
          %3070 = vmatprep.subr.bf16.mxu0 0
          %3071 = vmatpush1.bf16.msra.mxu0 0
          %3072 = vmatprep.subr.bf16.mxu0 0
          %3073 = vmatpush1.bf16.msra.mxu0 0
          %3074 = vmatprep.subr.bf16.mxu0 0
          %3075 = vmatpush1.bf16.msra.mxu0 0
          %3076 = vmatprep.subr.bf16.mxu0 0
          %3077 = vmatpush1.bf16.msra.mxu0 0
          %3078 = vmatprep.subr.bf16.mxu0 %v3012
          %3079 = vmatpush1.bf16.msra.mxu0 %v3011
          %3080 = vmatprep.subr.bf16.mxu0 %v3010
          %3081 = vmatpush1.bf16.msra.mxu0 %v3009
          %3082 = vmatprep.subr.bf16.mxu0 0
          %3083 = vmatpush2.bf16.msra.mxu0 0
          %3084 = vmatprep.subr.bf16.mxu0 0
          %3085 = vmatpush2.bf16.msra.mxu0 0
          %3086 = vmatprep.subr.bf16.mxu0 0
          %3087 = vmatpush2.bf16.msra.mxu0 0
          %3088 = vmatprep.subr.bf16.mxu0 0
          %3089 = vmatpush2.bf16.msra.mxu0 0
          %3090 = vmatprep.subr.bf16.mxu0 0
          %3091 = vmatpush2.bf16.msra.mxu0 0
          %3092 = vmatprep.subr.bf16.mxu0 0
          %3093 = vmatpush2.bf16.msra.mxu0 0
          %3094 = vmatprep.subr.bf16.mxu0 0
          %3095 = vmatpush2.bf16.msra.mxu0 0
          %3096 = vmatprep.subr.bf16.mxu0 0
          %3097 = vmatpush2.bf16.msra.mxu0 0
          %3098 = vmatprep.mubr.bf16.mxu0 0
          %3099 = vmatmul.mubr.bf16.gmra.mxu0 %v3019
          %v3100 = vpop.f32.mrf.mxu0
          %v3101 = vadd.f32 0.0, %v3100
          %v3102 = vpop.f32.mrf.mxu0
          %v3103 = vadd.f32 0.0, %v3102
          %v3104 = vpop.f32.mrf.mxu0
          %v3105 = vadd.f32 0.0, %v3104
          %v3106 = vpop.f32.mrf.mxu0
          %v3107 = vadd.f32 0.0, %v3106
          %3108 = vmatprep.mubr.bf16.mxu0 0
          %3109 = vmatmul.mubr.bf16.gmra.mxu0 %v3022
          %v3110 = vpop.f32.mrf.mxu0
          %v3111 = vadd.f32 0.0, %v3110
          %v3112 = vpop.f32.mrf.mxu0
          %v3113 = vadd.f32 0.0, %v3112
          %v3114 = vpop.f32.mrf.mxu0
          %v3115 = vadd.f32 0.0, %v3114
          %v3116 = vpop.f32.mrf.mxu0
          %v3117 = vadd.f32 0.0, %v3116
          %3118 = vmatprep.mubr.bf16.mxu0 0
          %3119 = vmatmul.mubr.bf16.gmra.mxu0 %v3025
          %v3120 = vpop.f32.mrf.mxu0
          %v3121 = vadd.f32 0.0, %v3120
          %v3122 = vpop.f32.mrf.mxu0
          %v3123 = vadd.f32 0.0, %v3122
          %v3124 = vpop.f32.mrf.mxu0
          %v3125 = vadd.f32 0.0, %v3124
          %v3126 = vpop.f32.mrf.mxu0
          %v3127 = vadd.f32 0.0, %v3126
          %3128 = vmatprep.mubr.bf16.mxu0 0
          %3129 = vmatmul.mubr.bf16.gmra.mxu0 %v3028
          %v3130 = vpop.f32.mrf.mxu0
          %v3131 = vadd.f32 0.0, %v3130
          %v3132 = vpop.f32.mrf.mxu0
          %v3133 = vadd.f32 0.0, %v3132
          %v3134 = vpop.f32.mrf.mxu0
          %v3135 = vadd.f32 0.0, %v3134
          %v3136 = vpop.f32.mrf.mxu0
          %v3137 = vadd.f32 0.0, %v3136
          %3138 = vmatprep.mubr.bf16.mxu0 0
          %3139 = vmatmul.mubr.bf16.gmra.mxu0 %v3031
          %v3140 = vpop.f32.mrf.mxu0
          %v3141 = vadd.f32 0.0, %v3140
          %v3142 = vpop.f32.mrf.mxu0
          %v3143 = vadd.f32 0.0, %v3142
          %v3144 = vpop.f32.mrf.mxu0
          %v3145 = vadd.f32 0.0, %v3144
          %v3146 = vpop.f32.mrf.mxu0
          %v3147 = vadd.f32 0.0, %v3146
          %3148 = vmatprep.mubr.bf16.mxu0 0
          %3149 = vmatmul.mubr.bf16.gmra.mxu0 %v3034
          %v3150 = vpop.f32.mrf.mxu0
          %v3151 = vadd.f32 0.0, %v3150
          %v3152 = vpop.f32.mrf.mxu0
          %v3153 = vadd.f32 0.0, %v3152
          %v3154 = vpop.f32.mrf.mxu0
          %v3155 = vadd.f32 0.0, %v3154
          %v3156 = vpop.f32.mrf.mxu0
          %v3157 = vadd.f32 0.0, %v3156
          %3158 = vmatprep.mubr.bf16.mxu0 0
          %3159 = vmatmul.mubr.bf16.gmra.mxu0 %v3037
          %v3160 = vpop.f32.mrf.mxu0
          %v3161 = vadd.f32 0.0, %v3160
          %v3162 = vpop.f32.mrf.mxu0
          %v3163 = vadd.f32 0.0, %v3162
          %v3164 = vpop.f32.mrf.mxu0
          %v3165 = vadd.f32 0.0, %v3164
          %v3166 = vpop.f32.mrf.mxu0
          %v3167 = vadd.f32 0.0, %v3166
          %3168 = vmatprep.mubr.bf16.mxu0 0
          %3169 = vmatmul.mubr.bf16.gmra.mxu0 %v3040
          %v3170 = vpop.f32.mrf.mxu0
          %v3171 = vadd.f32 0.0, %v3170
          %v3172 = vpop.f32.mrf.mxu0
          %v3173 = vadd.f32 0.0, %v3172
          %v3174 = vpop.f32.mrf.mxu0
          %v3175 = vadd.f32 0.0, %v3174
          %v3176 = vpop.f32.mrf.mxu0
          %v3177 = vadd.f32 0.0, %v3176
          %3178 = vmatprep.mubr.bf16.mxu0 0
          %3179 = vmatmul.mubr.bf16.gmra.mxu0 %v3043
          %v3180 = vpop.f32.mrf.mxu0
          %v3181 = vadd.f32 0.0, %v3180
          %v3182 = vpop.f32.mrf.mxu0
          %v3183 = vadd.f32 0.0, %v3182
          %v3184 = vpop.f32.mrf.mxu0
          %v3185 = vadd.f32 0.0, %v3184
          %v3186 = vpop.f32.mrf.mxu0
          %v3187 = vadd.f32 0.0, %v3186
          %3188 = vmatprep.mubr.bf16.mxu0 0
          %3189 = vmatmul.mubr.bf16.gmra.mxu0 %v3046
          %v3190 = vpop.f32.mrf.mxu0
          %v3191 = vadd.f32 0.0, %v3190
          %v3192 = vpop.f32.mrf.mxu0
          %v3193 = vadd.f32 0.0, %v3192
          %v3194 = vpop.f32.mrf.mxu0
          %v3195 = vadd.f32 0.0, %v3194
          %v3196 = vpop.f32.mrf.mxu0
          %v3197 = vadd.f32 0.0, %v3196
          %3198 = vmatprep.mubr.bf16.mxu0 0
          %3199 = vmatmul.mubr.bf16.gmra.mxu0 %v3049
          %v3200 = vpop.f32.mrf.mxu0
          %v3201 = vadd.f32 0.0, %v3200
          %v3202 = vpop.f32.mrf.mxu0
          %v3203 = vadd.f32 0.0, %v3202
          %v3204 = vpop.f32.mrf.mxu0
          %v3205 = vadd.f32 0.0, %v3204
          %v3206 = vpop.f32.mrf.mxu0
          %v3207 = vadd.f32 0.0, %v3206
          %3208 = vmatprep.mubr.bf16.mxu0 0
          %3209 = vmatmul.mubr.bf16.gmra.mxu0 %v3052
          %v3210 = vpop.f32.mrf.mxu0
          %v3211 = vadd.f32 0.0, %v3210
          %v3212 = vpop.f32.mrf.mxu0
          %v3213 = vadd.f32 0.0, %v3212
          %v3214 = vpop.f32.mrf.mxu0
          %v3215 = vadd.f32 0.0, %v3214
          %v3216 = vpop.f32.mrf.mxu0
          %v3217 = vadd.f32 0.0, %v3216
          %3218 = vmatprep.mubr.bf16.mxu0 0
          %3219 = vmatmul.mubr.bf16.gmra.mxu0 %v3055
          %v3220 = vpop.f32.mrf.mxu0
          %v3221 = vadd.f32 0.0, %v3220
          %v3222 = vpop.f32.mrf.mxu0
          %v3223 = vadd.f32 0.0, %v3222
          %v3224 = vpop.f32.mrf.mxu0
          %v3225 = vadd.f32 0.0, %v3224
          %v3226 = vpop.f32.mrf.mxu0
          %v3227 = vadd.f32 0.0, %v3226
          %3228 = vmatprep.mubr.bf16.mxu0 0
          %3229 = vmatmul.mubr.bf16.gmra.mxu0 %v3058
          %v3230 = vpop.f32.mrf.mxu0
          %v3231 = vadd.f32 0.0, %v3230
          %v3232 = vpop.f32.mrf.mxu0
          %v3233 = vadd.f32 0.0, %v3232
          %v3234 = vpop.f32.mrf.mxu0
          %v3235 = vadd.f32 0.0, %v3234
          %v3236 = vpop.f32.mrf.mxu0
          %v3237 = vadd.f32 0.0, %v3236
          %3238 = vmatprep.mubr.bf16.mxu0 0
          %3239 = vmatmul.mubr.bf16.gmra.mxu0 %v3061
          %v3240 = vpop.f32.mrf.mxu0
          %v3241 = vadd.f32 0.0, %v3240
          %v3242 = vpop.f32.mrf.mxu0
          %v3243 = vadd.f32 0.0, %v3242
          %v3244 = vpop.f32.mrf.mxu0
          %v3245 = vadd.f32 0.0, %v3244
          %v3246 = vpop.f32.mrf.mxu0
          %v3247 = vadd.f32 0.0, %v3246
          %3248 = vmatprep.mubr.bf16.mxu0 0
          %3249 = vmatmul.mubr.bf16.gmra.mxu0 %v3064
          %v3250 = vpop.f32.mrf.mxu0
          %v3251 = vadd.f32 0.0, %v3250
          %v3252 = vpop.f32.mrf.mxu0
          %v3253 = vadd.f32 0.0, %v3252
          %v3254 = vpop.f32.mrf.mxu0
          %v3255 = vadd.f32 0.0, %v3254
          %v3256 = vpop.f32.mrf.mxu0
          %v3257 = vadd.f32 0.0, %v3256
          %3258 = vdwg.mxu0
          %v3259 = vmax.f32 %v3101, %v3111
          %v3260 = vmax.f32 %v3105, %v3115
          %v3261 = vmax.f32 %v3259, %v3121
          %v3262 = vmax.f32 %v3260, %v3125
          %v3263 = vmax.f32 %v3261, %v3131
          %v3264 = vmax.f32 %v3262, %v3135
          %v3265 = vmax.f32 %v3263, %v3141
          %v3266 = vmax.f32 %v3264, %v3145
          %v3267 = vmax.f32 %v3265, %v3151
          %v3268 = vmax.f32 %v3266, %v3155
          %v3269 = vmax.f32 %v3267, %v3161
          %v3270 = vmax.f32 %v3268, %v3165
          %v3271 = vmax.f32 %v3269, %v3171
          %v3272 = vmax.f32 %v3270, %v3175
          %v3273 = vmax.f32 %v3271, %v3181
          %v3274 = vmax.f32 %v3272, %v3185
          %v3275 = vmax.f32 %v3273, %v3191
          %v3276 = vmax.f32 %v3274, %v3195
          %v3277 = vmax.f32 %v3275, %v3201
          %v3278 = vmax.f32 %v3276, %v3205
          %v3279 = vmax.f32 %v3277, %v3211
          %v3280 = vmax.f32 %v3278, %v3215
          %v3281 = vmax.f32 %v3279, %v3221
          %v3282 = vmax.f32 %v3280, %v3225
          %v3283 = vmax.f32 %v3281, %v3231
          %v3284 = vmax.f32 %v3282, %v3235
          %v3285 = vmax.f32 %v3283, %v3241
          %v3286 = vmax.f32 %v3284, %v3245
          %v3287 = vmax.f32 %v3285, %v3251
          %v3288 = vmax.f32 %v3286, %v3255
          %v3289 = vmax.f32 %v3287, %v3288
          %v3290 = vrot.slane %v3289, 4
          %v3291 = vmax.f32 %v3289, %v3290
          %v3292 = vrot.slane %v3291, 2
          %v3293 = vmax.f32 %v3291, %v3292
          %v3294 = vrot.slane %v3293, 1
          %v3295 = vmax.f32 %v3293, %v3294
          %v3296 = vmax.f32 %v3103, %v3113
          %v3297 = vmax.f32 %v3107, %v3117
          %v3298 = vmax.f32 %v3296, %v3123
          %v3299 = vmax.f32 %v3297, %v3127
          %v3300 = vmax.f32 %v3298, %v3133
          %v3301 = vmax.f32 %v3299, %v3137
          %v3302 = vmax.f32 %v3300, %v3143
          %v3303 = vmax.f32 %v3301, %v3147
          %v3304 = vmax.f32 %v3302, %v3153
          %v3305 = vmax.f32 %v3303, %v3157
          %v3306 = vmax.f32 %v3304, %v3163
          %v3307 = vmax.f32 %v3305, %v3167
          %v3308 = vmax.f32 %v3306, %v3173
          %v3309 = vmax.f32 %v3307, %v3177
          %v3310 = vmax.f32 %v3308, %v3183
          %v3311 = vmax.f32 %v3309, %v3187
          %v3312 = vmax.f32 %v3310, %v3193
          %v3313 = vmax.f32 %v3311, %v3197
          %v3314 = vmax.f32 %v3312, %v3203
          %v3315 = vmax.f32 %v3313, %v3207
          %v3316 = vmax.f32 %v3314, %v3213
          %v3317 = vmax.f32 %v3315, %v3217
          %v3318 = vmax.f32 %v3316, %v3223
          %v3319 = vmax.f32 %v3317, %v3227
          %v3320 = vmax.f32 %v3318, %v3233
          %v3321 = vmax.f32 %v3319, %v3237
          %v3322 = vmax.f32 %v3320, %v3243
          %v3323 = vmax.f32 %v3321, %v3247
          %v3324 = vmax.f32 %v3322, %v3253
          %v3325 = vmax.f32 %v3323, %v3257
          %v3326 = vmax.f32 %v3324, %v3325
          %v3327 = vrot.slane %v3326, 4
          %v3328 = vmax.f32 %v3326, %v3327
          %v3329 = vrot.slane %v3328, 2
          %v3330 = vmax.f32 %v3328, %v3329
          %v3331 = vrot.slane %v3330, 1
          %v3332 = vmax.f32 %v3330, %v3331
          %v3333 = vmax.f32 %v2920, %v3295
          %v3334 = vmax.f32 %v2921, %v3332
          %v3335 = vsub.f32 %v2920, %v3333
          %v3336 = vsub.f32 %v2921, %v3334
          %v3337 = vmul.f32 %v3335, 1.442695
          %v3338 = vpow.pop %v3337
          %v3339 = vmul.f32 %v3336, 1.442695
          %v3340 = vpow.pop %v3339
          %v3341 = vsub.f32 %v3101, %v3333
          %v3342 = vsub.f32 %v3103, %v3334
          %v3343 = vsub.f32 %v3105, %v3333
          %v3344 = vsub.f32 %v3107, %v3334
          %v3345 = vsub.f32 %v3111, %v3333
          %v3346 = vsub.f32 %v3113, %v3334
          %v3347 = vsub.f32 %v3115, %v3333
          %v3348 = vsub.f32 %v3117, %v3334
          %v3349 = vsub.f32 %v3121, %v3333
          %v3350 = vsub.f32 %v3123, %v3334
          %v3351 = vsub.f32 %v3125, %v3333
          %v3352 = vsub.f32 %v3127, %v3334
          %v3353 = vsub.f32 %v3131, %v3333
          %v3354 = vsub.f32 %v3133, %v3334
          %v3355 = vsub.f32 %v3135, %v3333
          %v3356 = vsub.f32 %v3137, %v3334
          %v3357 = vsub.f32 %v3141, %v3333
          %v3358 = vsub.f32 %v3143, %v3334
          %v3359 = vsub.f32 %v3145, %v3333
          %v3360 = vsub.f32 %v3147, %v3334
          %v3361 = vsub.f32 %v3151, %v3333
          %v3362 = vsub.f32 %v3153, %v3334
          %v3363 = vsub.f32 %v3155, %v3333
          %v3364 = vsub.f32 %v3157, %v3334
          %v3365 = vsub.f32 %v3161, %v3333
          %v3366 = vsub.f32 %v3163, %v3334
          %v3367 = vsub.f32 %v3165, %v3333
          %v3368 = vsub.f32 %v3167, %v3334
          %v3369 = vsub.f32 %v3171, %v3333
          %v3370 = vsub.f32 %v3173, %v3334
          %v3371 = vsub.f32 %v3175, %v3333
          %v3372 = vsub.f32 %v3177, %v3334
          %v3373 = vsub.f32 %v3181, %v3333
          %v3374 = vsub.f32 %v3183, %v3334
          %v3375 = vsub.f32 %v3185, %v3333
          %v3376 = vsub.f32 %v3187, %v3334
          %v3377 = vsub.f32 %v3191, %v3333
          %v3378 = vsub.f32 %v3193, %v3334
          %v3379 = vsub.f32 %v3195, %v3333
          %v3380 = vsub.f32 %v3197, %v3334
          %v3381 = vsub.f32 %v3201, %v3333
          %v3382 = vsub.f32 %v3203, %v3334
          %v3383 = vsub.f32 %v3205, %v3333
          %v3384 = vsub.f32 %v3207, %v3334
          %v3385 = vsub.f32 %v3211, %v3333
          %v3386 = vsub.f32 %v3213, %v3334
          %v3387 = vsub.f32 %v3215, %v3333
          %v3388 = vsub.f32 %v3217, %v3334
          %v3389 = vsub.f32 %v3221, %v3333
          %v3390 = vsub.f32 %v3223, %v3334
          %v3391 = vsub.f32 %v3225, %v3333
          %v3392 = vsub.f32 %v3227, %v3334
          %v3393 = vsub.f32 %v3231, %v3333
          %v3394 = vsub.f32 %v3233, %v3334
          %v3395 = vsub.f32 %v3235, %v3333
          %v3396 = vsub.f32 %v3237, %v3334
          %v3397 = vsub.f32 %v3241, %v3333
          %v3398 = vsub.f32 %v3243, %v3334
          %v3399 = vsub.f32 %v3245, %v3333
          %v3400 = vsub.f32 %v3247, %v3334
          %v3401 = vsub.f32 %v3251, %v3333
          %v3402 = vsub.f32 %v3253, %v3334
          %v3403 = vsub.f32 %v3255, %v3333
          %v3404 = vsub.f32 %v3257, %v3334
          %v3405 = vmul.f32 %v3341, 1.442695
          %v3406 = vpow.pop %v3405
          %v3407 = vmul.f32 %v3342, 1.442695
          %v3408 = vpow.pop %v3407
          %v3409 = vmul.f32 %v3343, 1.442695
          %v3410 = vpow.pop %v3409
          %v3411 = vmul.f32 %v3344, 1.442695
          %v3412 = vpow.pop %v3411
          %v3413 = vmul.f32 %v3345, 1.442695
          %v3414 = vpow.pop %v3413
          %v3415 = vmul.f32 %v3346, 1.442695
          %v3416 = vpow.pop %v3415
          %v3417 = vmul.f32 %v3347, 1.442695
          %v3418 = vpow.pop %v3417
          %v3419 = vmul.f32 %v3348, 1.442695
          %v3420 = vpow.pop %v3419
          %v3421 = vmul.f32 %v3349, 1.442695
          %v3422 = vpow.pop %v3421
          %v3423 = vmul.f32 %v3350, 1.442695
          %v3424 = vpow.pop %v3423
          %v3425 = vmul.f32 %v3351, 1.442695
          %v3426 = vpow.pop %v3425
          %v3427 = vmul.f32 %v3352, 1.442695
          %v3428 = vpow.pop %v3427
          %v3429 = vmul.f32 %v3353, 1.442695
          %v3430 = vpow.pop %v3429
          %v3431 = vmul.f32 %v3354, 1.442695
          %v3432 = vpow.pop %v3431
          %v3433 = vmul.f32 %v3355, 1.442695
          %v3434 = vpow.pop %v3433
          %v3435 = vmul.f32 %v3356, 1.442695
          %v3436 = vpow.pop %v3435
          %v3437 = vmul.f32 %v3357, 1.442695
          %v3438 = vpow.pop %v3437
          %v3439 = vmul.f32 %v3358, 1.442695
          %v3440 = vpow.pop %v3439
          %v3441 = vmul.f32 %v3359, 1.442695
          %v3442 = vpow.pop %v3441
          %v3443 = vmul.f32 %v3360, 1.442695
          %v3444 = vpow.pop %v3443
          %v3445 = vmul.f32 %v3361, 1.442695
          %v3446 = vpow.pop %v3445
          %v3447 = vmul.f32 %v3362, 1.442695
          %v3448 = vpow.pop %v3447
          %v3449 = vmul.f32 %v3363, 1.442695
          %v3450 = vpow.pop %v3449
          %v3451 = vmul.f32 %v3364, 1.442695
          %v3452 = vpow.pop %v3451
          %v3453 = vmul.f32 %v3365, 1.442695
          %v3454 = vpow.pop %v3453
          %v3455 = vmul.f32 %v3366, 1.442695
          %v3456 = vpow.pop %v3455
          %v3457 = vmul.f32 %v3367, 1.442695
          %v3458 = vpow.pop %v3457
          %v3459 = vmul.f32 %v3368, 1.442695
          %v3460 = vpow.pop %v3459
          %v3461 = vmul.f32 %v3369, 1.442695
          %v3462 = vpow.pop %v3461
          %v3463 = vmul.f32 %v3370, 1.442695
          %v3464 = vpow.pop %v3463
          %v3465 = vmul.f32 %v3371, 1.442695
          %v3466 = vpow.pop %v3465
          %v3467 = vmul.f32 %v3372, 1.442695
          %v3468 = vpow.pop %v3467
          %v3469 = vmul.f32 %v3373, 1.442695
          %v3470 = vpow.pop %v3469
          %v3471 = vmul.f32 %v3374, 1.442695
          %v3472 = vpow.pop %v3471
          %v3473 = vmul.f32 %v3375, 1.442695
          %v3474 = vpow.pop %v3473
          %v3475 = vmul.f32 %v3376, 1.442695
          %v3476 = vpow.pop %v3475
          %v3477 = vmul.f32 %v3377, 1.442695
          %v3478 = vpow.pop %v3477
          %v3479 = vmul.f32 %v3378, 1.442695
          %v3480 = vpow.pop %v3479
          %v3481 = vmul.f32 %v3379, 1.442695
          %v3482 = vpow.pop %v3481
          %v3483 = vmul.f32 %v3380, 1.442695
          %v3484 = vpow.pop %v3483
          %v3485 = vmul.f32 %v3381, 1.442695
          %v3486 = vpow.pop %v3485
          %v3487 = vmul.f32 %v3382, 1.442695
          %v3488 = vpow.pop %v3487
          %v3489 = vmul.f32 %v3383, 1.442695
          %v3490 = vpow.pop %v3489
          %v3491 = vmul.f32 %v3384, 1.442695
          %v3492 = vpow.pop %v3491
          %v3493 = vmul.f32 %v3385, 1.442695
          %v3494 = vpow.pop %v3493
          %v3495 = vmul.f32 %v3386, 1.442695
          %v3496 = vpow.pop %v3495
          %v3497 = vmul.f32 %v3387, 1.442695
          %v3498 = vpow.pop %v3497
          %v3499 = vmul.f32 %v3388, 1.442695
          %v3500 = vpow.pop %v3499
          %v3501 = vmul.f32 %v3389, 1.442695
          %v3502 = vpow.pop %v3501
          %v3503 = vmul.f32 %v3390, 1.442695
          %v3504 = vpow.pop %v3503
          %v3505 = vmul.f32 %v3391, 1.442695
          %v3506 = vpow.pop %v3505
          %v3507 = vmul.f32 %v3392, 1.442695
          %v3508 = vpow.pop %v3507
          %v3509 = vmul.f32 %v3393, 1.442695
          %v3510 = vpow.pop %v3509
          %v3511 = vmul.f32 %v3394, 1.442695
          %v3512 = vpow.pop %v3511
          %v3513 = vmul.f32 %v3395, 1.442695
          %v3514 = vpow.pop %v3513
          %v3515 = vmul.f32 %v3396, 1.442695
          %v3516 = vpow.pop %v3515
          %v3517 = vmul.f32 %v3397, 1.442695
          %v3518 = vpow.pop %v3517
          %v3519 = vmul.f32 %v3398, 1.442695
          %v3520 = vpow.pop %v3519
          %v3521 = vmul.f32 %v3399, 1.442695
          %v3522 = vpow.pop %v3521
          %v3523 = vmul.f32 %v3400, 1.442695
          %v3524 = vpow.pop %v3523
          %v3525 = vmul.f32 %v3401, 1.442695
          %v3526 = vpow.pop %v3525
          %v3527 = vmul.f32 %v3402, 1.442695
          %v3528 = vpow.pop %v3527
          %v3529 = vmul.f32 %v3403, 1.442695
          %v3530 = vpow.pop %v3529
          %v3531 = vmul.f32 %v3404, 1.442695
          %v3532 = vpow.pop %v3531
          %v3533 = vmul.f32 %v3338, %v2922
          %v3534 = vmul.f32 %v3340, %v2923
          %v3535 = vadd.f32 %v3406, %v3410
          %v3536 = vadd.f32 %v3535, %v3414
          %v3537 = vadd.f32 %v3536, %v3418
          %v3538 = vadd.f32 %v3537, %v3422
          %v3539 = vadd.f32 %v3538, %v3426
          %v3540 = vadd.f32 %v3539, %v3430
          %v3541 = vadd.f32 %v3540, %v3434
          %v3542 = vadd.f32 %v3541, %v3438
          %v3543 = vadd.f32 %v3542, %v3442
          %v3544 = vadd.f32 %v3543, %v3446
          %v3545 = vadd.f32 %v3544, %v3450
          %v3546 = vadd.f32 %v3545, %v3454
          %v3547 = vadd.f32 %v3546, %v3458
          %v3548 = vadd.f32 %v3547, %v3462
          %v3549 = vadd.f32 %v3548, %v3466
          %v3550 = vadd.f32 %v3549, %v3470
          %v3551 = vadd.f32 %v3550, %v3474
          %v3552 = vadd.f32 %v3551, %v3478
          %v3553 = vadd.f32 %v3552, %v3482
          %v3554 = vadd.f32 %v3553, %v3486
          %v3555 = vadd.f32 %v3554, %v3490
          %v3556 = vadd.f32 %v3555, %v3494
          %v3557 = vadd.f32 %v3556, %v3498
          %v3558 = vadd.f32 %v3557, %v3502
          %v3559 = vadd.f32 %v3558, %v3506
          %v3560 = vadd.f32 %v3559, %v3510
          %v3561 = vadd.f32 %v3560, %v3514
          %v3562 = vadd.f32 %v3561, %v3518
          %v3563 = vadd.f32 %v3562, %v3522
          %v3564 = vadd.f32 %v3563, %v3526
          %v3565 = vadd.f32 %v3564, %v3530
          %v3566 = vrot.slane %v3565, 4
          %v3567 = vadd.f32 %v3565, %v3566
          %v3568 = vrot.slane %v3567, 2
          %v3569 = vadd.f32 %v3567, %v3568
          %v3570 = vrot.slane %v3569, 1
          %v3571 = vadd.f32 %v3569, %v3570
          %v3572 = vadd.f32 %v3408, %v3412
          %v3573 = vadd.f32 %v3572, %v3416
          %v3574 = vadd.f32 %v3573, %v3420
          %v3575 = vadd.f32 %v3574, %v3424
          %v3576 = vadd.f32 %v3575, %v3428
          %v3577 = vadd.f32 %v3576, %v3432
          %v3578 = vadd.f32 %v3577, %v3436
          %v3579 = vadd.f32 %v3578, %v3440
          %v3580 = vadd.f32 %v3579, %v3444
          %v3581 = vadd.f32 %v3580, %v3448
          %v3582 = vadd.f32 %v3581, %v3452
          %v3583 = vadd.f32 %v3582, %v3456
          %v3584 = vadd.f32 %v3583, %v3460
          %v3585 = vadd.f32 %v3584, %v3464
          %v3586 = vadd.f32 %v3585, %v3468
          %v3587 = vadd.f32 %v3586, %v3472
          %v3588 = vadd.f32 %v3587, %v3476
          %v3589 = vadd.f32 %v3588, %v3480
          %v3590 = vadd.f32 %v3589, %v3484
          %v3591 = vadd.f32 %v3590, %v3488
          %v3592 = vadd.f32 %v3591, %v3492
          %v3593 = vadd.f32 %v3592, %v3496
          %v3594 = vadd.f32 %v3593, %v3500
          %v3595 = vadd.f32 %v3594, %v3504
          %v3596 = vadd.f32 %v3595, %v3508
          %v3597 = vadd.f32 %v3596, %v3512
          %v3598 = vadd.f32 %v3597, %v3516
          %v3599 = vadd.f32 %v3598, %v3520
          %v3600 = vadd.f32 %v3599, %v3524
          %v3601 = vadd.f32 %v3600, %v3528
          %v3602 = vadd.f32 %v3601, %v3532
          %v3603 = vrot.slane %v3602, 4
          %v3604 = vadd.f32 %v3602, %v3603
          %v3605 = vrot.slane %v3604, 2
          %v3606 = vadd.f32 %v3604, %v3605
          %v3607 = vrot.slane %v3606, 1
          %v3608 = vadd.f32 %v3606, %v3607
          %v3609 = vadd.f32 %v3533, %v3571
          %v3610 = vadd.f32 %v3534, %v3608
          %v3611 = vmul.f32 %v3338, %v2924
          %v3612 = vmul.f32 %v3340, %v2925
          %v3613 = vmul.f32 %v3338, %v2926
          %v3614 = vmul.f32 %v3340, %v2927
          %v3615 = vmul.f32 %v3338, %v2928
          %v3616 = vmul.f32 %v3340, %v2929
          %v3617 = vmul.f32 %v3338, %v2930
          %v3618 = vmul.f32 %v3340, %v2931
          %v3619 = vpack.c.bf16 %v3410, %v3406
          %v3620 = vpack.c.bf16 %v3412, %v3408
          %v3621 = vpack.c.bf16 %v3418, %v3414
          %v3622 = vpack.c.bf16 %v3420, %v3416
          %v3623 = vpack.c.bf16 %v3426, %v3422
          %v3624 = vpack.c.bf16 %v3428, %v3424
          %v3625 = vpack.c.bf16 %v3434, %v3430
          %v3626 = vpack.c.bf16 %v3436, %v3432
          %v3627 = vpack.c.bf16 %v3442, %v3438
          %v3628 = vpack.c.bf16 %v3444, %v3440
          %v3629 = vpack.c.bf16 %v3450, %v3446
          %v3630 = vpack.c.bf16 %v3452, %v3448
          %v3631 = vpack.c.bf16 %v3458, %v3454
          %v3632 = vpack.c.bf16 %v3460, %v3456
          %v3633 = vpack.c.bf16 %v3466, %v3462
          %v3634 = vpack.c.bf16 %v3468, %v3464
          %v3635 = vpack.c.bf16 %v3474, %v3470
          %v3636 = vpack.c.bf16 %v3476, %v3472
          %v3637 = vpack.c.bf16 %v3482, %v3478
          %v3638 = vpack.c.bf16 %v3484, %v3480
          %v3639 = vpack.c.bf16 %v3490, %v3486
          %v3640 = vpack.c.bf16 %v3492, %v3488
          %v3641 = vpack.c.bf16 %v3498, %v3494
          %v3642 = vpack.c.bf16 %v3500, %v3496
          %v3643 = vpack.c.bf16 %v3506, %v3502
          %v3644 = vpack.c.bf16 %v3508, %v3504
          %v3645 = vpack.c.bf16 %v3514, %v3510
          %v3646 = vpack.c.bf16 %v3516, %v3512
          %v3647 = vpack.c.bf16 %v3522, %v3518
          %v3648 = vpack.c.bf16 %v3524, %v3520
          %v3649 = vpack.c.bf16 %v3530, %v3526
          %v3650 = vpack.c.bf16 %v3532, %v3528
          %v3655 = vunpack.c.l.b16 %v2941
          %v3656 = vunpack.c.h.b16 %v2941
          %v3657 = vunpack.c.l.b16 %v2942
          %v3658 = vunpack.c.h.b16 %v2942
          %v3659 = vunpack.c.l.b16 %v2943
          %v3660 = vunpack.c.h.b16 %v2943
          %v3661 = vunpack.c.l.b16 %v2944
          %v3662 = vunpack.c.h.b16 %v2944
          %v3663 = vpack.c.b16 %v3657, %v3655
          %v3664 = vpack.c.b16 %v3658, %v3656
          %v3665 = vpack.c.b16 %v3661, %v3659
          %v3666 = vpack.c.b16 %v3662, %v3660
          %3671 = vmatprep.subr.bf16.mxu0 %v3634
          %3672 = vmatpush1.bf16.msra.mxu0 %v3633
          %3673 = vmatprep.subr.bf16.mxu0 %v3632
          %3674 = vmatpush1.bf16.msra.mxu0 %v3631
          %3675 = vmatprep.subr.bf16.mxu0 %v3630
          %3676 = vmatpush1.bf16.msra.mxu0 %v3629
          %3677 = vmatprep.subr.bf16.mxu0 %v3628
          %3678 = vmatpush1.bf16.msra.mxu0 %v3627
          %3679 = vmatprep.subr.bf16.mxu0 %v3626
          %3680 = vmatpush1.bf16.msra.mxu0 %v3625
          %3681 = vmatprep.subr.bf16.mxu0 %v3624
          %3682 = vmatpush1.bf16.msra.mxu0 %v3623
          %3683 = vmatprep.subr.bf16.mxu0 %v3622
          %3684 = vmatpush1.bf16.msra.mxu0 %v3621
          %3685 = vmatprep.subr.bf16.mxu0 %v3620
          %3686 = vmatpush1.bf16.msra.mxu0 %v3619
          %3687 = vmatprep.subr.bf16.mxu0 %v3650
          %3688 = vmatpush2.bf16.msra.mxu0 %v3649
          %3689 = vmatprep.subr.bf16.mxu0 %v3648
          %3690 = vmatpush2.bf16.msra.mxu0 %v3647
          %3691 = vmatprep.subr.bf16.mxu0 %v3646
          %3692 = vmatpush2.bf16.msra.mxu0 %v3645
          %3693 = vmatprep.subr.bf16.mxu0 %v3644
          %3694 = vmatpush2.bf16.msra.mxu0 %v3643
          %3695 = vmatprep.subr.bf16.mxu0 %v3642
          %3696 = vmatpush2.bf16.msra.mxu0 %v3641
          %3697 = vmatprep.subr.bf16.mxu0 %v3640
          %3698 = vmatpush2.bf16.msra.mxu0 %v3639
          %3699 = vmatprep.subr.bf16.mxu0 %v3638
          %3700 = vmatpush2.bf16.msra.mxu0 %v3637
          %3701 = vmatprep.subr.bf16.mxu0 %v3636
          %3702 = vmatpush2.bf16.msra.mxu0 %v3635
          %3703 = vmatprep.mubr.bf16.mxu0 %v3664
          %3704 = vmatmul.mubr.bf16.gmra.mxu0 %v3663
          %v3705 = vpop.f32.mrf.mxu0
          %v3706 = vadd.f32 0.0, %v3705
          %v3707 = vpop.f32.mrf.mxu0
          %v3708 = vadd.f32 0.0, %v3707
          %v3709 = vpop.f32.mrf.mxu0
          %v3710 = vadd.f32 0.0, %v3709
          %v3711 = vpop.f32.mrf.mxu0
          %v3712 = vadd.f32 0.0, %v3711
          %3713 = vmatprep.mubr.bf16.mxu0 %v3666
          %3714 = vmatmul.mubr.bf16.gmra.mxu0 %v3665
          %v3715 = vpop.f32.mrf.mxu0
          %v3716 = vadd.f32 0.0, %v3715
          %v3717 = vpop.f32.mrf.mxu0
          %v3718 = vadd.f32 0.0, %v3717
          %v3719 = vpop.f32.mrf.mxu0
          %v3720 = vadd.f32 0.0, %v3719
          %v3721 = vpop.f32.mrf.mxu0
          %v3722 = vadd.f32 0.0, %v3721
          %3723 = vdwg.mxu0
          %v3724 = vadd.f32 %v3611, %v3706
          %v3725 = vadd.f32 %v3612, %v3708
          %v3726 = vadd.f32 %v3613, %v3710
          %v3727 = vadd.f32 %v3614, %v3712
          %v3728 = vadd.f32 %v3615, %v3716
          %v3729 = vadd.f32 %v3616, %v3718
          %v3730 = vadd.f32 %v3617, %v3720
          %v3731 = vadd.f32 %v3618, %v3722
        $region66: #{tpu_custom_call.1} parent=35 // loop_footer
          %s2919 = sadd.s32 1, %s2915
        $region67: #{tpu_custom_call.1} parent=35 // loop_footer_branch
          %2914 = sbr.rel target = $region63
        $region68: #{tpu_custom_call.1} parent=35 // loop_exit
          _
        %v3732 = vrcp.pop %v2922
        %v3733 = vrcp.pop %v2923
        %v3734 = vmul.f32 %v2922, %v3732
        %v3735 = vmul.f32 %v2923, %v3733
        %v3736 = vsub.f32 2.0, %v3734
        %v3737 = vsub.f32 2.0, %v3735
        %v3738 = vmul.f32 %v3732, %v3736
        %v3739 = vmul.f32 %v3733, %v3737
        %v3740 = vmul.f32 %v2924, %v3738
        %v3741 = vmul.f32 %v2925, %v3739
        %v3742 = vmul.f32 %v2926, %v3738
        %v3743 = vmul.f32 %v2927, %v3739
        %v3744 = vmul.f32 %v2928, %v3738
        %v3745 = vmul.f32 %v2929, %v3739
        %v3746 = vmul.f32 %v2930, %v3738
        %v3747 = vmul.f32 %v2931, %v3739
        %3748 = vst [vmem:[#allocation4 + $0x80] sm:$0xff] %v3740
        %3749 = vst [vmem:[#allocation4 + $0x88] sm:$0xff] %v3741
        %3750 = vst [vmem:[#allocation4 + $0x90] sm:$0xff] %v3742
        %3751 = vst [vmem:[#allocation4 + $0x98] sm:$0xff] %v3743
        %3752 = vst [vmem:[#allocation4 + $0xa0] sm:$0xff] %v3744
        %3753 = vst [vmem:[#allocation4 + $0xa8] sm:$0xff] %v3745
        %3754 = vst [vmem:[#allocation4 + $0xb0] sm:$0xff] %v3746
        %3755 = vst [vmem:[#allocation4 + $0xb8] sm:$0xff] %v3747
        %v3756 = vld [vmem:[#allocation2 + $0x60] sm:$0xff]
        %v3757 = vld [vmem:[#allocation2 + $0x68] sm:$0xff]
        %v3758 = vld [vmem:[#allocation2 + $0x70] sm:$0xff]
        %v3759 = vld [vmem:[#allocation2 + $0x78] sm:$0xff]
        loop: start=0, step=1, limit=4
        $region69: #{tpu_custom_call.1} parent=35 // loop_pre_header
          _
        $region70: #{tpu_custom_call.1} parent=35 // loop_header
          %s3761 = sphi 0, %s3765
          %p3762 = scmp.ge.s32.totalorder %s3761, 4
          %v3766 = vphi -inf, %v4179
          %v3767 = vphi -inf, %v4180
          %v3768 = vphi 0.0, %v4455
          %v3769 = vphi 0.0, %v4456
          %v3770 = vphi 0.0, %v4570
          %v3771 = vphi 0.0, %v4571
          %v3772 = vphi 0.0, %v4572
          %v3773 = vphi 0.0, %v4573
          %v3774 = vphi 0.0, %v4574
          %v3775 = vphi 0.0, %v4575
          %v3776 = vphi 0.0, %v4576
          %v3777 = vphi 0.0, %v4577
        $region71: #{tpu_custom_call.1} parent=35 // loop_header_branch
          %3764 = sbr.rel (%p3762) target = $region75
        $region72: #{tpu_custom_call.1} parent=35 // loop_body
          %s3778 = smul.u32 %s3761, 256
          %s3779 = sshra.s32 %s3778, 7
          %s3780 = sand.u32 %s3778, 127
          %s3781 = smul.addr %s3779, 4
          %s3782 = scalar_lea.vmem [#allocation3], %s3781
          %v3783 = vld [vmem:[%s3782 + $0x180] sm:$0xff]
          %v3784 = vld [vmem:[%s3782 + $0x1a0] sm:$0xff]
          %v3785 = vld [vmem:[%s3782 + $0x1c0] sm:$0xff]
          %v3786 = vld [vmem:[%s3782 + $0x1e0] sm:$0xff]
          %v3787 = vld [vmem:[%s3782 + $0x380] sm:$0xff]
          %v3788 = vld [vmem:[%s3782 + $0x3a0] sm:$0xff]
          %v3789 = vld [vmem:[%s3782 + $0x3c0] sm:$0xff]
          %v3790 = vld [vmem:[%s3782 + $0x3e0] sm:$0xff]
          %v3795 = vunpack.c.l.b16 %v3783
          %v3796 = vunpack.c.h.b16 %v3783
          %v3797 = vunpack.c.l.b16 %v3784
          %v3798 = vunpack.c.h.b16 %v3784
          %v3799 = vunpack.c.l.b16 %v3785
          %v3800 = vunpack.c.h.b16 %v3785
          %v3801 = vunpack.c.l.b16 %v3786
          %v3802 = vunpack.c.h.b16 %v3786
          %v3803 = vpack.c.b16 %v3797, %v3795
          %v3804 = vpack.c.b16 %v3798, %v3796
          %v3805 = vpack.c.b16 %v3801, %v3799
          %v3806 = vpack.c.b16 %v3802, %v3800
          %3811 = vxpose.xlu0.c.b16.start [1/8] %v3803, 128
          %3812 = vxpose.xlu0.c.b16.cont [2/8] %v3805, 128
          %3813 = vxpose.xlu0.c.b16.cont [3/8] 0, 128
          %3814 = vxpose.xlu0.c.b16.cont [4/8] 0, 128
          %3815 = vxpose.xlu0.c.b16.cont [5/8] 0, 128
          %3816 = vxpose.xlu0.c.b16.cont [6/8] 0, 128
          %3817 = vxpose.xlu0.c.b16.cont [7/8] 0, 128
          %3818 = vxpose.xlu0.c.b16.end [8/8] 0, 128
          %v3819 = vpop.trf.xlu0
          %v3820 = vpop.trf.xlu0
          %v3821 = vpop.trf.xlu0
          %v3822 = vpop.trf.xlu0
          %v3823 = vpop.trf.xlu0
          %v3824 = vpop.trf.xlu0
          %v3825 = vpop.trf.xlu0
          %v3826 = vpop.trf.xlu0
          %3827 = vxpose.xlu0.c.b16.start [1/8] %v3804, 128
          %3828 = vxpose.xlu0.c.b16.cont [2/8] %v3806, 128
          %3829 = vxpose.xlu0.c.b16.cont [3/8] 0, 128
          %3830 = vxpose.xlu0.c.b16.cont [4/8] 0, 128
          %3831 = vxpose.xlu0.c.b16.cont [5/8] 0, 128
          %3832 = vxpose.xlu0.c.b16.cont [6/8] 0, 128
          %3833 = vxpose.xlu0.c.b16.cont [7/8] 0, 128
          %3834 = vxpose.xlu0.c.b16.end [8/8] 0, 128
          %v3835 = vpop.trf.xlu0
          %v3836 = vpop.trf.xlu0
          %v3837 = vpop.trf.xlu0
          %v3838 = vpop.trf.xlu0
          %v3839 = vpop.trf.xlu0
          %v3840 = vpop.trf.xlu0
          %v3841 = vpop.trf.xlu0
          %v3842 = vpop.trf.xlu0
          %v3847 = vunpack.c.l.b16 %v3756
          %v3848 = vunpack.c.h.b16 %v3756
          %v3849 = vunpack.c.l.b16 %v3757
          %v3850 = vunpack.c.h.b16 %v3757
          %v3851 = vunpack.c.l.b16 %v3758
          %v3852 = vunpack.c.h.b16 %v3758
          %v3853 = vunpack.c.l.b16 %v3759
          %v3854 = vunpack.c.h.b16 %v3759
          %v3855 = vpack.c.b16 %v3849, %v3847
          %v3856 = vpack.c.b16 %v3850, %v3848
          %v3857 = vpack.c.b16 %v3853, %v3851
          %v3858 = vpack.c.b16 %v3854, %v3852
          %vm3863 = vcmask 261120
          %v3865 = vsel %vm3863, %v3819, 0
          %v3868 = vsel %vm3863, %v3820, 0
          %v3871 = vsel %vm3863, %v3821, 0
          %v3874 = vsel %vm3863, %v3822, 0
          %v3877 = vsel %vm3863, %v3823, 0
          %v3880 = vsel %vm3863, %v3824, 0
          %v3883 = vsel %vm3863, %v3825, 0
          %v3886 = vsel %vm3863, %v3826, 0
          %v3889 = vsel %vm3863, %v3835, 0
          %v3892 = vsel %vm3863, %v3836, 0
          %v3895 = vsel %vm3863, %v3837, 0
          %v3898 = vsel %vm3863, %v3838, 0
          %v3901 = vsel %vm3863, %v3839, 0
          %v3904 = vsel %vm3863, %v3840, 0
          %v3907 = vsel %vm3863, %v3841, 0
          %v3910 = vsel %vm3863, %v3842, 0
          %3912 = vmatprep.subr.bf16.mxu0 0
          %3913 = vmatpush1.bf16.msra.mxu0 0
          %3914 = vmatprep.subr.bf16.mxu0 0
          %3915 = vmatpush1.bf16.msra.mxu0 0
          %3916 = vmatprep.subr.bf16.mxu0 0
          %3917 = vmatpush1.bf16.msra.mxu0 0
          %3918 = vmatprep.subr.bf16.mxu0 0
          %3919 = vmatpush1.bf16.msra.mxu0 0
          %3920 = vmatprep.subr.bf16.mxu0 0
          %3921 = vmatpush1.bf16.msra.mxu0 0
          %3922 = vmatprep.subr.bf16.mxu0 0
          %3923 = vmatpush1.bf16.msra.mxu0 0
          %3924 = vmatprep.subr.bf16.mxu0 %v3858
          %3925 = vmatpush1.bf16.msra.mxu0 %v3857
          %3926 = vmatprep.subr.bf16.mxu0 %v3856
          %3927 = vmatpush1.bf16.msra.mxu0 %v3855
          %3928 = vmatprep.subr.bf16.mxu0 0
          %3929 = vmatpush2.bf16.msra.mxu0 0
          %3930 = vmatprep.subr.bf16.mxu0 0
          %3931 = vmatpush2.bf16.msra.mxu0 0
          %3932 = vmatprep.subr.bf16.mxu0 0
          %3933 = vmatpush2.bf16.msra.mxu0 0
          %3934 = vmatprep.subr.bf16.mxu0 0
          %3935 = vmatpush2.bf16.msra.mxu0 0
          %3936 = vmatprep.subr.bf16.mxu0 0
          %3937 = vmatpush2.bf16.msra.mxu0 0
          %3938 = vmatprep.subr.bf16.mxu0 0
          %3939 = vmatpush2.bf16.msra.mxu0 0
          %3940 = vmatprep.subr.bf16.mxu0 0
          %3941 = vmatpush2.bf16.msra.mxu0 0
          %3942 = vmatprep.subr.bf16.mxu0 0
          %3943 = vmatpush2.bf16.msra.mxu0 0
          %3944 = vmatprep.mubr.bf16.mxu0 0
          %3945 = vmatmul.mubr.bf16.gmra.mxu0 %v3865
          %v3946 = vpop.f32.mrf.mxu0
          %v3947 = vadd.f32 0.0, %v3946
          %v3948 = vpop.f32.mrf.mxu0
          %v3949 = vadd.f32 0.0, %v3948
          %v3950 = vpop.f32.mrf.mxu0
          %v3951 = vadd.f32 0.0, %v3950
          %v3952 = vpop.f32.mrf.mxu0
          %v3953 = vadd.f32 0.0, %v3952
          %3954 = vmatprep.mubr.bf16.mxu0 0
          %3955 = vmatmul.mubr.bf16.gmra.mxu0 %v3868
          %v3956 = vpop.f32.mrf.mxu0
          %v3957 = vadd.f32 0.0, %v3956
          %v3958 = vpop.f32.mrf.mxu0
          %v3959 = vadd.f32 0.0, %v3958
          %v3960 = vpop.f32.mrf.mxu0
          %v3961 = vadd.f32 0.0, %v3960
          %v3962 = vpop.f32.mrf.mxu0
          %v3963 = vadd.f32 0.0, %v3962
          %3964 = vmatprep.mubr.bf16.mxu0 0
          %3965 = vmatmul.mubr.bf16.gmra.mxu0 %v3871
          %v3966 = vpop.f32.mrf.mxu0
          %v3967 = vadd.f32 0.0, %v3966
          %v3968 = vpop.f32.mrf.mxu0
          %v3969 = vadd.f32 0.0, %v3968
          %v3970 = vpop.f32.mrf.mxu0
          %v3971 = vadd.f32 0.0, %v3970
          %v3972 = vpop.f32.mrf.mxu0
          %v3973 = vadd.f32 0.0, %v3972
          %3974 = vmatprep.mubr.bf16.mxu0 0
          %3975 = vmatmul.mubr.bf16.gmra.mxu0 %v3874
          %v3976 = vpop.f32.mrf.mxu0
          %v3977 = vadd.f32 0.0, %v3976
          %v3978 = vpop.f32.mrf.mxu0
          %v3979 = vadd.f32 0.0, %v3978
          %v3980 = vpop.f32.mrf.mxu0
          %v3981 = vadd.f32 0.0, %v3980
          %v3982 = vpop.f32.mrf.mxu0
          %v3983 = vadd.f32 0.0, %v3982
          %3984 = vmatprep.mubr.bf16.mxu0 0
          %3985 = vmatmul.mubr.bf16.gmra.mxu0 %v3877
          %v3986 = vpop.f32.mrf.mxu0
          %v3987 = vadd.f32 0.0, %v3986
          %v3988 = vpop.f32.mrf.mxu0
          %v3989 = vadd.f32 0.0, %v3988
          %v3990 = vpop.f32.mrf.mxu0
          %v3991 = vadd.f32 0.0, %v3990
          %v3992 = vpop.f32.mrf.mxu0
          %v3993 = vadd.f32 0.0, %v3992
          %3994 = vmatprep.mubr.bf16.mxu0 0
          %3995 = vmatmul.mubr.bf16.gmra.mxu0 %v3880
          %v3996 = vpop.f32.mrf.mxu0
          %v3997 = vadd.f32 0.0, %v3996
          %v3998 = vpop.f32.mrf.mxu0
          %v3999 = vadd.f32 0.0, %v3998
          %v4000 = vpop.f32.mrf.mxu0
          %v4001 = vadd.f32 0.0, %v4000
          %v4002 = vpop.f32.mrf.mxu0
          %v4003 = vadd.f32 0.0, %v4002
          %4004 = vmatprep.mubr.bf16.mxu0 0
          %4005 = vmatmul.mubr.bf16.gmra.mxu0 %v3883
          %v4006 = vpop.f32.mrf.mxu0
          %v4007 = vadd.f32 0.0, %v4006
          %v4008 = vpop.f32.mrf.mxu0
          %v4009 = vadd.f32 0.0, %v4008
          %v4010 = vpop.f32.mrf.mxu0
          %v4011 = vadd.f32 0.0, %v4010
          %v4012 = vpop.f32.mrf.mxu0
          %v4013 = vadd.f32 0.0, %v4012
          %4014 = vmatprep.mubr.bf16.mxu0 0
          %4015 = vmatmul.mubr.bf16.gmra.mxu0 %v3886
          %v4016 = vpop.f32.mrf.mxu0
          %v4017 = vadd.f32 0.0, %v4016
          %v4018 = vpop.f32.mrf.mxu0
          %v4019 = vadd.f32 0.0, %v4018
          %v4020 = vpop.f32.mrf.mxu0
          %v4021 = vadd.f32 0.0, %v4020
          %v4022 = vpop.f32.mrf.mxu0
          %v4023 = vadd.f32 0.0, %v4022
          %4024 = vmatprep.mubr.bf16.mxu0 0
          %4025 = vmatmul.mubr.bf16.gmra.mxu0 %v3889
          %v4026 = vpop.f32.mrf.mxu0
          %v4027 = vadd.f32 0.0, %v4026
          %v4028 = vpop.f32.mrf.mxu0
          %v4029 = vadd.f32 0.0, %v4028
          %v4030 = vpop.f32.mrf.mxu0
          %v4031 = vadd.f32 0.0, %v4030
          %v4032 = vpop.f32.mrf.mxu0
          %v4033 = vadd.f32 0.0, %v4032
          %4034 = vmatprep.mubr.bf16.mxu0 0
          %4035 = vmatmul.mubr.bf16.gmra.mxu0 %v3892
          %v4036 = vpop.f32.mrf.mxu0
          %v4037 = vadd.f32 0.0, %v4036
          %v4038 = vpop.f32.mrf.mxu0
          %v4039 = vadd.f32 0.0, %v4038
          %v4040 = vpop.f32.mrf.mxu0
          %v4041 = vadd.f32 0.0, %v4040
          %v4042 = vpop.f32.mrf.mxu0
          %v4043 = vadd.f32 0.0, %v4042
          %4044 = vmatprep.mubr.bf16.mxu0 0
          %4045 = vmatmul.mubr.bf16.gmra.mxu0 %v3895
          %v4046 = vpop.f32.mrf.mxu0
          %v4047 = vadd.f32 0.0, %v4046
          %v4048 = vpop.f32.mrf.mxu0
          %v4049 = vadd.f32 0.0, %v4048
          %v4050 = vpop.f32.mrf.mxu0
          %v4051 = vadd.f32 0.0, %v4050
          %v4052 = vpop.f32.mrf.mxu0
          %v4053 = vadd.f32 0.0, %v4052
          %4054 = vmatprep.mubr.bf16.mxu0 0
          %4055 = vmatmul.mubr.bf16.gmra.mxu0 %v3898
          %v4056 = vpop.f32.mrf.mxu0
          %v4057 = vadd.f32 0.0, %v4056
          %v4058 = vpop.f32.mrf.mxu0
          %v4059 = vadd.f32 0.0, %v4058
          %v4060 = vpop.f32.mrf.mxu0
          %v4061 = vadd.f32 0.0, %v4060
          %v4062 = vpop.f32.mrf.mxu0
          %v4063 = vadd.f32 0.0, %v4062
          %4064 = vmatprep.mubr.bf16.mxu0 0
          %4065 = vmatmul.mubr.bf16.gmra.mxu0 %v3901
          %v4066 = vpop.f32.mrf.mxu0
          %v4067 = vadd.f32 0.0, %v4066
          %v4068 = vpop.f32.mrf.mxu0
          %v4069 = vadd.f32 0.0, %v4068
          %v4070 = vpop.f32.mrf.mxu0
          %v4071 = vadd.f32 0.0, %v4070
          %v4072 = vpop.f32.mrf.mxu0
          %v4073 = vadd.f32 0.0, %v4072
          %4074 = vmatprep.mubr.bf16.mxu0 0
          %4075 = vmatmul.mubr.bf16.gmra.mxu0 %v3904
          %v4076 = vpop.f32.mrf.mxu0
          %v4077 = vadd.f32 0.0, %v4076
          %v4078 = vpop.f32.mrf.mxu0
          %v4079 = vadd.f32 0.0, %v4078
          %v4080 = vpop.f32.mrf.mxu0
          %v4081 = vadd.f32 0.0, %v4080
          %v4082 = vpop.f32.mrf.mxu0
          %v4083 = vadd.f32 0.0, %v4082
          %4084 = vmatprep.mubr.bf16.mxu0 0
          %4085 = vmatmul.mubr.bf16.gmra.mxu0 %v3907
          %v4086 = vpop.f32.mrf.mxu0
          %v4087 = vadd.f32 0.0, %v4086
          %v4088 = vpop.f32.mrf.mxu0
          %v4089 = vadd.f32 0.0, %v4088
          %v4090 = vpop.f32.mrf.mxu0
          %v4091 = vadd.f32 0.0, %v4090
          %v4092 = vpop.f32.mrf.mxu0
          %v4093 = vadd.f32 0.0, %v4092
          %4094 = vmatprep.mubr.bf16.mxu0 0
          %4095 = vmatmul.mubr.bf16.gmra.mxu0 %v3910
          %v4096 = vpop.f32.mrf.mxu0
          %v4097 = vadd.f32 0.0, %v4096
          %v4098 = vpop.f32.mrf.mxu0
          %v4099 = vadd.f32 0.0, %v4098
          %v4100 = vpop.f32.mrf.mxu0
          %v4101 = vadd.f32 0.0, %v4100
          %v4102 = vpop.f32.mrf.mxu0
          %v4103 = vadd.f32 0.0, %v4102
          %4104 = vdwg.mxu0
          %v4105 = vmax.f32 %v3947, %v3957
          %v4106 = vmax.f32 %v3951, %v3961
          %v4107 = vmax.f32 %v4105, %v3967
          %v4108 = vmax.f32 %v4106, %v3971
          %v4109 = vmax.f32 %v4107, %v3977
          %v4110 = vmax.f32 %v4108, %v3981
          %v4111 = vmax.f32 %v4109, %v3987
          %v4112 = vmax.f32 %v4110, %v3991
          %v4113 = vmax.f32 %v4111, %v3997
          %v4114 = vmax.f32 %v4112, %v4001
          %v4115 = vmax.f32 %v4113, %v4007
          %v4116 = vmax.f32 %v4114, %v4011
          %v4117 = vmax.f32 %v4115, %v4017
          %v4118 = vmax.f32 %v4116, %v4021
          %v4119 = vmax.f32 %v4117, %v4027
          %v4120 = vmax.f32 %v4118, %v4031
          %v4121 = vmax.f32 %v4119, %v4037
          %v4122 = vmax.f32 %v4120, %v4041
          %v4123 = vmax.f32 %v4121, %v4047
          %v4124 = vmax.f32 %v4122, %v4051
          %v4125 = vmax.f32 %v4123, %v4057
          %v4126 = vmax.f32 %v4124, %v4061
          %v4127 = vmax.f32 %v4125, %v4067
          %v4128 = vmax.f32 %v4126, %v4071
          %v4129 = vmax.f32 %v4127, %v4077
          %v4130 = vmax.f32 %v4128, %v4081
          %v4131 = vmax.f32 %v4129, %v4087
          %v4132 = vmax.f32 %v4130, %v4091
          %v4133 = vmax.f32 %v4131, %v4097
          %v4134 = vmax.f32 %v4132, %v4101
          %v4135 = vmax.f32 %v4133, %v4134
          %v4136 = vrot.slane %v4135, 4
          %v4137 = vmax.f32 %v4135, %v4136
          %v4138 = vrot.slane %v4137, 2
          %v4139 = vmax.f32 %v4137, %v4138
          %v4140 = vrot.slane %v4139, 1
          %v4141 = vmax.f32 %v4139, %v4140
          %v4142 = vmax.f32 %v3949, %v3959
          %v4143 = vmax.f32 %v3953, %v3963
          %v4144 = vmax.f32 %v4142, %v3969
          %v4145 = vmax.f32 %v4143, %v3973
          %v4146 = vmax.f32 %v4144, %v3979
          %v4147 = vmax.f32 %v4145, %v3983
          %v4148 = vmax.f32 %v4146, %v3989
          %v4149 = vmax.f32 %v4147, %v3993
          %v4150 = vmax.f32 %v4148, %v3999
          %v4151 = vmax.f32 %v4149, %v4003
          %v4152 = vmax.f32 %v4150, %v4009
          %v4153 = vmax.f32 %v4151, %v4013
          %v4154 = vmax.f32 %v4152, %v4019
          %v4155 = vmax.f32 %v4153, %v4023
          %v4156 = vmax.f32 %v4154, %v4029
          %v4157 = vmax.f32 %v4155, %v4033
          %v4158 = vmax.f32 %v4156, %v4039
          %v4159 = vmax.f32 %v4157, %v4043
          %v4160 = vmax.f32 %v4158, %v4049
          %v4161 = vmax.f32 %v4159, %v4053
          %v4162 = vmax.f32 %v4160, %v4059
          %v4163 = vmax.f32 %v4161, %v4063
          %v4164 = vmax.f32 %v4162, %v4069
          %v4165 = vmax.f32 %v4163, %v4073
          %v4166 = vmax.f32 %v4164, %v4079
          %v4167 = vmax.f32 %v4165, %v4083
          %v4168 = vmax.f32 %v4166, %v4089
          %v4169 = vmax.f32 %v4167, %v4093
          %v4170 = vmax.f32 %v4168, %v4099
          %v4171 = vmax.f32 %v4169, %v4103
          %v4172 = vmax.f32 %v4170, %v4171
          %v4173 = vrot.slane %v4172, 4
          %v4174 = vmax.f32 %v4172, %v4173
          %v4175 = vrot.slane %v4174, 2
          %v4176 = vmax.f32 %v4174, %v4175
          %v4177 = vrot.slane %v4176, 1
          %v4178 = vmax.f32 %v4176, %v4177
          %v4179 = vmax.f32 %v3766, %v4141
          %v4180 = vmax.f32 %v3767, %v4178
          %v4181 = vsub.f32 %v3766, %v4179
          %v4182 = vsub.f32 %v3767, %v4180
          %v4183 = vmul.f32 %v4181, 1.442695
          %v4184 = vpow.pop %v4183
          %v4185 = vmul.f32 %v4182, 1.442695
          %v4186 = vpow.pop %v4185
          %v4187 = vsub.f32 %v3947, %v4179
          %v4188 = vsub.f32 %v3949, %v4180
          %v4189 = vsub.f32 %v3951, %v4179
          %v4190 = vsub.f32 %v3953, %v4180
          %v4191 = vsub.f32 %v3957, %v4179
          %v4192 = vsub.f32 %v3959, %v4180
          %v4193 = vsub.f32 %v3961, %v4179
          %v4194 = vsub.f32 %v3963, %v4180
          %v4195 = vsub.f32 %v3967, %v4179
          %v4196 = vsub.f32 %v3969, %v4180
          %v4197 = vsub.f32 %v3971, %v4179
          %v4198 = vsub.f32 %v3973, %v4180
          %v4199 = vsub.f32 %v3977, %v4179
          %v4200 = vsub.f32 %v3979, %v4180
          %v4201 = vsub.f32 %v3981, %v4179
          %v4202 = vsub.f32 %v3983, %v4180
          %v4203 = vsub.f32 %v3987, %v4179
          %v4204 = vsub.f32 %v3989, %v4180
          %v4205 = vsub.f32 %v3991, %v4179
          %v4206 = vsub.f32 %v3993, %v4180
          %v4207 = vsub.f32 %v3997, %v4179
          %v4208 = vsub.f32 %v3999, %v4180
          %v4209 = vsub.f32 %v4001, %v4179
          %v4210 = vsub.f32 %v4003, %v4180
          %v4211 = vsub.f32 %v4007, %v4179
          %v4212 = vsub.f32 %v4009, %v4180
          %v4213 = vsub.f32 %v4011, %v4179
          %v4214 = vsub.f32 %v4013, %v4180
          %v4215 = vsub.f32 %v4017, %v4179
          %v4216 = vsub.f32 %v4019, %v4180
          %v4217 = vsub.f32 %v4021, %v4179
          %v4218 = vsub.f32 %v4023, %v4180
          %v4219 = vsub.f32 %v4027, %v4179
          %v4220 = vsub.f32 %v4029, %v4180
          %v4221 = vsub.f32 %v4031, %v4179
          %v4222 = vsub.f32 %v4033, %v4180
          %v4223 = vsub.f32 %v4037, %v4179
          %v4224 = vsub.f32 %v4039, %v4180
          %v4225 = vsub.f32 %v4041, %v4179
          %v4226 = vsub.f32 %v4043, %v4180
          %v4227 = vsub.f32 %v4047, %v4179
          %v4228 = vsub.f32 %v4049, %v4180
          %v4229 = vsub.f32 %v4051, %v4179
          %v4230 = vsub.f32 %v4053, %v4180
          %v4231 = vsub.f32 %v4057, %v4179
          %v4232 = vsub.f32 %v4059, %v4180
          %v4233 = vsub.f32 %v4061, %v4179
          %v4234 = vsub.f32 %v4063, %v4180
          %v4235 = vsub.f32 %v4067, %v4179
          %v4236 = vsub.f32 %v4069, %v4180
          %v4237 = vsub.f32 %v4071, %v4179
          %v4238 = vsub.f32 %v4073, %v4180
          %v4239 = vsub.f32 %v4077, %v4179
          %v4240 = vsub.f32 %v4079, %v4180
          %v4241 = vsub.f32 %v4081, %v4179
          %v4242 = vsub.f32 %v4083, %v4180
          %v4243 = vsub.f32 %v4087, %v4179
          %v4244 = vsub.f32 %v4089, %v4180
          %v4245 = vsub.f32 %v4091, %v4179
          %v4246 = vsub.f32 %v4093, %v4180
          %v4247 = vsub.f32 %v4097, %v4179
          %v4248 = vsub.f32 %v4099, %v4180
          %v4249 = vsub.f32 %v4101, %v4179
          %v4250 = vsub.f32 %v4103, %v4180
          %v4251 = vmul.f32 %v4187, 1.442695
          %v4252 = vpow.pop %v4251
          %v4253 = vmul.f32 %v4188, 1.442695
          %v4254 = vpow.pop %v4253
          %v4255 = vmul.f32 %v4189, 1.442695
          %v4256 = vpow.pop %v4255
          %v4257 = vmul.f32 %v4190, 1.442695
          %v4258 = vpow.pop %v4257
          %v4259 = vmul.f32 %v4191, 1.442695
          %v4260 = vpow.pop %v4259
          %v4261 = vmul.f32 %v4192, 1.442695
          %v4262 = vpow.pop %v4261
          %v4263 = vmul.f32 %v4193, 1.442695
          %v4264 = vpow.pop %v4263
          %v4265 = vmul.f32 %v4194, 1.442695
          %v4266 = vpow.pop %v4265
          %v4267 = vmul.f32 %v4195, 1.442695
          %v4268 = vpow.pop %v4267
          %v4269 = vmul.f32 %v4196, 1.442695
          %v4270 = vpow.pop %v4269
          %v4271 = vmul.f32 %v4197, 1.442695
          %v4272 = vpow.pop %v4271
          %v4273 = vmul.f32 %v4198, 1.442695
          %v4274 = vpow.pop %v4273
          %v4275 = vmul.f32 %v4199, 1.442695
          %v4276 = vpow.pop %v4275
          %v4277 = vmul.f32 %v4200, 1.442695
          %v4278 = vpow.pop %v4277
          %v4279 = vmul.f32 %v4201, 1.442695
          %v4280 = vpow.pop %v4279
          %v4281 = vmul.f32 %v4202, 1.442695
          %v4282 = vpow.pop %v4281
          %v4283 = vmul.f32 %v4203, 1.442695
          %v4284 = vpow.pop %v4283
          %v4285 = vmul.f32 %v4204, 1.442695
          %v4286 = vpow.pop %v4285
          %v4287 = vmul.f32 %v4205, 1.442695
          %v4288 = vpow.pop %v4287
          %v4289 = vmul.f32 %v4206, 1.442695
          %v4290 = vpow.pop %v4289
          %v4291 = vmul.f32 %v4207, 1.442695
          %v4292 = vpow.pop %v4291
          %v4293 = vmul.f32 %v4208, 1.442695
          %v4294 = vpow.pop %v4293
          %v4295 = vmul.f32 %v4209, 1.442695
          %v4296 = vpow.pop %v4295
          %v4297 = vmul.f32 %v4210, 1.442695
          %v4298 = vpow.pop %v4297
          %v4299 = vmul.f32 %v4211, 1.442695
          %v4300 = vpow.pop %v4299
          %v4301 = vmul.f32 %v4212, 1.442695
          %v4302 = vpow.pop %v4301
          %v4303 = vmul.f32 %v4213, 1.442695
          %v4304 = vpow.pop %v4303
          %v4305 = vmul.f32 %v4214, 1.442695
          %v4306 = vpow.pop %v4305
          %v4307 = vmul.f32 %v4215, 1.442695
          %v4308 = vpow.pop %v4307
          %v4309 = vmul.f32 %v4216, 1.442695
          %v4310 = vpow.pop %v4309
          %v4311 = vmul.f32 %v4217, 1.442695
          %v4312 = vpow.pop %v4311
          %v4313 = vmul.f32 %v4218, 1.442695
          %v4314 = vpow.pop %v4313
          %v4315 = vmul.f32 %v4219, 1.442695
          %v4316 = vpow.pop %v4315
          %v4317 = vmul.f32 %v4220, 1.442695
          %v4318 = vpow.pop %v4317
          %v4319 = vmul.f32 %v4221, 1.442695
          %v4320 = vpow.pop %v4319
          %v4321 = vmul.f32 %v4222, 1.442695
          %v4322 = vpow.pop %v4321
          %v4323 = vmul.f32 %v4223, 1.442695
          %v4324 = vpow.pop %v4323
          %v4325 = vmul.f32 %v4224, 1.442695
          %v4326 = vpow.pop %v4325
          %v4327 = vmul.f32 %v4225, 1.442695
          %v4328 = vpow.pop %v4327
          %v4329 = vmul.f32 %v4226, 1.442695
          %v4330 = vpow.pop %v4329
          %v4331 = vmul.f32 %v4227, 1.442695
          %v4332 = vpow.pop %v4331
          %v4333 = vmul.f32 %v4228, 1.442695
          %v4334 = vpow.pop %v4333
          %v4335 = vmul.f32 %v4229, 1.442695
          %v4336 = vpow.pop %v4335
          %v4337 = vmul.f32 %v4230, 1.442695
          %v4338 = vpow.pop %v4337
          %v4339 = vmul.f32 %v4231, 1.442695
          %v4340 = vpow.pop %v4339
          %v4341 = vmul.f32 %v4232, 1.442695
          %v4342 = vpow.pop %v4341
          %v4343 = vmul.f32 %v4233, 1.442695
          %v4344 = vpow.pop %v4343
          %v4345 = vmul.f32 %v4234, 1.442695
          %v4346 = vpow.pop %v4345
          %v4347 = vmul.f32 %v4235, 1.442695
          %v4348 = vpow.pop %v4347
          %v4349 = vmul.f32 %v4236, 1.442695
          %v4350 = vpow.pop %v4349
          %v4351 = vmul.f32 %v4237, 1.442695
          %v4352 = vpow.pop %v4351
          %v4353 = vmul.f32 %v4238, 1.442695
          %v4354 = vpow.pop %v4353
          %v4355 = vmul.f32 %v4239, 1.442695
          %v4356 = vpow.pop %v4355
          %v4357 = vmul.f32 %v4240, 1.442695
          %v4358 = vpow.pop %v4357
          %v4359 = vmul.f32 %v4241, 1.442695
          %v4360 = vpow.pop %v4359
          %v4361 = vmul.f32 %v4242, 1.442695
          %v4362 = vpow.pop %v4361
          %v4363 = vmul.f32 %v4243, 1.442695
          %v4364 = vpow.pop %v4363
          %v4365 = vmul.f32 %v4244, 1.442695
          %v4366 = vpow.pop %v4365
          %v4367 = vmul.f32 %v4245, 1.442695
          %v4368 = vpow.pop %v4367
          %v4369 = vmul.f32 %v4246, 1.442695
          %v4370 = vpow.pop %v4369
          %v4371 = vmul.f32 %v4247, 1.442695
          %v4372 = vpow.pop %v4371
          %v4373 = vmul.f32 %v4248, 1.442695
          %v4374 = vpow.pop %v4373
          %v4375 = vmul.f32 %v4249, 1.442695
          %v4376 = vpow.pop %v4375
          %v4377 = vmul.f32 %v4250, 1.442695
          %v4378 = vpow.pop %v4377
          %v4379 = vmul.f32 %v4184, %v3768
          %v4380 = vmul.f32 %v4186, %v3769
          %v4381 = vadd.f32 %v4252, %v4256
          %v4382 = vadd.f32 %v4381, %v4260
          %v4383 = vadd.f32 %v4382, %v4264
          %v4384 = vadd.f32 %v4383, %v4268
          %v4385 = vadd.f32 %v4384, %v4272
          %v4386 = vadd.f32 %v4385, %v4276
          %v4387 = vadd.f32 %v4386, %v4280
          %v4388 = vadd.f32 %v4387, %v4284
          %v4389 = vadd.f32 %v4388, %v4288
          %v4390 = vadd.f32 %v4389, %v4292
          %v4391 = vadd.f32 %v4390, %v4296
          %v4392 = vadd.f32 %v4391, %v4300
          %v4393 = vadd.f32 %v4392, %v4304
          %v4394 = vadd.f32 %v4393, %v4308
          %v4395 = vadd.f32 %v4394, %v4312
          %v4396 = vadd.f32 %v4395, %v4316
          %v4397 = vadd.f32 %v4396, %v4320
          %v4398 = vadd.f32 %v4397, %v4324
          %v4399 = vadd.f32 %v4398, %v4328
          %v4400 = vadd.f32 %v4399, %v4332
          %v4401 = vadd.f32 %v4400, %v4336
          %v4402 = vadd.f32 %v4401, %v4340
          %v4403 = vadd.f32 %v4402, %v4344
          %v4404 = vadd.f32 %v4403, %v4348
          %v4405 = vadd.f32 %v4404, %v4352
          %v4406 = vadd.f32 %v4405, %v4356
          %v4407 = vadd.f32 %v4406, %v4360
          %v4408 = vadd.f32 %v4407, %v4364
          %v4409 = vadd.f32 %v4408, %v4368
          %v4410 = vadd.f32 %v4409, %v4372
          %v4411 = vadd.f32 %v4410, %v4376
          %v4412 = vrot.slane %v4411, 4
          %v4413 = vadd.f32 %v4411, %v4412
          %v4414 = vrot.slane %v4413, 2
          %v4415 = vadd.f32 %v4413, %v4414
          %v4416 = vrot.slane %v4415, 1
          %v4417 = vadd.f32 %v4415, %v4416
          %v4418 = vadd.f32 %v4254, %v4258
          %v4419 = vadd.f32 %v4418, %v4262
          %v4420 = vadd.f32 %v4419, %v4266
          %v4421 = vadd.f32 %v4420, %v4270
          %v4422 = vadd.f32 %v4421, %v4274
          %v4423 = vadd.f32 %v4422, %v4278
          %v4424 = vadd.f32 %v4423, %v4282
          %v4425 = vadd.f32 %v4424, %v4286
          %v4426 = vadd.f32 %v4425, %v4290
          %v4427 = vadd.f32 %v4426, %v4294
          %v4428 = vadd.f32 %v4427, %v4298
          %v4429 = vadd.f32 %v4428, %v4302
          %v4430 = vadd.f32 %v4429, %v4306
          %v4431 = vadd.f32 %v4430, %v4310
          %v4432 = vadd.f32 %v4431, %v4314
          %v4433 = vadd.f32 %v4432, %v4318
          %v4434 = vadd.f32 %v4433, %v4322
          %v4435 = vadd.f32 %v4434, %v4326
          %v4436 = vadd.f32 %v4435, %v4330
          %v4437 = vadd.f32 %v4436, %v4334
          %v4438 = vadd.f32 %v4437, %v4338
          %v4439 = vadd.f32 %v4438, %v4342
          %v4440 = vadd.f32 %v4439, %v4346
          %v4441 = vadd.f32 %v4440, %v4350
          %v4442 = vadd.f32 %v4441, %v4354
          %v4443 = vadd.f32 %v4442, %v4358
          %v4444 = vadd.f32 %v4443, %v4362
          %v4445 = vadd.f32 %v4444, %v4366
          %v4446 = vadd.f32 %v4445, %v4370
          %v4447 = vadd.f32 %v4446, %v4374
          %v4448 = vadd.f32 %v4447, %v4378
          %v4449 = vrot.slane %v4448, 4
          %v4450 = vadd.f32 %v4448, %v4449
          %v4451 = vrot.slane %v4450, 2
          %v4452 = vadd.f32 %v4450, %v4451
          %v4453 = vrot.slane %v4452, 1
          %v4454 = vadd.f32 %v4452, %v4453
          %v4455 = vadd.f32 %v4379, %v4417
          %v4456 = vadd.f32 %v4380, %v4454
          %v4457 = vmul.f32 %v4184, %v3770
          %v4458 = vmul.f32 %v4186, %v3771
          %v4459 = vmul.f32 %v4184, %v3772
          %v4460 = vmul.f32 %v4186, %v3773
          %v4461 = vmul.f32 %v4184, %v3774
          %v4462 = vmul.f32 %v4186, %v3775
          %v4463 = vmul.f32 %v4184, %v3776
          %v4464 = vmul.f32 %v4186, %v3777
          %v4465 = vpack.c.bf16 %v4256, %v4252
          %v4466 = vpack.c.bf16 %v4258, %v4254
          %v4467 = vpack.c.bf16 %v4264, %v4260
          %v4468 = vpack.c.bf16 %v4266, %v4262
          %v4469 = vpack.c.bf16 %v4272, %v4268
          %v4470 = vpack.c.bf16 %v4274, %v4270
          %v4471 = vpack.c.bf16 %v4280, %v4276
          %v4472 = vpack.c.bf16 %v4282, %v4278
          %v4473 = vpack.c.bf16 %v4288, %v4284
          %v4474 = vpack.c.bf16 %v4290, %v4286
          %v4475 = vpack.c.bf16 %v4296, %v4292
          %v4476 = vpack.c.bf16 %v4298, %v4294
          %v4477 = vpack.c.bf16 %v4304, %v4300
          %v4478 = vpack.c.bf16 %v4306, %v4302
          %v4479 = vpack.c.bf16 %v4312, %v4308
          %v4480 = vpack.c.bf16 %v4314, %v4310
          %v4481 = vpack.c.bf16 %v4320, %v4316
          %v4482 = vpack.c.bf16 %v4322, %v4318
          %v4483 = vpack.c.bf16 %v4328, %v4324
          %v4484 = vpack.c.bf16 %v4330, %v4326
          %v4485 = vpack.c.bf16 %v4336, %v4332
          %v4486 = vpack.c.bf16 %v4338, %v4334
          %v4487 = vpack.c.bf16 %v4344, %v4340
          %v4488 = vpack.c.bf16 %v4346, %v4342
          %v4489 = vpack.c.bf16 %v4352, %v4348
          %v4490 = vpack.c.bf16 %v4354, %v4350
          %v4491 = vpack.c.bf16 %v4360, %v4356
          %v4492 = vpack.c.bf16 %v4362, %v4358
          %v4493 = vpack.c.bf16 %v4368, %v4364
          %v4494 = vpack.c.bf16 %v4370, %v4366
          %v4495 = vpack.c.bf16 %v4376, %v4372
          %v4496 = vpack.c.bf16 %v4378, %v4374
          %v4501 = vunpack.c.l.b16 %v3787
          %v4502 = vunpack.c.h.b16 %v3787
          %v4503 = vunpack.c.l.b16 %v3788
          %v4504 = vunpack.c.h.b16 %v3788
          %v4505 = vunpack.c.l.b16 %v3789
          %v4506 = vunpack.c.h.b16 %v3789
          %v4507 = vunpack.c.l.b16 %v3790
          %v4508 = vunpack.c.h.b16 %v3790
          %v4509 = vpack.c.b16 %v4503, %v4501
          %v4510 = vpack.c.b16 %v4504, %v4502
          %v4511 = vpack.c.b16 %v4507, %v4505
          %v4512 = vpack.c.b16 %v4508, %v4506
          %4517 = vmatprep.subr.bf16.mxu0 %v4480
          %4518 = vmatpush1.bf16.msra.mxu0 %v4479
          %4519 = vmatprep.subr.bf16.mxu0 %v4478
          %4520 = vmatpush1.bf16.msra.mxu0 %v4477
          %4521 = vmatprep.subr.bf16.mxu0 %v4476
          %4522 = vmatpush1.bf16.msra.mxu0 %v4475
          %4523 = vmatprep.subr.bf16.mxu0 %v4474
          %4524 = vmatpush1.bf16.msra.mxu0 %v4473
          %4525 = vmatprep.subr.bf16.mxu0 %v4472
          %4526 = vmatpush1.bf16.msra.mxu0 %v4471
          %4527 = vmatprep.subr.bf16.mxu0 %v4470
          %4528 = vmatpush1.bf16.msra.mxu0 %v4469
          %4529 = vmatprep.subr.bf16.mxu0 %v4468
          %4530 = vmatpush1.bf16.msra.mxu0 %v4467
          %4531 = vmatprep.subr.bf16.mxu0 %v4466
          %4532 = vmatpush1.bf16.msra.mxu0 %v4465
          %4533 = vmatprep.subr.bf16.mxu0 %v4496
          %4534 = vmatpush2.bf16.msra.mxu0 %v4495
          %4535 = vmatprep.subr.bf16.mxu0 %v4494
          %4536 = vmatpush2.bf16.msra.mxu0 %v4493
          %4537 = vmatprep.subr.bf16.mxu0 %v4492
          %4538 = vmatpush2.bf16.msra.mxu0 %v4491
          %4539 = vmatprep.subr.bf16.mxu0 %v4490
          %4540 = vmatpush2.bf16.msra.mxu0 %v4489
          %4541 = vmatprep.subr.bf16.mxu0 %v4488
          %4542 = vmatpush2.bf16.msra.mxu0 %v4487
          %4543 = vmatprep.subr.bf16.mxu0 %v4486
          %4544 = vmatpush2.bf16.msra.mxu0 %v4485
          %4545 = vmatprep.subr.bf16.mxu0 %v4484
          %4546 = vmatpush2.bf16.msra.mxu0 %v4483
          %4547 = vmatprep.subr.bf16.mxu0 %v4482
          %4548 = vmatpush2.bf16.msra.mxu0 %v4481
          %4549 = vmatprep.mubr.bf16.mxu0 %v4510
          %4550 = vmatmul.mubr.bf16.gmra.mxu0 %v4509
          %v4551 = vpop.f32.mrf.mxu0
          %v4552 = vadd.f32 0.0, %v4551
          %v4553 = vpop.f32.mrf.mxu0
          %v4554 = vadd.f32 0.0, %v4553
          %v4555 = vpop.f32.mrf.mxu0
          %v4556 = vadd.f32 0.0, %v4555
          %v4557 = vpop.f32.mrf.mxu0
          %v4558 = vadd.f32 0.0, %v4557
          %4559 = vmatprep.mubr.bf16.mxu0 %v4512
          %4560 = vmatmul.mubr.bf16.gmra.mxu0 %v4511
          %v4561 = vpop.f32.mrf.mxu0
          %v4562 = vadd.f32 0.0, %v4561
          %v4563 = vpop.f32.mrf.mxu0
          %v4564 = vadd.f32 0.0, %v4563
          %v4565 = vpop.f32.mrf.mxu0
          %v4566 = vadd.f32 0.0, %v4565
          %v4567 = vpop.f32.mrf.mxu0
          %v4568 = vadd.f32 0.0, %v4567
          %4569 = vdwg.mxu0
          %v4570 = vadd.f32 %v4457, %v4552
          %v4571 = vadd.f32 %v4458, %v4554
          %v4572 = vadd.f32 %v4459, %v4556
          %v4573 = vadd.f32 %v4460, %v4558
          %v4574 = vadd.f32 %v4461, %v4562
          %v4575 = vadd.f32 %v4462, %v4564
          %v4576 = vadd.f32 %v4463, %v4566
          %v4577 = vadd.f32 %v4464, %v4568
        $region73: #{tpu_custom_call.1} parent=35 // loop_footer
          %s3765 = sadd.s32 1, %s3761
        $region74: #{tpu_custom_call.1} parent=35 // loop_footer_branch
          %3760 = sbr.rel target = $region70
        $region75: #{tpu_custom_call.1} parent=35 // loop_exit
          _
        %v4578 = vrcp.pop %v3768
        %v4579 = vrcp.pop %v3769
        %v4580 = vmul.f32 %v3768, %v4578
        %v4581 = vmul.f32 %v3769, %v4579
        %v4582 = vsub.f32 2.0, %v4580
        %v4583 = vsub.f32 2.0, %v4581
        %v4584 = vmul.f32 %v4578, %v4582
        %v4585 = vmul.f32 %v4579, %v4583
        %v4586 = vmul.f32 %v3770, %v4584
        %v4587 = vmul.f32 %v3771, %v4585
        %v4588 = vmul.f32 %v3772, %v4584
        %v4589 = vmul.f32 %v3773, %v4585
        %v4590 = vmul.f32 %v3774, %v4584
        %v4591 = vmul.f32 %v3775, %v4585
        %v4592 = vmul.f32 %v3776, %v4584
        %v4593 = vmul.f32 %v3777, %v4585
        %4594 = vst [vmem:[#allocation4 + $0xc0] sm:$0xff] %v4586
        %4595 = vst [vmem:[#allocation4 + $0xc8] sm:$0xff] %v4587
        %4596 = vst [vmem:[#allocation4 + $0xd0] sm:$0xff] %v4588
        %4597 = vst [vmem:[#allocation4 + $0xd8] sm:$0xff] %v4589
        %4598 = vst [vmem:[#allocation4 + $0xe0] sm:$0xff] %v4590
        %4599 = vst [vmem:[#allocation4 + $0xe8] sm:$0xff] %v4591
        %4600 = vst [vmem:[#allocation4 + $0xf0] sm:$0xff] %v4592
        %4601 = vst [vmem:[#allocation4 + $0xf8] sm:$0xff] %v4593
        %v4602 = vld [vmem:[%s2] sm:$0xff]
        %v4603 = vld [vmem:[#allocation4] sm:$0xff]
        %v4604 = vld [vmem:[#allocation4 + $0x8] sm:$0xff]
        %v4605 = vld [vmem:[#allocation4 + $0x10] sm:$0xff]
        %v4606 = vld [vmem:[#allocation4 + $0x18] sm:$0xff]
        %v4607 = vld [vmem:[#allocation4 + $0x20] sm:$0xff]
        %v4608 = vld [vmem:[#allocation4 + $0x28] sm:$0xff]
        %v4609 = vld [vmem:[#allocation4 + $0x30] sm:$0xff]
        %v4610 = vld [vmem:[#allocation4 + $0x38] sm:$0xff]
        %v4611 = vld [vmem:[#allocation4 + $0x40] sm:$0xff]
        %v4612 = vld [vmem:[#allocation4 + $0x48] sm:$0xff]
        %v4613 = vld [vmem:[#allocation4 + $0x50] sm:$0xff]
        %v4614 = vld [vmem:[#allocation4 + $0x58] sm:$0xff]
        %v4615 = vld [vmem:[#allocation4 + $0x60] sm:$0xff]
        %v4616 = vld [vmem:[#allocation4 + $0x68] sm:$0xff]
        %v4617 = vld [vmem:[#allocation4 + $0x70] sm:$0xff]
        %v4618 = vld [vmem:[#allocation4 + $0x78] sm:$0xff]
        %v4619 = vld [vmem:[#allocation4 + $0x80] sm:$0xff]
        %v4620 = vld [vmem:[#allocation4 + $0x88] sm:$0xff]
        %v4621 = vld [vmem:[#allocation4 + $0x90] sm:$0xff]
        %v4622 = vld [vmem:[#allocation4 + $0x98] sm:$0xff]
        %v4623 = vld [vmem:[#allocation4 + $0xa0] sm:$0xff]
        %v4624 = vld [vmem:[#allocation4 + $0xa8] sm:$0xff]
        %v4625 = vld [vmem:[#allocation4 + $0xb0] sm:$0xff]
        %v4626 = vld [vmem:[#allocation4 + $0xb8] sm:$0xff]
        %v4627 = vld [vmem:[#allocation4 + $0xc0] sm:$0xff]
        %v4628 = vld [vmem:[#allocation4 + $0xc8] sm:$0xff]
        %v4629 = vld [vmem:[#allocation4 + $0xd0] sm:$0xff]
        %v4630 = vld [vmem:[#allocation4 + $0xd8] sm:$0xff]
        %v4631 = vld [vmem:[#allocation4 + $0xe0] sm:$0xff]
        %v4632 = vld [vmem:[#allocation4 + $0xe8] sm:$0xff]
        %v4633 = vld [vmem:[#allocation4 + $0xf0] sm:$0xff]
        %v4634 = vld [vmem:[#allocation4 + $0xf8] sm:$0xff]
        %v4635 = vld [vmem:[%s3] sm:$0xff]
        %4637 = vset.pattern.permute.xlu0 0
        %4638 = vperm.xlu0 %4637, %v4635
        %v4639 = vpop.permute.xlu0 %4638
        %4641 = vmatprep.subr.mxu0 %v4634
        %4642 = vmatpush1.msra.mxu0 %v4633
        %4643 = vmatprep.subr.mxu0 %v4632
        %4644 = vmatpush1.msra.mxu0 %v4631
        %4645 = vmatprep.subr.mxu0 %v4630
        %4646 = vmatpush1.msra.mxu0 %v4629
        %4647 = vmatprep.subr.mxu0 %v4628
        %4648 = vmatpush1.msra.mxu0 %v4627
        %4649 = vmatprep.subr.mxu0 %v4626
        %4650 = vmatpush1.msra.mxu0 %v4625
        %4651 = vmatprep.subr.mxu0 %v4624
        %4652 = vmatpush1.msra.mxu0 %v4623
        %4653 = vmatprep.subr.mxu0 %v4622
        %4654 = vmatpush1.msra.mxu0 %v4621
        %4655 = vmatprep.subr.mxu0 %v4620
        %4656 = vmatpush1.msra.mxu0 %v4619
        %4657 = vmatprep.subr.mxu0 %v4618
        %4658 = vmatpush1.msra.mxu0 %v4617
        %4659 = vmatprep.subr.mxu0 %v4616
        %4660 = vmatpush1.msra.mxu0 %v4615
        %4661 = vmatprep.subr.mxu0 %v4614
        %4662 = vmatpush1.msra.mxu0 %v4613
        %4663 = vmatprep.subr.mxu0 %v4612
        %4664 = vmatpush1.msra.mxu0 %v4611
        %4665 = vmatprep.subr.mxu0 %v4610
        %4666 = vmatpush1.msra.mxu0 %v4609
        %4667 = vmatprep.subr.mxu0 %v4608
        %4668 = vmatpush1.msra.mxu0 %v4607
        %4669 = vmatprep.subr.mxu0 %v4606
        %4670 = vmatpush1.msra.mxu0 %v4605
        %4671 = vmatprep.subr.mxu0 %v4604
        %4672 = vmatpush1.msra.mxu0 %v4603
        %4673 = vmatprep.subr.mxu0 0.0
        %4674 = vmatpush2.msra.mxu0 0.0
        %4675 = vmatprep.subr.mxu0 0.0
        %4676 = vmatpush2.msra.mxu0 0.0
        %4677 = vmatprep.subr.mxu0 0.0
        %4678 = vmatpush2.msra.mxu0 0.0
        %4679 = vmatprep.subr.mxu0 0.0
        %4680 = vmatpush2.msra.mxu0 0.0
        %4681 = vmatprep.subr.mxu0 0.0
        %4682 = vmatpush2.msra.mxu0 0.0
        %4683 = vmatprep.subr.mxu0 0.0
        %4684 = vmatpush2.msra.mxu0 0.0
        %4685 = vmatprep.subr.mxu0 0.0
        %4686 = vmatpush2.msra.mxu0 0.0
        %4687 = vmatprep.subr.mxu0 0.0
        %4688 = vmatpush2.msra.mxu0 0.0
        %4689 = vmatprep.subr.mxu0 0.0
        %4690 = vmatpush2.msra.mxu0 0.0
        %4691 = vmatprep.subr.mxu0 0.0
        %4692 = vmatpush2.msra.mxu0 0.0
        %4693 = vmatprep.subr.mxu0 0.0
        %4694 = vmatpush2.msra.mxu0 0.0
        %4695 = vmatprep.subr.mxu0 0.0
        %4696 = vmatpush2.msra.mxu0 0.0
        %4697 = vmatprep.subr.mxu0 0.0
        %4698 = vmatpush2.msra.mxu0 0.0
        %4699 = vmatprep.subr.mxu0 0.0
        %4700 = vmatpush2.msra.mxu0 0.0
        %4701 = vmatprep.subr.mxu0 0.0
        %4702 = vmatpush2.msra.mxu0 0.0
        %4703 = vmatprep.subr.mxu0 0.0
        %4704 = vmatpush2.msra.mxu0 0.0
        %4705 = vmatprep.mubr.f32.mxu0 0.0
        %4706 = vmatmul.mubr.f32.gmra.mxu0 %v4602
        %v4707 = vpop.f32.mrf.mxu0
        %v4708 = vadd.f32 %v4639, %v4707
        %v4709 = vpop.f32.mrf.mxu0
        %v4710 = vadd.f32 %v4639, %v4709
        %4711 = vdwg.mxu0
        %4712 = vst [vmem:[%s204] sm:$0xff] %v4708
        %4713 = vst [vmem:[%s204 + $0x8] sm:$0xff] %v4710
        %s4714 = sand.u32 %s129, 1
        %s4715 = scalar_lea.sflag [#allocation6], %s4714
        %s4716 = sand.u32 %s129, 1
        %s4717 = smul.addr %s4716, 16
        %s4718 = scalar_lea.vmem [#allocation5], %s4717
        // Predicated region
        $region76: #{tpu_custom_call.1} parent=35 // pred_check
          %p4719 = pneg %p139
        $region77: #{tpu_custom_call.1} parent=35 // pred_check_branch
          %4721 = sbr.rel (%p4719) target = $region79
        $region78: #{tpu_custom_call.1} parent=35 // pred_region
          %s4722 = smul.u32 2, %s23
          %s4724 = ssub.s32 256, 256
          %4725 = vsyncadd %s4715, %s4724
          %s4726 = smul.addr %s22, 8
          %s4727 = sadd.s32 %s4722, %s4726
          %s4728 = smul.addr %s4727, 128
          %s4729 = scalar_lea.hbm %s4, %s4728
          %s4731 = sshll.u32 %s4718, 4
          %s4732 = int_to_ptr.vmem [resolvable:$true] %s4731
          %4734 = dma.vmem_to_hbm [thread:$0]  %s4732, 256, %s4729, %s4715
        $region79: #{tpu_custom_call.1} parent=35 // pred_fallthru
          _
      $region36: #{tpu_custom_call.1} parent=5 // pred_fallthru
        _
      %p4735 = scmp.le.s32.totalorder 2, %s13
      // Predicated region
      $region80: #{tpu_custom_call.1} parent=5 // pred_check
        %p4736 = pneg %p4735
      $region81: #{tpu_custom_call.1} parent=5 // pred_check_branch
        %4738 = sbr.rel (%p4736) target = $region83
      $region82: #{tpu_custom_call.1} parent=5 // pred_region
        %s4739 = ssub.s32 %s13, 2
        // Predicated region
        $region84: #{tpu_custom_call.1} parent=82 // pred_check
          %p4740 = pneg %p145
        $region85: #{tpu_custom_call.1} parent=82 // pred_check_branch
          %4742 = sbr.rel (%p4740) target = $region87
        $region86: #{tpu_custom_call.1} parent=82 // pred_region
          %s4743 = sand.u32 %s130, 1
          %s4744 = scalar_lea.sflag [#allocation6], %s4743
          %s4745 = sand.u32 %s130, 1
          %s4746 = smul.addr %s4745, 16
          %s4747 = scalar_lea.vmem [#allocation5], %s4746
          %4748 = dma.done %s4744, 256
        $region87: #{tpu_custom_call.1} parent=82 // pred_fallthru
          _
      $region83: #{tpu_custom_call.1} parent=5 // pred_fallthru
        _
    $region6: #{tpu_custom_call.1} parent=1 // loop_footer
      %s17 = sadd.s32 1, %s13
    $region7: #{tpu_custom_call.1} parent=1 // loop_footer_branch
      %12 = sbr.rel target = $region3
    $region8: #{tpu_custom_call.1} parent=1 // loop_exit
      _
    %4749 = vsyncpa [#allocation6], 1
    %s4750 = scalar_lea.sflag [#allocation6], 1
    %4751 = vsyncpa %s4750, 1

</llo_original>
